<compile_context>
chip_gen: v5e
topology: v5e:2x2
jax: 0.10.0
libtpu: 0.0.40
codegen_flags: <defaults>
</compile_context>

<pallas_src>
import functools
import math

import jax
import jax.numpy as jnp
import numpy as np
from jax import lax
from jax.experimental import pallas as pl
from jax.experimental.pallas import tpu as pltpu

# MultiStepEIFNode defaults
THRESH, REST, TAU, DELTA_T, THETA_RH = 1.0, 0.0, 1.0, 1.0, 0.8
# mem starts at 0 -> the exp term is a compile-time constant
EIF_CONST = REST + DELTA_T * math.exp(-THETA_RH / DELTA_T)
BN_EPS = 1e-5

# Padded (lane-dense) channel dimension and packed-parameter layout.
CP = 128
OFF_W2 = 0 * CP            # (CP, CP) conv2, tap-packed rows, BN-folded
OFF_WC1 = 1 * CP           # (CP, CP) channel-attention squeeze
OFF_WC2 = 2 * CP           # (CP, CP) channel-attention excite
OFF_WSP = 3 * CP           # (8, CP)  spatial-attention k=7 taps (row 7 unused)
OFF_B = 3 * CP + 8         # (8, CP)  bias rows, see ROW_*
R_TOTAL = 3 * CP + 16      # = 400 rows (multiple of 8)
ROW_B1, ROW_B2, ROW_BSC, ROW_BC1, ROW_BC2 = 0, 1, 2, 3, 4


def _eif(v):
    """MultiStepEIFNode forward with mem initialized to zero."""
    mem = (1.0 / TAU) * (v + EIF_CONST)
    return (mem >= THRESH).astype(jnp.float32)


# ----------------------------- Pallas kernel ---------------------------------
def convsab_kernel(cin, cout, x_ref, wf_ref, p_ref, sc_ref, o_ref):
    TB, L, C = x_ref.shape            # C == CP (lane-dense padded channels)
    M = TB * L
    x = x_ref[...].reshape(M, C)      # flatten batch block: layout-trivial

    # (M, 1) per-row position inside each length-L segment. The shift-validity
    # masks are lane-invariant, so jnp.where broadcasts this thin column across
    # the 128 lanes (one narrow compare per shift, no (M, C) mask state).
    pos = lax.broadcasted_iota(jnp.int32, (M, 1), 0) % L

    def shift(v, s):                  # u[l] = v[l + s] within each L-segment, else 0
        rolled = pltpu.roll(v, shift=(-s) % M, axis=0)       # XLU sublane rotate
        valid = (pos < L - s) if s > 0 else (pos >= -s)      # (M, 1), broadcast
        return jnp.where(valid, rolled, 0.0)

    def lane_pack3(v, step):
        # Pack the 3 conv taps into ONE 128-wide K block: lanes [0:step)=v[l-1],
        # [step:2step)=v[l], [2step:3step)=v[l+1]. Lane rolls run on the XLU and
        # the padded lanes are already zero, so plain adds compose the groups.
        return (shift(v, -1)
                + pltpu.roll(v, shift=step, axis=1)
                + pltpu.roll(shift(v, 1), shift=2 * step, axis=1))

    def dotf(a, b):
        return jnp.dot(a, b, preferred_element_type=jnp.float32)

    def brow(row):
        return p_ref[OFF_B + row:OFF_B + row + 1, :]          # (1, C)

    # ---- conv1 + bn1 (K tap-packed) fused with the 1x1 shortcut + BN in one
    #      (M, C) @ (C, 2C) matmul: cols [0:C) conv1 pre-act, cols [C:2C) res.
    x_pk = lane_pack3(x, cin)
    y = dotf(x_pk, wf_ref[...])                                # (M, 2C)
    res = y[:, C:] + brow(ROW_BSC)
    s1 = _eif(y[:, :C] + brow(ROW_B1))

    # ---- conv2 (k=3, pad=1) + bn2 + EIF: tap-packed 128-wide K matmul ----
    s1_pk = lane_pack3(s1, cout)
    s2 = _eif(dotf(s1_pk, p_ref[OFF_W2:OFF_W2 + C, :]) + brow(ROW_B2))

    # ---- channel attention: avgpool(L) -> 1x1 -> relu -> 1x1 -> sigmoid ----
    s2_3d = s2.reshape(TB, L, C)
    pooled = jnp.mean(s2_3d, axis=1)                           # (TB, C)
    hid = jnp.maximum(
        dotf(pooled, p_ref[OFF_WC1:OFF_WC1 + C, :]) + brow(ROW_BC1), 0.0)
    ca = jax.nn.sigmoid(
        dotf(hid, p_ref[OFF_WC2:OFF_WC2 + C, :]) + brow(ROW_BC2))   # (TB, C)
    out_ca = (s2_3d * ca[:, None, :]).reshape(M, C)

    # ---- spatial attention: conv1d(C -> 1, k=7, pad=3) -> sigmoid ----
    # Weighted-tap accumulation (rolls on the XLU, thin broadcast masks), ONE
    # cross-lane reduction at the end (XLU, which is otherwise idle here).
    wsp = p_ref[OFF_WSP:OFF_WSP + 7, :]                        # (7, C)
    sp_acc = s2 * wsp[3:4, :]
    for dk in (0, 1, 2, 4, 5, 6):
        sp_acc = sp_acc + shift(s2, dk - 3) * wsp[dk:dk + 1, :]
    sp = jnp.sum(sp_acc, axis=1, keepdims=True) + sc_ref[0]    # (M, 1)
    sa = jax.nn.sigmoid(sp)

    # ---- gated combination + residual ----
    out_att = sc_ref[1] * out_ca + sc_ref[2] * (s2 * sa)
    o_ref[...] = (out_att + res).reshape(TB, L, C).astype(o_ref.dtype)


# ----------------------- weight folding / packing ----------------------------
def _fold_bn(w, b, stats):
    """Fold inference-mode BN into a Conv1d weight (O, I, K) -> (K, I, O)."""
    gamma, beta, mean, var = stats
    scale = gamma / jnp.sqrt(var + BN_EPS)
    wk = jnp.transpose(w, (2, 1, 0)) * scale[None, None, :]   # (K, I, O)
    bk = b * scale + (beta - mean * scale)                    # (O,)
    return wk, bk


def _pad2(w):  # pad a (I, O) matrix to (CP, CP) with zeros
    return jnp.pad(w, ((0, CP - w.shape[0]), (0, CP - w.shape[1])))


def _pack_params(p):
    """Fold BN, tap-pack, pad channel dims to CP; return (wfused, packed_rest)."""
    cout, cin = p['w1'].shape[0], p['w1'].shape[1]
    w1k, b1 = _fold_bn(p['w1'], p['b1'], p['bn1'])        # (3, cin,  cout)
    w2k, b2 = _fold_bn(p['w2'], p['b2'], p['bn2'])        # (3, cout, cout)
    wsck, bsc = _fold_bn(p['wsc'], p['bsc'], p['bnsc'])   # (1, cin,  cout)

    # conv1: taps packed into rows [k*cin:(k+1)*cin) of a single (CP, CP) block.
    w1p = jnp.zeros((CP, CP), jnp.float32)
    for k in range(3):
        w1p = w1p.at[k * cin:(k + 1) * cin, :cout].set(w1k[k])
    # shortcut rides the middle-tap lane group (the un-shifted x[l] channels).
    wscp = jnp.zeros((CP, CP), jnp.float32)
    wscp = wscp.at[cin:2 * cin, :cout].set(wsck[0])
    wfused = jnp.concatenate([w1p, wscp], axis=1)         # (CP, 2*CP)

    # conv2: taps packed into rows [k*cout:(k+1)*cout).
    w2p = jnp.zeros((CP, CP), jnp.float32)
    for k in range(3):
        w2p = w2p.at[k * cout:(k + 1) * cout, :cout].set(w2k[k])

    wc1_p = _pad2(jnp.transpose(p['wc1'][:, :, 0]))                      # (CP, CP)
    wc2_p = _pad2(jnp.transpose(p['wc2'][:, :, 0]))                      # (CP, CP)
    wsp_p = jnp.zeros((8, CP), jnp.float32).at[:7, :cout].set(
        jnp.transpose(p['wsp'][0]))                                      # (8, CP)

    def padb(b):
        return jnp.pad(b, (0, CP - b.shape[0]))

    bias_blk = jnp.stack(
        [padb(b1), padb(b2), padb(bsc), padb(p['bc1']), padb(p['bc2'])]
        + [jnp.zeros((CP,), jnp.float32)] * 3, axis=0)                   # (8, CP)

    packed = jnp.concatenate([w2p, wc1_p, wc2_p, wsp_p, bias_blk], axis=0)
    assert packed.shape == (R_TOTAL, CP)
    return wfused, packed


def _choose_block_batch(n, l):
    # Target M = TB*L ~ 256 rows/step (feeds the 256-row MXU on v6e/v7x and
    # amortizes the ~0.35us/step overhead) while keeping >= 2 grid steps when
    # the batch allows so v7x's two TensorCores both get work.
    tb = max(1, min(n, max(1, 256 // max(l, 1))))
    while tb > 1 and -(-n // tb) < 2:
        tb //= 2
    return tb


# ------------------------------- wrapper --------------------------------------
def convsab_forward(x_ncl, params, gates, *, block_batch=None):
    """x_ncl: (N, C_in, L) float32, PyTorch NCL layout. Returns (N, C_out, L)."""
    N, Cin, L = x_ncl.shape
    Cout = params['w1'].shape[0]
    assert 3 * Cin <= CP and 3 * Cout <= CP, "tap packing needs 3*C <= 128"

    wfused, packed = _pack_params(params)
    scalars = jnp.concatenate([
        jnp.asarray(params['bsp'], jnp.float32).reshape(-1)[:1],   # spatial bias
        jnp.asarray(gates, jnp.float32).reshape(-1),               # channel/spatial gate
    ])                                                             # (3,) -> SMEM

    TB = _choose_block_batch(N, L) if block_batch is None else max(1, min(block_batch, N))
    NP = ((N + TB - 1) // TB) * TB

    x_nlc = jnp.transpose(x_ncl, (0, 2, 1))                        # (N, L, Cin)
    x_p = jnp.pad(x_nlc, ((0, NP - N), (0, 0), (0, CP - Cin)))     # (NP, L, CP)

    kern = functools.partial(convsab_kernel, Cin, Cout)
    out_nlc = pl.pallas_call(
        kern,
        out_shape=jax.ShapeDtypeStruct((NP, L, CP), jnp.float32),
        grid_spec=pltpu.PrefetchScalarGridSpec(
            num_scalar_prefetch=0,
            grid=(NP // TB,),
            in_specs=[
                pl.BlockSpec((TB, L, CP), lambda n: (n, 0, 0)),          # activations
                pl.BlockSpec((CP, 2 * CP), lambda n: (0, 0)),            # conv1|shortcut
                pl.BlockSpec((R_TOTAL, CP), lambda n: (0, 0)),           # other weights
                pl.BlockSpec(memory_space=pltpu.MemorySpace.SMEM),       # scalars
            ],
            out_specs=pl.BlockSpec((TB, L, CP), lambda n: (n, 0, 0)),
        ),
        compiler_params=pltpu.CompilerParams(
            dimension_semantics=("parallel",)),
    )(x_p, wfused, packed, scalars)

    return jnp.transpose(out_nlc[:N, :, :Cout], (0, 2, 1))


# ---------------- pure-JAX reference (PyTorch semantics, NCL layout) ----------
def ref_forward(x, p, gates):
    def conv1d(xx, w, b, pad):
        y = lax.conv_general_dilated(xx, w, (1,), [(pad, pad)],
                                     dimension_numbers=('NCH', 'OIH', 'NCH'))
        return y + b[None, :, None]

    def bn(y, stats):
        gamma, beta, mean, var = stats
        scale = gamma / jnp.sqrt(var + BN_EPS)
        return y * scale[None, :, None] + (beta - mean * scale)[None, :, None]

    def eif(v):
        return ((1.0 / TAU) * (v + EIF_CONST) >= THRESH).astype(jnp.float32)

    cg, sg = gates
    res = bn(conv1d(x, p['wsc'], p['bsc'], 0), p['bnsc'])
    s1 = eif(bn(conv1d(x, p['w1'], p['b1'], 1), p['bn1']))
    s2 = eif(bn(conv1d(s1, p['w2'], p['b2'], 1), p['bn2']))
    pooled = jnp.mean(s2, axis=2, keepdims=True)
    hid = jax.nn.relu(conv1d(pooled, p['wc1'], p['bc1'], 0))
    ca = jax.nn.sigmoid(conv1d(hid, p['wc2'], p['bc2'], 0))
    sa = jax.nn.sigmoid(conv1d(s2, p['wsp'], p['bsp'], 3))
    out_att = cg * (s2 * ca) + sg * (s2 * sa)
    return out_att + res


if __name__ == "__main__":
    N, Cin, Cout, L, red = 16, 4, 32, 16, 16
    Cmid = Cout // red
    key = jax.random.PRNGKey(0)
    ks = jax.random.split(key, 8)

    def kaiming(k, shape):  # Conv1d weight (O, I, K), fan_out = O * K
        fan_out = shape[0] * shape[2]
        return jax.random.normal(k, shape, jnp.float32) * math.sqrt(2.0 / fan_out)

    p = dict(
        w1=kaiming(ks[0], (Cout, Cin, 3)), b1=jnp.zeros((Cout,), jnp.float32),
        w2=kaiming(ks[1], (Cout, Cout, 3)), b2=jnp.zeros((Cout,), jnp.float32),
        wsc=kaiming(ks[2], (Cout, Cin, 1)), bsc=jnp.zeros((Cout,), jnp.float32),
        wc1=kaiming(ks[3], (Cmid, Cout, 1)), bc1=jnp.zeros((Cmid,), jnp.float32),
        wc2=kaiming(ks[4], (Cout, Cmid, 1)), bc2=jnp.zeros((Cout,), jnp.float32),
        wsp=kaiming(ks[5], (1, Cout, 7)), bsp=jnp.zeros((1,), jnp.float32),
    )
    bn_init = lambda c: (jnp.ones((c,), jnp.float32), jnp.zeros((c,), jnp.float32),
                         jnp.zeros((c,), jnp.float32), jnp.ones((c,), jnp.float32))
    p['bn1'], p['bn2'], p['bnsc'] = bn_init(Cout), bn_init(Cout), bn_init(Cout)

    # The module zero-initializes both gate parameters (which would null the
    # attention branch); use deterministic nonzero values so both paths run.
    gates = (0.7, 0.3)

    x = jax.random.normal(ks[6], (N, Cin, L), jnp.float32)

    out = convsab_forward(x, p, gates)   # auto TB=8 -> grid=2 steps of M=128
    jax.block_until_ready(out)

    ref = ref_forward(x, p, gates)
    assert out.shape == ref.shape == (N, Cout, L)
    np.testing.assert_allclose(np.asarray(out), np.asarray(ref), atol=1e-4, rtol=1e-4)
    print("KERNEL_OK")
</pallas_src>

<mosaic_0001>
module attributes {stable_mosaic.version = 11 : i64} {
  func.func @convsab_kernel(%arg0: i32, %arg1: memref<8x16x128xf32, #tpu.memory_space<vmem>>, %arg2: memref<128x256xf32, #tpu.memory_space<vmem>>, %arg3: memref<400x128xf32, #tpu.memory_space<vmem>>, %arg4: memref<3xf32, #tpu.memory_space<smem>>, %arg5: memref<8x16x128xf32, #tpu.memory_space<vmem>>) attributes {dimension_semantics = [#tpu.dimension_semantics<parallel>], iteration_bounds = array<i64: 2>, scalar_prefetch = 0 : i64, scratch_operands = 0 : i64, tpu.core_type = #tpu.core_type<tc>, window_params = [{transform_indices = @transform_0, window_bounds = array<i64: 8, 16, 128>}, {pipeline_mode = #tpu.pipeline_mode<synchronous>, transform_indices = @transform_1, window_bounds = array<i64: 128, 256>}, {pipeline_mode = #tpu.pipeline_mode<synchronous>, transform_indices = @transform_2, window_bounds = array<i64: 400, 128>}, {transform_indices = @transform_3, window_bounds = array<i64: 3>}, {transform_indices = @transform_4, window_bounds = array<i64: 8, 16, 128>}]} {
    %c0 = arith.constant 0 : index
    %c0_0 = arith.constant 0 : index
    %c0_1 = arith.constant 0 : index
    %0 = vector.load %arg1[%c0, %c0_0, %c0_1] : memref<8x16x128xf32, #tpu.memory_space<vmem>>, vector<8x16x128xf32>
    %1 = vector.shape_cast %0 : vector<8x16x128xf32> to vector<128x128xf32>
    %2 = tpu.iota {dimensions = array<i32: 0>} : vector<128x1xi32>
    %c16_i32 = arith.constant 16 : i32
    %c0_i32 = arith.constant 0 : i32
    %3 = arith.cmpi eq, %c16_i32, %c0_i32 : i32
    %c1_i32 = arith.constant 1 : i32
    %4 = arith.select %3, %c1_i32, %c16_i32 : i32
    %5 = vector.broadcast %4 : i32 to vector<128x1xi32>
    %6 = arith.remsi %2, %5 : vector<128x1xi32>
    %c0_i32_2 = arith.constant 0 : i32
    %7 = vector.broadcast %c0_i32_2 : i32 to vector<128x1xi32>
    %8 = arith.cmpi ne, %6, %7 : vector<128x1xi32>
    %c0_i32_3 = arith.constant 0 : i32
    %9 = vector.broadcast %c0_i32_3 : i32 to vector<128x1xi32>
    %10 = arith.cmpi slt, %6, %9 : vector<128x1xi32>
    %c0_i32_4 = arith.constant 0 : i32
    %11 = arith.cmpi slt, %4, %c0_i32_4 : i32
    %12 = vector.broadcast %11 : i1 to vector<128x1xi1>
    %13 = vector.broadcast %12 : vector<128x1xi1> to vector<128x1xi1>
    %14 = arith.xori %10, %13 : vector<128x1xi1>
    %15 = arith.andi %14, %8 : vector<128x1xi1>
    %16 = vector.broadcast %4 : i32 to vector<128x1xi32>
    %17 = arith.addi %6, %16 : vector<128x1xi32>
    %18 = arith.select %15, %17, %6 : vector<128x1xi1>, vector<128x1xi32>
    %c1_i32_5 = arith.constant 1 : i32
    %19 = tpu.dynamic_rotate %1 by %c1_i32_5 dim 0 : vector<128x128xf32>, i32 -> vector<128x128xf32>
    %c1_i32_6 = arith.constant 1 : i32
    %20 = vector.broadcast %c1_i32_6 : i32 to vector<128x1xi32>
    %21 = arith.cmpi sge, %18, %20 : vector<128x1xi32>
    %cst = arith.constant 0.000000e+00 : f32
    %22 = vector.shape_cast %21 : vector<128x1xi1> to vector<128x1xi1>
    %23 = vector.broadcast %22 : vector<128x1xi1> to vector<128x128xi1>
    %24 = vector.broadcast %cst : f32 to vector<128x128xf32>
    %25 = arith.select %23, %19, %24 : vector<128x128xi1>, vector<128x128xf32>
    %c4_i32 = arith.constant 4 : i32
    %26 = tpu.dynamic_rotate %1 by %c4_i32 dim 1 : vector<128x128xf32>, i32 -> vector<128x128xf32>
    %27 = arith.addf %25, %26 : vector<128x128xf32>
    %c127_i32 = arith.constant 127 : i32
    %28 = tpu.dynamic_rotate %1 by %c127_i32 dim 0 : vector<128x128xf32>, i32 -> vector<128x128xf32>
    %c15_i32 = arith.constant 15 : i32
    %29 = vector.broadcast %c15_i32 : i32 to vector<128x1xi32>
    %30 = arith.cmpi slt, %18, %29 : vector<128x1xi32>
    %cst_7 = arith.constant 0.000000e+00 : f32
    %31 = vector.shape_cast %30 : vector<128x1xi1> to vector<128x1xi1>
    %32 = vector.broadcast %31 : vector<128x1xi1> to vector<128x128xi1>
    %33 = vector.broadcast %cst_7 : f32 to vector<128x128xf32>
    %34 = arith.select %32, %28, %33 : vector<128x128xi1>, vector<128x128xf32>
    %c8_i32 = arith.constant 8 : i32
    %35 = tpu.dynamic_rotate %34 by %c8_i32 dim 1 : vector<128x128xf32>, i32 -> vector<128x128xf32>
    %36 = arith.addf %27, %35 : vector<128x128xf32>
    %c0_8 = arith.constant 0 : index
    %c0_9 = arith.constant 0 : index
    %37 = vector.load %arg2[%c0_8, %c0_9] : memref<128x256xf32, #tpu.memory_space<vmem>>, vector<128x256xf32>
    %cst_10 = arith.constant dense<0.000000e+00> : vector<128x256xf32>
    %38 = tpu.matmul %36, %37, %cst_10 {dimension_numbers = #tpu.dot_dimension_numbers<[1], [0], [0], [1], [0, 0, 1, 1], [], []>} : vector<128x128xf32>, vector<128x256xf32>, vector<128x256xf32> -> vector<128x256xf32>
    %39 = vector.extract_strided_slice %38 {offsets = [0, 128], sizes = [128, 128], strides = [1, 1]} : vector<128x256xf32> to vector<128x128xf32>
    %c394 = arith.constant 394 : index
    %c0_11 = arith.constant 0 : index
    %40 = vector.load %arg3[%c394, %c0_11] : memref<400x128xf32, #tpu.memory_space<vmem>>, vector<1x128xf32>
    %41 = vector.broadcast %40 : vector<1x128xf32> to vector<128x128xf32>
    %42 = arith.addf %39, %41 : vector<128x128xf32>
    %43 = vector.extract_strided_slice %38 {offsets = [0, 0], sizes = [128, 128], strides = [1, 1]} : vector<128x256xf32> to vector<128x128xf32>
    %c392 = arith.constant 392 : index
    %c0_12 = arith.constant 0 : index
    %44 = vector.load %arg3[%c392, %c0_12] : memref<400x128xf32, #tpu.memory_space<vmem>>, vector<1x128xf32>
    %45 = vector.broadcast %44 : vector<1x128xf32> to vector<128x128xf32>
    %46 = arith.addf %43, %45 : vector<128x128xf32>
    %cst_13 = arith.constant 0.449328959 : f32
    %47 = vector.broadcast %cst_13 : f32 to vector<128x128xf32>
    %48 = arith.addf %46, %47 : vector<128x128xf32>
    %cst_14 = arith.constant 1.000000e+00 : f32
    %49 = vector.broadcast %cst_14 : f32 to vector<128x128xf32>
    %50 = arith.mulf %49, %48 : vector<128x128xf32>
    %cst_15 = arith.constant 1.000000e+00 : f32
    %51 = vector.broadcast %cst_15 : f32 to vector<128x128xf32>
    %52 = arith.cmpf oge, %50, %51 : vector<128x128xf32>
    %53 = arith.extui %52 : vector<128x128xi1> to vector<128x128xi32>
    %54 = arith.sitofp %53 : vector<128x128xi32> to vector<128x128xf32>
    %c1_i32_16 = arith.constant 1 : i32
    %55 = tpu.dynamic_rotate %54 by %c1_i32_16 dim 0 : vector<128x128xf32>, i32 -> vector<128x128xf32>
    %c1_i32_17 = arith.constant 1 : i32
    %56 = vector.broadcast %c1_i32_17 : i32 to vector<128x1xi32>
    %57 = arith.cmpi sge, %18, %56 : vector<128x1xi32>
    %cst_18 = arith.constant 0.000000e+00 : f32
    %58 = vector.shape_cast %57 : vector<128x1xi1> to vector<128x1xi1>
    %59 = vector.broadcast %58 : vector<128x1xi1> to vector<128x128xi1>
    %60 = vector.broadcast %cst_18 : f32 to vector<128x128xf32>
    %61 = arith.select %59, %55, %60 : vector<128x128xi1>, vector<128x128xf32>
    %c32_i32 = arith.constant 32 : i32
    %62 = tpu.dynamic_rotate %54 by %c32_i32 dim 1 : vector<128x128xf32>, i32 -> vector<128x128xf32>
    %63 = arith.addf %61, %62 : vector<128x128xf32>
    %c127_i32_19 = arith.constant 127 : i32
    %64 = tpu.dynamic_rotate %54 by %c127_i32_19 dim 0 : vector<128x128xf32>, i32 -> vector<128x128xf32>
    %c15_i32_20 = arith.constant 15 : i32
    %65 = vector.broadcast %c15_i32_20 : i32 to vector<128x1xi32>
    %66 = arith.cmpi slt, %18, %65 : vector<128x1xi32>
    %cst_21 = arith.constant 0.000000e+00 : f32
    %67 = vector.shape_cast %66 : vector<128x1xi1> to vector<128x1xi1>
    %68 = vector.broadcast %67 : vector<128x1xi1> to vector<128x128xi1>
    %69 = vector.broadcast %cst_21 : f32 to vector<128x128xf32>
    %70 = arith.select %68, %64, %69 : vector<128x128xi1>, vector<128x128xf32>
    %c64_i32 = arith.constant 64 : i32
    %71 = tpu.dynamic_rotate %70 by %c64_i32 dim 1 : vector<128x128xf32>, i32 -> vector<128x128xf32>
    %72 = arith.addf %63, %71 : vector<128x128xf32>
    %c0_22 = arith.constant 0 : index
    %c0_23 = arith.constant 0 : index
    %73 = vector.load %arg3[%c0_22, %c0_23] : memref<400x128xf32, #tpu.memory_space<vmem>>, vector<128x128xf32>
    %cst_24 = arith.constant dense<0.000000e+00> : vector<128x128xf32>
    %74 = tpu.matmul %72, %73, %cst_24 {dimension_numbers = #tpu.dot_dimension_numbers<[1], [0], [0], [1], [0, 0, 1, 1], [], []>} : vector<128x128xf32>, vector<128x128xf32>, vector<128x128xf32> -> vector<128x128xf32>
    %c393 = arith.constant 393 : index
    %c0_25 = arith.constant 0 : index
    %75 = vector.load %arg3[%c393, %c0_25] : memref<400x128xf32, #tpu.memory_space<vmem>>, vector<1x128xf32>
    %76 = vector.broadcast %75 : vector<1x128xf32> to vector<128x128xf32>
    %77 = arith.addf %74, %76 : vector<128x128xf32>
    %cst_26 = arith.constant 0.449328959 : f32
    %78 = vector.broadcast %cst_26 : f32 to vector<128x128xf32>
    %79 = arith.addf %77, %78 : vector<128x128xf32>
    %cst_27 = arith.constant 1.000000e+00 : f32
    %80 = vector.broadcast %cst_27 : f32 to vector<128x128xf32>
    %81 = arith.mulf %80, %79 : vector<128x128xf32>
    %cst_28 = arith.constant 1.000000e+00 : f32
    %82 = vector.broadcast %cst_28 : f32 to vector<128x128xf32>
    %83 = arith.cmpf oge, %81, %82 : vector<128x128xf32>
    %84 = arith.extui %83 : vector<128x128xi1> to vector<128x128xi32>
    %85 = arith.sitofp %84 : vector<128x128xi32> to vector<128x128xf32>
    %86 = vector.shape_cast %85 : vector<128x128xf32> to vector<8x16x128xf32>
    %cst_29 = arith.constant dense<0.000000e+00> : vector<8x128xf32>
    %87 = vector.multi_reduction <add>, %86, %cst_29 [1] : vector<8x16x128xf32> to vector<8x128xf32>
    %cst_30 = arith.constant 1.600000e+01 : f32
    %88 = vector.broadcast %cst_30 : f32 to vector<8x128xf32>
    %89 = arith.divf %87, %88 : vector<8x128xf32>
    %c128 = arith.constant 128 : index
    %c0_31 = arith.constant 0 : index
    %90 = vector.load %arg3[%c128, %c0_31] : memref<400x128xf32, #tpu.memory_space<vmem>>, vector<128x128xf32>
    %cst_32 = arith.constant dense<0.000000e+00> : vector<8x128xf32>
    %91 = tpu.matmul %89, %90, %cst_32 {dimension_numbers = #tpu.dot_dimension_numbers<[1], [0], [0], [1], [0, 0, 1, 1], [], []>} : vector<8x128xf32>, vector<128x128xf32>, vector<8x128xf32> -> vector<8x128xf32>
    %c395 = arith.constant 395 : index
    %c0_33 = arith.constant 0 : index
    %92 = vector.load %arg3[%c395, %c0_33] : memref<400x128xf32, #tpu.memory_space<vmem>>, vector<1x128xf32>
    %93 = vector.broadcast %92 : vector<1x128xf32> to vector<8x128xf32>
    %94 = arith.addf %91, %93 : vector<8x128xf32>
    %cst_34 = arith.constant 0.000000e+00 : f32
    %95 = vector.broadcast %cst_34 : f32 to vector<8x128xf32>
    %96 = arith.maximumf %94, %95 : vector<8x128xf32>
    %c256 = arith.constant 256 : index
    %c0_35 = arith.constant 0 : index
    %97 = vector.load %arg3[%c256, %c0_35] : memref<400x128xf32, #tpu.memory_space<vmem>>, vector<128x128xf32>
    %cst_36 = arith.constant dense<0.000000e+00> : vector<8x128xf32>
    %98 = tpu.matmul %96, %97, %cst_36 {dimension_numbers = #tpu.dot_dimension_numbers<[1], [0], [0], [1], [0, 0, 1, 1], [], []>} : vector<8x128xf32>, vector<128x128xf32>, vector<8x128xf32> -> vector<8x128xf32>
    %c396 = arith.constant 396 : index
    %c0_37 = arith.constant 0 : index
    %99 = vector.load %arg3[%c396, %c0_37] : memref<400x128xf32, #tpu.memory_space<vmem>>, vector<1x128xf32>
    %100 = vector.broadcast %99 : vector<1x128xf32> to vector<8x128xf32>
    %101 = arith.addf %98, %100 : vector<8x128xf32>
    %102 = arith.negf %101 : vector<8x128xf32>
    %103 = math.exp %102 : vector<8x128xf32>
    %cst_38 = arith.constant 1.000000e+00 : f32
    %104 = vector.broadcast %cst_38 : f32 to vector<8x128xf32>
    %105 = arith.addf %104, %103 : vector<8x128xf32>
    %106 = arith.divf %104, %105 : vector<8x128xf32>
    %107 = vector.shape_cast %106 : vector<8x128xf32> to vector<8x1x128xf32>
    %108 = vector.broadcast %107 : vector<8x1x128xf32> to vector<8x16x128xf32>
    %109 = arith.mulf %86, %108 : vector<8x16x128xf32>
    %110 = vector.shape_cast %109 : vector<8x16x128xf32> to vector<128x128xf32>
    %c384 = arith.constant 384 : index
    %c0_39 = arith.constant 0 : index
    %111 = vector.load %arg3[%c384, %c0_39] : memref<400x128xf32, #tpu.memory_space<vmem>>, vector<7x128xf32>
    %112 = vector.extract_strided_slice %111 {offsets = [3, 0], sizes = [1, 128], strides = [1, 1]} : vector<7x128xf32> to vector<1x128xf32>
    %113 = vector.broadcast %112 : vector<1x128xf32> to vector<128x128xf32>
    %114 = arith.mulf %85, %113 : vector<128x128xf32>
    %c3_i32 = arith.constant 3 : i32
    %115 = tpu.dynamic_rotate %85 by %c3_i32 dim 0 : vector<128x128xf32>, i32 -> vector<128x128xf32>
    %c3_i32_40 = arith.constant 3 : i32
    %116 = vector.broadcast %c3_i32_40 : i32 to vector<128x1xi32>
    %117 = arith.cmpi sge, %18, %116 : vector<128x1xi32>
    %cst_41 = arith.constant 0.000000e+00 : f32
    %118 = vector.shape_cast %117 : vector<128x1xi1> to vector<128x1xi1>
    %119 = vector.broadcast %118 : vector<128x1xi1> to vector<128x128xi1>
    %120 = vector.broadcast %cst_41 : f32 to vector<128x128xf32>
    %121 = arith.select %119, %115, %120 : vector<128x128xi1>, vector<128x128xf32>
    %122 = vector.extract_strided_slice %111 {offsets = [0, 0], sizes = [1, 128], strides = [1, 1]} : vector<7x128xf32> to vector<1x128xf32>
    %123 = vector.broadcast %122 : vector<1x128xf32> to vector<128x128xf32>
    %124 = arith.mulf %121, %123 : vector<128x128xf32>
    %125 = arith.addf %114, %124 : vector<128x128xf32>
    %c2_i32 = arith.constant 2 : i32
    %126 = tpu.dynamic_rotate %85 by %c2_i32 dim 0 : vector<128x128xf32>, i32 -> vector<128x128xf32>
    %c2_i32_42 = arith.constant 2 : i32
    %127 = vector.broadcast %c2_i32_42 : i32 to vector<128x1xi32>
    %128 = arith.cmpi sge, %18, %127 : vector<128x1xi32>
    %cst_43 = arith.constant 0.000000e+00 : f32
    %129 = vector.shape_cast %128 : vector<128x1xi1> to vector<128x1xi1>
    %130 = vector.broadcast %129 : vector<128x1xi1> to vector<128x128xi1>
    %131 = vector.broadcast %cst_43 : f32 to vector<128x128xf32>
    %132 = arith.select %130, %126, %131 : vector<128x128xi1>, vector<128x128xf32>
    %133 = vector.extract_strided_slice %111 {offsets = [1, 0], sizes = [1, 128], strides = [1, 1]} : vector<7x128xf32> to vector<1x128xf32>
    %134 = vector.broadcast %133 : vector<1x128xf32> to vector<128x128xf32>
    %135 = arith.mulf %132, %134 : vector<128x128xf32>
    %136 = arith.addf %125, %135 : vector<128x128xf32>
    %c1_i32_44 = arith.constant 1 : i32
    %137 = tpu.dynamic_rotate %85 by %c1_i32_44 dim 0 : vector<128x128xf32>, i32 -> vector<128x128xf32>
    %c1_i32_45 = arith.constant 1 : i32
    %138 = vector.broadcast %c1_i32_45 : i32 to vector<128x1xi32>
    %139 = arith.cmpi sge, %18, %138 : vector<128x1xi32>
    %cst_46 = arith.constant 0.000000e+00 : f32
    %140 = vector.shape_cast %139 : vector<128x1xi1> to vector<128x1xi1>
    %141 = vector.broadcast %140 : vector<128x1xi1> to vector<128x128xi1>
    %142 = vector.broadcast %cst_46 : f32 to vector<128x128xf32>
    %143 = arith.select %141, %137, %142 : vector<128x128xi1>, vector<128x128xf32>
    %144 = vector.extract_strided_slice %111 {offsets = [2, 0], sizes = [1, 128], strides = [1, 1]} : vector<7x128xf32> to vector<1x128xf32>
    %145 = vector.broadcast %144 : vector<1x128xf32> to vector<128x128xf32>
    %146 = arith.mulf %143, %145 : vector<128x128xf32>
    %147 = arith.addf %136, %146 : vector<128x128xf32>
    %c127_i32_47 = arith.constant 127 : i32
    %148 = tpu.dynamic_rotate %85 by %c127_i32_47 dim 0 : vector<128x128xf32>, i32 -> vector<128x128xf32>
    %c15_i32_48 = arith.constant 15 : i32
    %149 = vector.broadcast %c15_i32_48 : i32 to vector<128x1xi32>
    %150 = arith.cmpi slt, %18, %149 : vector<128x1xi32>
    %cst_49 = arith.constant 0.000000e+00 : f32
    %151 = vector.shape_cast %150 : vector<128x1xi1> to vector<128x1xi1>
    %152 = vector.broadcast %151 : vector<128x1xi1> to vector<128x128xi1>
    %153 = vector.broadcast %cst_49 : f32 to vector<128x128xf32>
    %154 = arith.select %152, %148, %153 : vector<128x128xi1>, vector<128x128xf32>
    %155 = vector.extract_strided_slice %111 {offsets = [4, 0], sizes = [1, 128], strides = [1, 1]} : vector<7x128xf32> to vector<1x128xf32>
    %156 = vector.broadcast %155 : vector<1x128xf32> to vector<128x128xf32>
    %157 = arith.mulf %154, %156 : vector<128x128xf32>
    %158 = arith.addf %147, %157 : vector<128x128xf32>
    %c126_i32 = arith.constant 126 : i32
    %159 = tpu.dynamic_rotate %85 by %c126_i32 dim 0 : vector<128x128xf32>, i32 -> vector<128x128xf32>
    %c14_i32 = arith.constant 14 : i32
    %160 = vector.broadcast %c14_i32 : i32 to vector<128x1xi32>
    %161 = arith.cmpi slt, %18, %160 : vector<128x1xi32>
    %cst_50 = arith.constant 0.000000e+00 : f32
    %162 = vector.shape_cast %161 : vector<128x1xi1> to vector<128x1xi1>
    %163 = vector.broadcast %162 : vector<128x1xi1> to vector<128x128xi1>
    %164 = vector.broadcast %cst_50 : f32 to vector<128x128xf32>
    %165 = arith.select %163, %159, %164 : vector<128x128xi1>, vector<128x128xf32>
    %166 = vector.extract_strided_slice %111 {offsets = [5, 0], sizes = [1, 128], strides = [1, 1]} : vector<7x128xf32> to vector<1x128xf32>
    %167 = vector.broadcast %166 : vector<1x128xf32> to vector<128x128xf32>
    %168 = arith.mulf %165, %167 : vector<128x128xf32>
    %169 = arith.addf %158, %168 : vector<128x128xf32>
    %c125_i32 = arith.constant 125 : i32
    %170 = tpu.dynamic_rotate %85 by %c125_i32 dim 0 : vector<128x128xf32>, i32 -> vector<128x128xf32>
    %c13_i32 = arith.constant 13 : i32
    %171 = vector.broadcast %c13_i32 : i32 to vector<128x1xi32>
    %172 = arith.cmpi slt, %18, %171 : vector<128x1xi32>
    %cst_51 = arith.constant 0.000000e+00 : f32
    %173 = vector.shape_cast %172 : vector<128x1xi1> to vector<128x1xi1>
    %174 = vector.broadcast %173 : vector<128x1xi1> to vector<128x128xi1>
    %175 = vector.broadcast %cst_51 : f32 to vector<128x128xf32>
    %176 = arith.select %174, %170, %175 : vector<128x128xi1>, vector<128x128xf32>
    %177 = vector.extract_strided_slice %111 {offsets = [6, 0], sizes = [1, 128], strides = [1, 1]} : vector<7x128xf32> to vector<1x128xf32>
    %178 = vector.broadcast %177 : vector<1x128xf32> to vector<128x128xf32>
    %179 = arith.mulf %176, %178 : vector<128x128xf32>
    %180 = arith.addf %169, %179 : vector<128x128xf32>
    %cst_52 = arith.constant dense<0.000000e+00> : vector<128xf32>
    %181 = vector.multi_reduction <add>, %180, %cst_52 [1] : vector<128x128xf32> to vector<128xf32>
    %182 = vector.shape_cast %181 : vector<128xf32> to vector<128x1xf32>
    %c0_53 = arith.constant 0 : index
    %183 = memref.load %arg4[%c0_53] : memref<3xf32, #tpu.memory_space<smem>>
    %184 = vector.broadcast %183 : f32 to vector<128x1xf32>
    %185 = arith.addf %182, %184 : vector<128x1xf32>
    %186 = arith.negf %185 : vector<128x1xf32>
    %187 = math.exp %186 : vector<128x1xf32>
    %cst_54 = arith.constant 1.000000e+00 : f32
    %188 = vector.broadcast %cst_54 : f32 to vector<128x1xf32>
    %189 = arith.addf %188, %187 : vector<128x1xf32>
    %190 = arith.divf %188, %189 : vector<128x1xf32>
    %c1 = arith.constant 1 : index
    %191 = memref.load %arg4[%c1] : memref<3xf32, #tpu.memory_space<smem>>
    %192 = vector.broadcast %191 : f32 to vector<128x128xf32>
    %193 = arith.mulf %192, %110 : vector<128x128xf32>
    %c2 = arith.constant 2 : index
    %194 = memref.load %arg4[%c2] : memref<3xf32, #tpu.memory_space<smem>>
    %195 = vector.broadcast %190 : vector<128x1xf32> to vector<128x128xf32>
    %196 = arith.mulf %85, %195 : vector<128x128xf32>
    %197 = vector.broadcast %194 : f32 to vector<128x128xf32>
    %198 = arith.mulf %197, %196 : vector<128x128xf32>
    %199 = arith.addf %193, %198 : vector<128x128xf32>
    %200 = arith.addf %199, %42 : vector<128x128xf32>
    %201 = vector.shape_cast %200 : vector<128x128xf32> to vector<8x16x128xf32>
    %c0_55 = arith.constant 0 : index
    %c0_56 = arith.constant 0 : index
    %c0_57 = arith.constant 0 : index
    %202 = vector.load %arg5[%c0_55, %c0_56, %c0_57] : memref<8x16x128xf32, #tpu.memory_space<vmem>>, vector<8x16x128xf32>
    tpu.vector_store %arg5[%c0_55, %c0_56, %c0_57], %201 {strides = array<i32>} : memref<8x16x128xf32, #tpu.memory_space<vmem>>, vector<8x16x128xf32>,
    return
  }
  func.func @transform_0(%arg0: i32) -> (i32, i32, i32) {
    %c0_i32 = arith.constant 0 : i32
    %c0_i32_0 = arith.constant 0 : i32
    %c0_i32_1 = arith.constant 0 : i32
    return %arg0, %c0_i32, %c0_i32_0 : i32, i32, i32
  }
  func.func @transform_1(%arg0: i32) -> (i32, i32) {
    %c0_i32 = arith.constant 0 : i32
    %c0_i32_0 = arith.constant 0 : i32
    %c0_i32_1 = arith.constant 0 : i32
    return %c0_i32, %c0_i32_0 : i32, i32
  }
  func.func @transform_2(%arg0: i32) -> (i32, i32) {
    %c0_i32 = arith.constant 0 : i32
    %c0_i32_0 = arith.constant 0 : i32
    %c0_i32_1 = arith.constant 0 : i32
    return %c0_i32, %c0_i32_0 : i32, i32
  }
  func.func @transform_3(%arg0: i32) -> i32 {
    %c0_i32 = arith.constant 0 : i32
    %c0_i32_0 = arith.constant 0 : i32
    return %c0_i32 : i32
  }
  func.func @transform_4(%arg0: i32) -> (i32, i32, i32) {
    %c0_i32 = arith.constant 0 : i32
    %c0_i32_0 = arith.constant 0 : i32
    %c0_i32_1 = arith.constant 0 : i32
    return %arg0, %c0_i32, %c0_i32_0 : i32, i32, i32
  }
}

</mosaic_0001>

<llo_original>
// kernel: tpu_custom_call.1
$region0: #{tpu_custom_call.1}
  #allocation0 [shape = 'u32[]', space=smem, size = 0x4, offset = 0x4, fixed_abs, tag = 'smem constant byte address 0x4 - core index']
  #allocation1 [shape = 'u32[72,128]{1,0:T(1,128)}', space=vmem, size = 0x9000, scoped, tag = 'internal scratch']
  %s0 = inlined_call_operand.hbm [shape: f32[16,16,128], index: 0, kind: input, shape index: {}]
  %s1 = inlined_call_operand.hbm [shape: f32[128,256], index: 1, kind: input, shape index: {}]
  %s2 = inlined_call_operand.hbm [shape: f32[400,128], index: 2, kind: input, shape index: {}]
  %s3 = inlined_call_operand.vmem [shape: f32[3], index: 3, kind: input, shape index: {}]
  %s4 = inlined_call_operand.hbm [shape: f32[16,16,128], index: 4, kind: output, shape index: {}]
  %s5 = sld [smem:[#allocation0]]
  $region65: #{tpu_custom_call.1} parent=0
    _
  %s7 = ssub.s32 1, %s5
  %s8 = scalar_select 0, %s7, %s5
  $region1: #{tpu_custom_call.1} parent=0
    #allocation2 [shape = 'u8[131072]{0}', space=vmem, size = 0x20000, scoped, tag = 'input window, operand 0']
    #allocation3 [shape = 's32[2]{0}', space=sflag, size = 0x8, scoped, tag = 'scoped memory for tpu_custom_call.1']
    #allocation4 [shape = 's32[2]{0}', space=sflag, size = 0x8, scoped, tag = 'scoped memory for tpu_custom_call.1']
    #allocation5 [shape = 's32[2]{0}', space=sflag, size = 0x8, scoped, tag = 'scoped memory for tpu_custom_call.1']
    #allocation6 [shape = 'u8[131072]{0}', space=vmem, size = 0x20000, scoped, tag = 'input window, operand 1, single buffered']
    #allocation7 [shape = 's32[1]{0}', space=sflag, size = 0x4, scoped, tag = 'scoped memory for tpu_custom_call.1']
    #allocation8 [shape = 'u8[204800]{0}', space=vmem, size = 0x32000, scoped, tag = 'input window, operand 2, single buffered']
    #allocation9 [shape = 'u8[512]{0}', space=smem, size = 0x200, scoped, tag = 'input window, operand 3, single buffered']
    #allocation10 [shape = 'u8[131072]{0}', space=vmem, size = 0x20000, scoped, tag = 'output window, operand 0']
    %9 = vsyncpa [#allocation3], 0
    %s10 = scalar_lea.sflag [#allocation3], 1
    %11 = vsyncpa %s10, 0
    %12 = vsyncpa [#allocation7], 0
    %13 = vsyncpa [#allocation5], 0
    %14 = vsyncpa [#allocation4], 0
    %s15 = scalar_lea.sflag [#allocation4], 1
    %16 = vsyncpa %s15, 0
    loop: start=0, step=1, limit=4
    $region2: #{tpu_custom_call.1} parent=1 // loop_pre_header
      _
    $region3: #{tpu_custom_call.1} parent=1 // loop_header
      %s18 = sphi 0, %s22
      %p19 = scmp.ge.s32.totalorder %s18, 4
      %s28 = sphi 0, %s30
      %s31 = sphi 0, %s28
      %s32 = sphi 0, %s31
      %s48 = sphi 0, %s32
      %s52 = sphi 0, %s52
      %s54 = sphi 0, %s52
      %s55 = sphi 0, %s54
      %s69 = sphi 0, %s55
      %s73 = sphi 0, %s73
      %s75 = sphi 0, %s73
      %s76 = sphi 0, %s75
      %s90 = sphi 0, %s76
      %s94 = sphi 0, %s94
      %s96 = sphi 0, %s94
      %s97 = sphi 0, %s96
      %s111 = sphi 0, %s97
      %s117 = sphi 0, %s119
      %s120 = sphi 0, %s117
      %s121 = sphi 0, %s120
      %s137 = sphi 0, %s121
    $region4: #{tpu_custom_call.1} parent=1 // loop_header_branch
      %21 = sbr.rel (%p19) target = $region8
    $region5: #{tpu_custom_call.1} parent=1 // loop_body
      %s23 = ssub.s32 %s18, 1
      %s24 = ssub.s32 %s18, 2
      %s25 = sadd.s32 %s18, 1
      %s26 = ssub.s32 %s18, %s25
      %p27 = scmp.eq.s32.totalorder %s26, 0
      %s29 = sadd.s32 %s28, 1
      %s30 = scalar_select %p27, %s28, %s29
      %p33 = pneg %p27
      %p34 = scmp.eq.s32.totalorder %s18, 1
      %p35 = por %p33, %p34
      %p36 = scmp.ne.s32.totalorder %s28, %s31
      %p37 = scmp.eq.s32.totalorder %s18, 0
      %p38 = por %p36, %p37
      %p39 = scmp.ne.s32.totalorder %s28, %s31
      %p40 = scmp.eq.s32.totalorder %s23, 1
      %p41 = por %p39, %p40
      %p42 = scmp.ne.s32.totalorder %s31, %s32
      %p43 = scmp.eq.s32.totalorder %s23, 0
      %p44 = por %p42, %p43
      %p45 = scmp.ne.s32.totalorder %s31, %s32
      %p46 = scmp.eq.s32.totalorder %s24, 1
      %p47 = por %p45, %p46
      %p49 = scmp.ne.s32.totalorder %s32, %s48
      %p50 = scmp.eq.s32.totalorder %s24, 0
      %p51 = por %p49, %p50
      %s53 = sadd.s32 %s52, 1
      %p56 = scmp.eq.s32.totalorder %s18, 1
      %p57 = scmp.ne.s32.totalorder %s52, %s54
      %p58 = scmp.eq.s32.totalorder %s18, 0
      %p59 = por %p57, %p58
      %p60 = scmp.ne.s32.totalorder %s52, %s54
      %p61 = scmp.eq.s32.totalorder %s23, 1
      %p62 = por %p60, %p61
      %p63 = scmp.ne.s32.totalorder %s54, %s55
      %p64 = scmp.eq.s32.totalorder %s23, 0
      %p65 = por %p63, %p64
      %p66 = scmp.ne.s32.totalorder %s54, %s55
      %p67 = scmp.eq.s32.totalorder %s24, 1
      %p68 = por %p66, %p67
      %p70 = scmp.ne.s32.totalorder %s55, %s69
      %p71 = scmp.eq.s32.totalorder %s24, 0
      %p72 = por %p70, %p71
      %s74 = sadd.s32 %s73, 1
      %p77 = scmp.eq.s32.totalorder %s18, 1
      %p78 = scmp.ne.s32.totalorder %s73, %s75
      %p79 = scmp.eq.s32.totalorder %s18, 0
      %p80 = por %p78, %p79
      %p81 = scmp.ne.s32.totalorder %s73, %s75
      %p82 = scmp.eq.s32.totalorder %s23, 1
      %p83 = por %p81, %p82
      %p84 = scmp.ne.s32.totalorder %s75, %s76
      %p85 = scmp.eq.s32.totalorder %s23, 0
      %p86 = por %p84, %p85
      %p87 = scmp.ne.s32.totalorder %s75, %s76
      %p88 = scmp.eq.s32.totalorder %s24, 1
      %p89 = por %p87, %p88
      %p91 = scmp.ne.s32.totalorder %s76, %s90
      %p92 = scmp.eq.s32.totalorder %s24, 0
      %p93 = por %p91, %p92
      %s95 = sadd.s32 %s94, 1
      %p98 = scmp.eq.s32.totalorder %s18, 1
      %p99 = scmp.ne.s32.totalorder %s94, %s96
      %p100 = scmp.eq.s32.totalorder %s18, 0
      %p101 = por %p99, %p100
      %p102 = scmp.ne.s32.totalorder %s94, %s96
      %p103 = scmp.eq.s32.totalorder %s23, 1
      %p104 = por %p102, %p103
      %p105 = scmp.ne.s32.totalorder %s96, %s97
      %p106 = scmp.eq.s32.totalorder %s23, 0
      %p107 = por %p105, %p106
      %p108 = scmp.ne.s32.totalorder %s96, %s97
      %p109 = scmp.eq.s32.totalorder %s24, 1
      %p110 = por %p108, %p109
      %p112 = scmp.ne.s32.totalorder %s97, %s111
      %p113 = scmp.eq.s32.totalorder %s24, 0
      %p114 = por %p112, %p113
      %s115 = ssub.s32 %s18, %s25
      %p116 = scmp.eq.s32.totalorder %s115, 0
      %s118 = sadd.s32 %s117, 1
      %s119 = scalar_select %p116, %s117, %s118
      %p122 = pneg %p116
      %p123 = scmp.eq.s32.totalorder %s18, 1
      %p124 = por %p122, %p123
      %p125 = scmp.ne.s32.totalorder %s117, %s120
      %p126 = scmp.eq.s32.totalorder %s18, 0
      %p127 = por %p125, %p126
      %p128 = scmp.ne.s32.totalorder %s117, %s120
      %p129 = scmp.eq.s32.totalorder %s23, 1
      %p130 = por %p128, %p129
      %p131 = scmp.ne.s32.totalorder %s120, %s121
      %p132 = scmp.eq.s32.totalorder %s23, 0
      %p133 = por %p131, %p132
      %p134 = scmp.ne.s32.totalorder %s120, %s121
      %p135 = scmp.eq.s32.totalorder %s24, 1
      %p136 = por %p134, %p135
      %p138 = scmp.ne.s32.totalorder %s121, %s137
      %p139 = scmp.eq.s32.totalorder %s24, 0
      %p140 = por %p138, %p139
      %p141 = scmp.le.s32.totalorder 1, %s18
      %p142 = scmp.lt.s32.totalorder %s18, 3
      %p143 = pnand %p141, %p142
      %p144 = pneg %p143
      // Predicated region
      $region9: #{tpu_custom_call.1} parent=5 // pred_check
        _
      $region10: #{tpu_custom_call.1} parent=5 // pred_check_branch
        %146 = sbr.rel (%p143) target = $region12
      $region11: #{tpu_custom_call.1} parent=5 // pred_region
        %s147 = ssub.s32 %s18, 1
        // Predicated region
        $region13: #{tpu_custom_call.1} parent=11 // pred_check
          %p148 = pneg %p65
        $region14: #{tpu_custom_call.1} parent=11 // pred_check_branch
          %150 = sbr.rel (%p148) target = $region16
        $region15: #{tpu_custom_call.1} parent=11 // pred_region
          %152 = vsyncadd [#allocation7], 0
          %s153 = sshll.u32 %s1, 4
          %s154 = int_to_ptr.hbm [resolvable:$true] %s153
          %s155 = sshll.u32 [#allocation6], 4
          %s156 = int_to_ptr.vmem [resolvable:$true] %s155
          %161 = dma.hbm_to_vmem [thread:$0]  %s154, 4096, %s156, [#allocation7], 256, 256, 16
        $region16: #{tpu_custom_call.1} parent=11 // pred_fallthru
          _
        // Predicated region
        $region17: #{tpu_custom_call.1} parent=11 // pred_check
          %p162 = pneg %p86
        $region18: #{tpu_custom_call.1} parent=11 // pred_check_branch
          %164 = sbr.rel (%p162) target = $region20
        $region19: #{tpu_custom_call.1} parent=11 // pred_region
          %166 = vsyncadd [#allocation7], 0
          %s167 = sshll.u32 %s2, 4
          %s168 = int_to_ptr.hbm [resolvable:$true] %s167
          %s169 = sshll.u32 [#allocation8], 4
          %s170 = int_to_ptr.vmem [resolvable:$true] %s169
          %175 = dma.hbm_to_vmem [thread:$0]  %s168, 6400, %s170, [#allocation7], 128, 128, 8
        $region20: #{tpu_custom_call.1} parent=11 // pred_fallthru
          _
        // Predicated region
        $region21: #{tpu_custom_call.1} parent=11 // pred_check
          %p176 = pneg %p107
        $region22: #{tpu_custom_call.1} parent=11 // pred_check_branch
          %178 = sbr.rel (%p176) target = $region24
        $region23: #{tpu_custom_call.1} parent=11 // pred_region
          %180 = vsyncadd [#allocation5], 0
          %s182 = sshll.u32 %s3, 4
          %s183 = int_to_ptr.vmem [resolvable:$true] %s182
          %185 = dma.vmem_to_smem %s183, 16, [#allocation9], [#allocation5]
        $region24: #{tpu_custom_call.1} parent=11 // pred_fallthru
          _
      $region12: #{tpu_custom_call.1} parent=5 // pred_fallthru
        _
      %p186 = scmp.lt.s32.totalorder %s18, 2
      // Predicated region
      $region25: #{tpu_custom_call.1} parent=5 // pred_check
        %p187 = pneg %p186
      $region26: #{tpu_custom_call.1} parent=5 // pred_check_branch
        %189 = sbr.rel (%p187) target = $region28
      $region27: #{tpu_custom_call.1} parent=5 // pred_region
        // Predicated region
        $region29: #{tpu_custom_call.1} parent=27 // pred_check
          %p190 = pneg %p38
        $region30: #{tpu_custom_call.1} parent=27 // pred_check_branch
          %192 = sbr.rel (%p190) target = $region32
        $region31: #{tpu_custom_call.1} parent=27 // pred_region
          %s193 = sand.u32 %s28, 1
          %s194 = scalar_lea.sflag [#allocation3], %s193
          %s195 = sand.u32 %s28, 1
          %s196 = smul.addr %s195, 128
          %s197 = scalar_lea.vmem [#allocation2], %s196
          %s198 = smul.u32 8, %s18
          %200 = vsyncadd %s194, 0
          %s201 = smul.addr %s198, 2
          %s202 = smul.addr %s201, 8
          %s203 = scalar_lea.hbm %s0, %s202
          %s204 = sshll.u32 %s203, 4
          %s205 = int_to_ptr.hbm [resolvable:$true] %s204
          %s206 = sshll.u32 %s197, 4
          %s207 = int_to_ptr.vmem [resolvable:$true] %s206
          %212 = dma.hbm_to_vmem [thread:$0]  %s205, 2048, %s207, %s194, 128, 128, 8
        $region32: #{tpu_custom_call.1} parent=27 // pred_fallthru
          _
      $region28: #{tpu_custom_call.1} parent=5 // pred_fallthru
        _
      %p213 = scmp.le.s32.totalorder 1, %s18
      %p214 = scmp.lt.s32.totalorder %s18, 3
      %p215 = pnand %p213, %p214
      %p216 = pneg %p215
      // Predicated region
      $region33: #{tpu_custom_call.1} parent=5 // pred_check
        _
      $region34: #{tpu_custom_call.1} parent=5 // pred_check_branch
        %218 = sbr.rel (%p215) target = $region36
      $region35: #{tpu_custom_call.1} parent=5 // pred_region
        %s219 = ssub.s32 %s18, 1
        %s220 = sand.u32 %s31, 1
        %s221 = scalar_lea.sflag [#allocation3], %s220
        %s222 = sand.u32 %s31, 1
        %s223 = smul.addr %s222, 128
        %s224 = scalar_lea.vmem [#allocation2], %s223
        // Predicated region
        $region37: #{tpu_custom_call.1} parent=35 // pred_check
          %p225 = pneg %p44
        $region38: #{tpu_custom_call.1} parent=35 // pred_check_branch
          %227 = sbr.rel (%p225) target = $region40
        $region39: #{tpu_custom_call.1} parent=35 // pred_region
          %229 = dma.done %s221, 2048
        $region40: #{tpu_custom_call.1} parent=35 // pred_fallthru
          _
        // Predicated region
        $region41: #{tpu_custom_call.1} parent=35 // pred_check
          %p230 = pneg %p65
        $region42: #{tpu_custom_call.1} parent=35 // pred_check_branch
          %232 = sbr.rel (%p230) target = $region44
        $region43: #{tpu_custom_call.1} parent=35 // pred_region
          %234 = dma.done [#allocation7], 4096
        $region44: #{tpu_custom_call.1} parent=35 // pred_fallthru
          _
        // Predicated region
        $region45: #{tpu_custom_call.1} parent=35 // pred_check
          %p235 = pneg %p86
        $region46: #{tpu_custom_call.1} parent=35 // pred_check_branch
          %237 = sbr.rel (%p235) target = $region48
        $region47: #{tpu_custom_call.1} parent=35 // pred_region
          %239 = dma.done [#allocation7], 6400
        $region48: #{tpu_custom_call.1} parent=35 // pred_fallthru
          _
        // Predicated region
        $region49: #{tpu_custom_call.1} parent=35 // pred_check
          %p240 = pneg %p107
        $region50: #{tpu_custom_call.1} parent=35 // pred_check_branch
          %242 = sbr.rel (%p240) target = $region52
        $region51: #{tpu_custom_call.1} parent=35 // pred_region
          %244 = dma.done [#allocation5], 16
        $region52: #{tpu_custom_call.1} parent=35 // pred_fallthru
          _
        %245 = sfence
        %s246 = sand.u32 %s31, 1
        %s247 = scalar_lea.sflag [#allocation3], %s246
        %s248 = sand.u32 %s31, 1
        %s249 = smul.addr %s248, 128
        %s250 = scalar_lea.vmem [#allocation2], %s249
        %p251 = pneg %p44
        %p252 = pneg %p41
        %p253 = pneg %p65
        %p254 = pneg %p62
        %p255 = pneg %p86
        %p256 = pneg %p83
        %p257 = pneg %p107
        %p258 = pneg %p104
        %p259 = pneg %p133
        %p260 = pneg %p130
        %s261 = sand.u32 %s120, 1
        %s262 = scalar_lea.sflag [#allocation4], %s261
        %s263 = sand.u32 %s120, 1
        %s264 = smul.addr %s263, 128
        %s265 = scalar_lea.vmem [#allocation10], %s264
        %s266 = smul.u32 8, %s23
        %s267 = smul.u32 8, %s23
        %v268 = vld [vmem:[%s224] sm:$0xff]
        %v269 = vld [vmem:[%s224 + $0x8] sm:$0xff]
        %v270 = vld [vmem:[%s224 + $0x10] sm:$0xff]
        %v271 = vld [vmem:[%s224 + $0x18] sm:$0xff]
        %v272 = vld [vmem:[%s224 + $0x20] sm:$0xff]
        %v273 = vld [vmem:[%s224 + $0x28] sm:$0xff]
        %v274 = vld [vmem:[%s224 + $0x30] sm:$0xff]
        %v275 = vld [vmem:[%s224 + $0x38] sm:$0xff]
        %v276 = vld [vmem:[%s224 + $0x40] sm:$0xff]
        %v277 = vld [vmem:[%s224 + $0x48] sm:$0xff]
        %v278 = vld [vmem:[%s224 + $0x50] sm:$0xff]
        %v279 = vld [vmem:[%s224 + $0x58] sm:$0xff]
        %v280 = vld [vmem:[%s224 + $0x60] sm:$0xff]
        %v281 = vld [vmem:[%s224 + $0x68] sm:$0xff]
        %v282 = vld [vmem:[%s224 + $0x70] sm:$0xff]
        %v283 = vld [vmem:[%s224 + $0x78] sm:$0xff]
        %v284 = vlaneseq
        %v285 = vshrl.u32 %v284, 7
        %v286 = vadd.s32 %v285, 8
        %v287 = vadd.s32 %v285, 16
        %v288 = vadd.s32 %v285, 24
        %v289 = vadd.s32 %v285, 32
        %v290 = vadd.s32 %v285, 40
        %v291 = vadd.s32 %v285, 48
        %v292 = vadd.s32 %v285, 56
        %v293 = vadd.s32 %v285, 64
        %v294 = vadd.s32 %v285, 72
        %v295 = vadd.s32 %v285, 80
        %v296 = vadd.s32 %v285, 88
        %v297 = vadd.s32 %v285, 96
        %v298 = vadd.s32 %v285, 104
        %v299 = vadd.s32 %v285, 112
        %v300 = vadd.s32 %v285, 120
        %vm301 = vcmp.lt.s32.totalorder %v285, 0
        %v302 = vsub.s32 0, %v285
        %v303 = vsel %vm301, %v302, %v285
        %v304 = vshrl.u32 %v303, 4
        %v305 = vand.u32 %v303, 15
        %v306 = vsub.s32 0, %v305
        %v307 = vsel %vm301, %v306, %v305
        %vm308 = vcmp.lt.s32.totalorder %v286, 0
        %v309 = vsub.s32 0, %v286
        %v310 = vsel %vm308, %v309, %v286
        %v311 = vshrl.u32 %v310, 4
        %v312 = vand.u32 %v310, 15
        %v313 = vsub.s32 0, %v312
        %v314 = vsel %vm308, %v313, %v312
        %vm315 = vcmp.lt.s32.totalorder %v287, 0
        %v316 = vsub.s32 0, %v287
        %v317 = vsel %vm315, %v316, %v287
        %v318 = vshrl.u32 %v317, 4
        %v319 = vand.u32 %v317, 15
        %v320 = vsub.s32 0, %v319
        %v321 = vsel %vm315, %v320, %v319
        %vm322 = vcmp.lt.s32.totalorder %v288, 0
        %v323 = vsub.s32 0, %v288
        %v324 = vsel %vm322, %v323, %v288
        %v325 = vshrl.u32 %v324, 4
        %v326 = vand.u32 %v324, 15
        %v327 = vsub.s32 0, %v326
        %v328 = vsel %vm322, %v327, %v326
        %vm329 = vcmp.lt.s32.totalorder %v289, 0
        %v330 = vsub.s32 0, %v289
        %v331 = vsel %vm329, %v330, %v289
        %v332 = vshrl.u32 %v331, 4
        %v333 = vand.u32 %v331, 15
        %v334 = vsub.s32 0, %v333
        %v335 = vsel %vm329, %v334, %v333
        %vm336 = vcmp.lt.s32.totalorder %v290, 0
        %v337 = vsub.s32 0, %v290
        %v338 = vsel %vm336, %v337, %v290
        %v339 = vshrl.u32 %v338, 4
        %v340 = vand.u32 %v338, 15
        %v341 = vsub.s32 0, %v340
        %v342 = vsel %vm336, %v341, %v340
        %vm343 = vcmp.lt.s32.totalorder %v291, 0
        %v344 = vsub.s32 0, %v291
        %v345 = vsel %vm343, %v344, %v291
        %v346 = vshrl.u32 %v345, 4
        %v347 = vand.u32 %v345, 15
        %v348 = vsub.s32 0, %v347
        %v349 = vsel %vm343, %v348, %v347
        %vm350 = vcmp.lt.s32.totalorder %v292, 0
        %v351 = vsub.s32 0, %v292
        %v352 = vsel %vm350, %v351, %v292
        %v353 = vshrl.u32 %v352, 4
        %v354 = vand.u32 %v352, 15
        %v355 = vsub.s32 0, %v354
        %v356 = vsel %vm350, %v355, %v354
        %vm357 = vcmp.lt.s32.totalorder %v293, 0
        %v358 = vsub.s32 0, %v293
        %v359 = vsel %vm357, %v358, %v293
        %v360 = vshrl.u32 %v359, 4
        %v361 = vand.u32 %v359, 15
        %v362 = vsub.s32 0, %v361
        %v363 = vsel %vm357, %v362, %v361
        %vm364 = vcmp.lt.s32.totalorder %v294, 0
        %v365 = vsub.s32 0, %v294
        %v366 = vsel %vm364, %v365, %v294
        %v367 = vshrl.u32 %v366, 4
        %v368 = vand.u32 %v366, 15
        %v369 = vsub.s32 0, %v368
        %v370 = vsel %vm364, %v369, %v368
        %vm371 = vcmp.lt.s32.totalorder %v295, 0
        %v372 = vsub.s32 0, %v295
        %v373 = vsel %vm371, %v372, %v295
        %v374 = vshrl.u32 %v373, 4
        %v375 = vand.u32 %v373, 15
        %v376 = vsub.s32 0, %v375
        %v377 = vsel %vm371, %v376, %v375
        %vm378 = vcmp.lt.s32.totalorder %v296, 0
        %v379 = vsub.s32 0, %v296
        %v380 = vsel %vm378, %v379, %v296
        %v381 = vshrl.u32 %v380, 4
        %v382 = vand.u32 %v380, 15
        %v383 = vsub.s32 0, %v382
        %v384 = vsel %vm378, %v383, %v382
        %vm385 = vcmp.lt.s32.totalorder %v297, 0
        %v386 = vsub.s32 0, %v297
        %v387 = vsel %vm385, %v386, %v297
        %v388 = vshrl.u32 %v387, 4
        %v389 = vand.u32 %v387, 15
        %v390 = vsub.s32 0, %v389
        %v391 = vsel %vm385, %v390, %v389
        %vm392 = vcmp.lt.s32.totalorder %v298, 0
        %v393 = vsub.s32 0, %v298
        %v394 = vsel %vm392, %v393, %v298
        %v395 = vshrl.u32 %v394, 4
        %v396 = vand.u32 %v394, 15
        %v397 = vsub.s32 0, %v396
        %v398 = vsel %vm392, %v397, %v396
        %vm399 = vcmp.lt.s32.totalorder %v299, 0
        %v400 = vsub.s32 0, %v299
        %v401 = vsel %vm399, %v400, %v299
        %v402 = vshrl.u32 %v401, 4
        %v403 = vand.u32 %v401, 15
        %v404 = vsub.s32 0, %v403
        %v405 = vsel %vm399, %v404, %v403
        %vm406 = vcmp.lt.s32.totalorder %v300, 0
        %v407 = vsub.s32 0, %v300
        %v408 = vsel %vm406, %v407, %v300
        %v409 = vshrl.u32 %v408, 4
        %v410 = vand.u32 %v408, 15
        %v411 = vsub.s32 0, %v410
        %v412 = vsel %vm406, %v411, %v410
        %vm413 = vcmp.ne.s32.totalorder %v307, 0
        %vm414 = vcmp.ne.s32.totalorder %v314, 0
        %vm415 = vcmp.ne.s32.totalorder %v321, 0
        %vm416 = vcmp.ne.s32.totalorder %v328, 0
        %vm417 = vcmp.ne.s32.totalorder %v335, 0
        %vm418 = vcmp.ne.s32.totalorder %v342, 0
        %vm419 = vcmp.ne.s32.totalorder %v349, 0
        %vm420 = vcmp.ne.s32.totalorder %v356, 0
        %vm421 = vcmp.ne.s32.totalorder %v363, 0
        %vm422 = vcmp.ne.s32.totalorder %v370, 0
        %vm423 = vcmp.ne.s32.totalorder %v377, 0
        %vm424 = vcmp.ne.s32.totalorder %v384, 0
        %vm425 = vcmp.ne.s32.totalorder %v391, 0
        %vm426 = vcmp.ne.s32.totalorder %v398, 0
        %vm427 = vcmp.ne.s32.totalorder %v405, 0
        %vm428 = vcmp.ne.s32.totalorder %v412, 0
        %vm429 = vcmp.lt.s32.totalorder %v307, 0
        %vm430 = vcmp.lt.s32.totalorder %v314, 0
        %vm431 = vcmp.lt.s32.totalorder %v321, 0
        %vm432 = vcmp.lt.s32.totalorder %v328, 0
        %vm433 = vcmp.lt.s32.totalorder %v335, 0
        %vm434 = vcmp.lt.s32.totalorder %v342, 0
        %vm435 = vcmp.lt.s32.totalorder %v349, 0
        %vm436 = vcmp.lt.s32.totalorder %v356, 0
        %vm437 = vcmp.lt.s32.totalorder %v363, 0
        %vm438 = vcmp.lt.s32.totalorder %v370, 0
        %vm439 = vcmp.lt.s32.totalorder %v377, 0
        %vm440 = vcmp.lt.s32.totalorder %v384, 0
        %vm441 = vcmp.lt.s32.totalorder %v391, 0
        %vm442 = vcmp.lt.s32.totalorder %v398, 0
        %vm443 = vcmp.lt.s32.totalorder %v405, 0
        %vm444 = vcmp.lt.s32.totalorder %v412, 0
        %vm445 = vmand %vm429, %vm413
        %vm446 = vmand %vm430, %vm414
        %vm447 = vmand %vm431, %vm415
        %vm448 = vmand %vm432, %vm416
        %vm449 = vmand %vm433, %vm417
        %vm450 = vmand %vm434, %vm418
        %vm451 = vmand %vm435, %vm419
        %vm452 = vmand %vm436, %vm420
        %vm453 = vmand %vm437, %vm421
        %vm454 = vmand %vm438, %vm422
        %vm455 = vmand %vm439, %vm423
        %vm456 = vmand %vm440, %vm424
        %vm457 = vmand %vm441, %vm425
        %vm458 = vmand %vm442, %vm426
        %vm459 = vmand %vm443, %vm427
        %vm460 = vmand %vm444, %vm428
        %v461 = vadd.s32 %v307, 16
        %v462 = vadd.s32 %v314, 16
        %v463 = vadd.s32 %v321, 16
        %v464 = vadd.s32 %v328, 16
        %v465 = vadd.s32 %v335, 16
        %v466 = vadd.s32 %v342, 16
        %v467 = vadd.s32 %v349, 16
        %v468 = vadd.s32 %v356, 16
        %v469 = vadd.s32 %v363, 16
        %v470 = vadd.s32 %v370, 16
        %v471 = vadd.s32 %v377, 16
        %v472 = vadd.s32 %v384, 16
        %v473 = vadd.s32 %v391, 16
        %v474 = vadd.s32 %v398, 16
        %v475 = vadd.s32 %v405, 16
        %v476 = vadd.s32 %v412, 16
        %v477 = vsel %vm445, %v461, %v307
        %v478 = vsel %vm446, %v462, %v314
        %v479 = vsel %vm447, %v463, %v321
        %v480 = vsel %vm448, %v464, %v328
        %v481 = vsel %vm449, %v465, %v335
        %v482 = vsel %vm450, %v466, %v342
        %v483 = vsel %vm451, %v467, %v349
        %v484 = vsel %vm452, %v468, %v356
        %v485 = vsel %vm453, %v469, %v363
        %v486 = vsel %vm454, %v470, %v370
        %v487 = vsel %vm455, %v471, %v377
        %v488 = vsel %vm456, %v472, %v384
        %v489 = vsel %vm457, %v473, %v391
        %v490 = vsel %vm458, %v474, %v398
        %v491 = vsel %vm459, %v475, %v405
        %v492 = vsel %vm460, %v476, %v412
        %v493 = vrot.slane %v268, 7
        %v494 = vrot.slane %v269, 7
        %v495 = vrot.slane %v270, 7
        %v496 = vrot.slane %v271, 7
        %v497 = vrot.slane %v272, 7
        %v498 = vrot.slane %v273, 7
        %v499 = vrot.slane %v274, 7
        %v500 = vrot.slane %v275, 7
        %v501 = vrot.slane %v276, 7
        %v502 = vrot.slane %v277, 7
        %v503 = vrot.slane %v278, 7
        %v504 = vrot.slane %v279, 7
        %v505 = vrot.slane %v280, 7
        %v506 = vrot.slane %v281, 7
        %v507 = vrot.slane %v282, 7
        %v508 = vrot.slane %v283, 7
        %vm509 = vcmp.lt.s32.totalorder %v285, 1
        %v510 = vsel %vm509, %v507, %v508
        %v511 = vsel %vm509, %v506, %v507
        %v512 = vsel %vm509, %v505, %v506
        %v513 = vsel %vm509, %v504, %v505
        %v514 = vsel %vm509, %v503, %v504
        %v515 = vsel %vm509, %v502, %v503
        %v516 = vsel %vm509, %v501, %v502
        %v517 = vsel %vm509, %v500, %v501
        %v518 = vsel %vm509, %v499, %v500
        %v519 = vsel %vm509, %v498, %v499
        %v520 = vsel %vm509, %v497, %v498
        %v521 = vsel %vm509, %v496, %v497
        %v522 = vsel %vm509, %v495, %v496
        %v523 = vsel %vm509, %v494, %v495
        %v524 = vsel %vm509, %v493, %v494
        %v525 = vsel %vm509, %v508, %v493
        %vm526 = vcmp.ge.s32.totalorder %v477, 1
        %vm527 = vcmp.ge.s32.totalorder %v478, 1
        %vm528 = vcmp.ge.s32.totalorder %v479, 1
        %vm529 = vcmp.ge.s32.totalorder %v480, 1
        %vm530 = vcmp.ge.s32.totalorder %v481, 1
        %vm531 = vcmp.ge.s32.totalorder %v482, 1
        %vm532 = vcmp.ge.s32.totalorder %v483, 1
        %vm533 = vcmp.ge.s32.totalorder %v484, 1
        %vm534 = vcmp.ge.s32.totalorder %v485, 1
        %vm535 = vcmp.ge.s32.totalorder %v486, 1
        %vm536 = vcmp.ge.s32.totalorder %v487, 1
        %vm537 = vcmp.ge.s32.totalorder %v488, 1
        %vm538 = vcmp.ge.s32.totalorder %v489, 1
        %vm539 = vcmp.ge.s32.totalorder %v490, 1
        %vm540 = vcmp.ge.s32.totalorder %v491, 1
        %vm541 = vcmp.ge.s32.totalorder %v492, 1
        %v542 = vsel %vm526, 1, 0
        %v543 = vsel %vm527, 1, 0
        %v544 = vsel %vm528, 1, 0
        %v545 = vsel %vm529, 1, 0
        %v546 = vsel %vm530, 1, 0
        %v547 = vsel %vm531, 1, 0
        %v548 = vsel %vm532, 1, 0
        %v549 = vsel %vm533, 1, 0
        %v550 = vsel %vm534, 1, 0
        %v551 = vsel %vm535, 1, 0
        %v552 = vsel %vm536, 1, 0
        %v553 = vsel %vm537, 1, 0
        %v554 = vsel %vm538, 1, 0
        %v555 = vsel %vm539, 1, 0
        %v556 = vsel %vm540, 1, 0
        %v557 = vsel %vm541, 1, 0
        %vm558 = vcmp.eq.s32.totalorder %v542, 1
        %vm559 = vcmp.eq.s32.totalorder %v543, 1
        %vm560 = vcmp.eq.s32.totalorder %v544, 1
        %vm561 = vcmp.eq.s32.totalorder %v545, 1
        %vm562 = vcmp.eq.s32.totalorder %v546, 1
        %vm563 = vcmp.eq.s32.totalorder %v547, 1
        %vm564 = vcmp.eq.s32.totalorder %v548, 1
        %vm565 = vcmp.eq.s32.totalorder %v549, 1
        %vm566 = vcmp.eq.s32.totalorder %v550, 1
        %vm567 = vcmp.eq.s32.totalorder %v551, 1
        %vm568 = vcmp.eq.s32.totalorder %v552, 1
        %vm569 = vcmp.eq.s32.totalorder %v553, 1
        %vm570 = vcmp.eq.s32.totalorder %v554, 1
        %vm571 = vcmp.eq.s32.totalorder %v555, 1
        %vm572 = vcmp.eq.s32.totalorder %v556, 1
        %vm573 = vcmp.eq.s32.totalorder %v557, 1
        %v574 = vsel %vm558, %v525, 0.0
        %v575 = vsel %vm559, %v524, 0.0
        %v576 = vsel %vm560, %v523, 0.0
        %v577 = vsel %vm561, %v522, 0.0
        %v578 = vsel %vm562, %v521, 0.0
        %v579 = vsel %vm563, %v520, 0.0
        %v580 = vsel %vm564, %v519, 0.0
        %v581 = vsel %vm565, %v518, 0.0
        %v582 = vsel %vm566, %v517, 0.0
        %v583 = vsel %vm567, %v516, 0.0
        %v584 = vsel %vm568, %v515, 0.0
        %v585 = vsel %vm569, %v514, 0.0
        %v586 = vsel %vm570, %v513, 0.0
        %v587 = vsel %vm571, %v512, 0.0
        %v588 = vsel %vm572, %v511, 0.0
        %v589 = vsel %vm573, %v510, 0.0
        %590 = vrot.lane.b32.xlu0 %v268, 4
        %v591 = vpop.permute.xlu0 %590
        %592 = vrot.lane.b32.xlu0 %v269, 4
        %v593 = vpop.permute.xlu0 %592
        %594 = vrot.lane.b32.xlu0 %v270, 4
        %v595 = vpop.permute.xlu0 %594
        %596 = vrot.lane.b32.xlu0 %v271, 4
        %v597 = vpop.permute.xlu0 %596
        %598 = vrot.lane.b32.xlu0 %v272, 4
        %v599 = vpop.permute.xlu0 %598
        %600 = vrot.lane.b32.xlu0 %v273, 4
        %v601 = vpop.permute.xlu0 %600
        %602 = vrot.lane.b32.xlu0 %v274, 4
        %v603 = vpop.permute.xlu0 %602
        %604 = vrot.lane.b32.xlu0 %v275, 4
        %v605 = vpop.permute.xlu0 %604
        %606 = vrot.lane.b32.xlu0 %v276, 4
        %v607 = vpop.permute.xlu0 %606
        %608 = vrot.lane.b32.xlu0 %v277, 4
        %v609 = vpop.permute.xlu0 %608
        %610 = vrot.lane.b32.xlu0 %v278, 4
        %v611 = vpop.permute.xlu0 %610
        %612 = vrot.lane.b32.xlu0 %v279, 4
        %v613 = vpop.permute.xlu0 %612
        %614 = vrot.lane.b32.xlu0 %v280, 4
        %v615 = vpop.permute.xlu0 %614
        %616 = vrot.lane.b32.xlu0 %v281, 4
        %v617 = vpop.permute.xlu0 %616
        %618 = vrot.lane.b32.xlu0 %v282, 4
        %v619 = vpop.permute.xlu0 %618
        %620 = vrot.lane.b32.xlu0 %v283, 4
        %v621 = vpop.permute.xlu0 %620
        %v622 = vadd.f32 %v574, %v591
        %v623 = vadd.f32 %v575, %v593
        %v624 = vadd.f32 %v576, %v595
        %v625 = vadd.f32 %v577, %v597
        %v626 = vadd.f32 %v578, %v599
        %v627 = vadd.f32 %v579, %v601
        %v628 = vadd.f32 %v580, %v603
        %v629 = vadd.f32 %v581, %v605
        %v630 = vadd.f32 %v582, %v607
        %v631 = vadd.f32 %v583, %v609
        %v632 = vadd.f32 %v584, %v611
        %v633 = vadd.f32 %v585, %v613
        %v634 = vadd.f32 %v586, %v615
        %v635 = vadd.f32 %v587, %v617
        %v636 = vadd.f32 %v588, %v619
        %v637 = vadd.f32 %v589, %v621
        %v638 = vrot.slane %v268, 1
        %v639 = vrot.slane %v269, 1
        %v640 = vrot.slane %v270, 1
        %v641 = vrot.slane %v271, 1
        %v642 = vrot.slane %v272, 1
        %v643 = vrot.slane %v273, 1
        %v644 = vrot.slane %v274, 1
        %v645 = vrot.slane %v275, 1
        %v646 = vrot.slane %v276, 1
        %v647 = vrot.slane %v277, 1
        %v648 = vrot.slane %v278, 1
        %v649 = vrot.slane %v279, 1
        %v650 = vrot.slane %v280, 1
        %v651 = vrot.slane %v281, 1
        %v652 = vrot.slane %v282, 1
        %v653 = vrot.slane %v283, 1
        %vm654 = vcmp.lt.s32.totalorder %v285, 7
        %v655 = vsel %vm654, %v652, %v653
        %v656 = vsel %vm654, %v651, %v652
        %v657 = vsel %vm654, %v650, %v651
        %v658 = vsel %vm654, %v649, %v650
        %v659 = vsel %vm654, %v648, %v649
        %v660 = vsel %vm654, %v647, %v648
        %v661 = vsel %vm654, %v646, %v647
        %v662 = vsel %vm654, %v645, %v646
        %v663 = vsel %vm654, %v644, %v645
        %v664 = vsel %vm654, %v643, %v644
        %v665 = vsel %vm654, %v642, %v643
        %v666 = vsel %vm654, %v641, %v642
        %v667 = vsel %vm654, %v640, %v641
        %v668 = vsel %vm654, %v639, %v640
        %v669 = vsel %vm654, %v638, %v639
        %v670 = vsel %vm654, %v653, %v638
        %vm671 = vcmp.lt.s32.totalorder %v477, 15
        %vm672 = vcmp.lt.s32.totalorder %v478, 15
        %vm673 = vcmp.lt.s32.totalorder %v479, 15
        %vm674 = vcmp.lt.s32.totalorder %v480, 15
        %vm675 = vcmp.lt.s32.totalorder %v481, 15
        %vm676 = vcmp.lt.s32.totalorder %v482, 15
        %vm677 = vcmp.lt.s32.totalorder %v483, 15
        %vm678 = vcmp.lt.s32.totalorder %v484, 15
        %vm679 = vcmp.lt.s32.totalorder %v485, 15
        %vm680 = vcmp.lt.s32.totalorder %v486, 15
        %vm681 = vcmp.lt.s32.totalorder %v487, 15
        %vm682 = vcmp.lt.s32.totalorder %v488, 15
        %vm683 = vcmp.lt.s32.totalorder %v489, 15
        %vm684 = vcmp.lt.s32.totalorder %v490, 15
        %vm685 = vcmp.lt.s32.totalorder %v491, 15
        %vm686 = vcmp.lt.s32.totalorder %v492, 15
        %v687 = vsel %vm671, 1, 0
        %v688 = vsel %vm672, 1, 0
        %v689 = vsel %vm673, 1, 0
        %v690 = vsel %vm674, 1, 0
        %v691 = vsel %vm675, 1, 0
        %v692 = vsel %vm676, 1, 0
        %v693 = vsel %vm677, 1, 0
        %v694 = vsel %vm678, 1, 0
        %v695 = vsel %vm679, 1, 0
        %v696 = vsel %vm680, 1, 0
        %v697 = vsel %vm681, 1, 0
        %v698 = vsel %vm682, 1, 0
        %v699 = vsel %vm683, 1, 0
        %v700 = vsel %vm684, 1, 0
        %v701 = vsel %vm685, 1, 0
        %v702 = vsel %vm686, 1, 0
        %vm703 = vcmp.eq.s32.totalorder %v687, 1
        %vm704 = vcmp.eq.s32.totalorder %v688, 1
        %vm705 = vcmp.eq.s32.totalorder %v689, 1
        %vm706 = vcmp.eq.s32.totalorder %v690, 1
        %vm707 = vcmp.eq.s32.totalorder %v691, 1
        %vm708 = vcmp.eq.s32.totalorder %v692, 1
        %vm709 = vcmp.eq.s32.totalorder %v693, 1
        %vm710 = vcmp.eq.s32.totalorder %v694, 1
        %vm711 = vcmp.eq.s32.totalorder %v695, 1
        %vm712 = vcmp.eq.s32.totalorder %v696, 1
        %vm713 = vcmp.eq.s32.totalorder %v697, 1
        %vm714 = vcmp.eq.s32.totalorder %v698, 1
        %vm715 = vcmp.eq.s32.totalorder %v699, 1
        %vm716 = vcmp.eq.s32.totalorder %v700, 1
        %vm717 = vcmp.eq.s32.totalorder %v701, 1
        %vm718 = vcmp.eq.s32.totalorder %v702, 1
        %v719 = vsel %vm703, %v669, 0.0
        %v720 = vsel %vm704, %v668, 0.0
        %v721 = vsel %vm705, %v667, 0.0
        %v722 = vsel %vm706, %v666, 0.0
        %v723 = vsel %vm707, %v665, 0.0
        %v724 = vsel %vm708, %v664, 0.0
        %v725 = vsel %vm709, %v663, 0.0
        %v726 = vsel %vm710, %v662, 0.0
        %v727 = vsel %vm711, %v661, 0.0
        %v728 = vsel %vm712, %v660, 0.0
        %v729 = vsel %vm713, %v659, 0.0
        %v730 = vsel %vm714, %v658, 0.0
        %v731 = vsel %vm715, %v657, 0.0
        %v732 = vsel %vm716, %v656, 0.0
        %v733 = vsel %vm717, %v655, 0.0
        %v734 = vsel %vm718, %v670, 0.0
        %735 = vrot.lane.b32.xlu0 %v719, 8
        %v736 = vpop.permute.xlu0 %735
        %737 = vrot.lane.b32.xlu0 %v720, 8
        %v738 = vpop.permute.xlu0 %737
        %739 = vrot.lane.b32.xlu0 %v721, 8
        %v740 = vpop.permute.xlu0 %739
        %741 = vrot.lane.b32.xlu0 %v722, 8
        %v742 = vpop.permute.xlu0 %741
        %743 = vrot.lane.b32.xlu0 %v723, 8
        %v744 = vpop.permute.xlu0 %743
        %745 = vrot.lane.b32.xlu0 %v724, 8
        %v746 = vpop.permute.xlu0 %745
        %747 = vrot.lane.b32.xlu0 %v725, 8
        %v748 = vpop.permute.xlu0 %747
        %749 = vrot.lane.b32.xlu0 %v726, 8
        %v750 = vpop.permute.xlu0 %749
        %751 = vrot.lane.b32.xlu0 %v727, 8
        %v752 = vpop.permute.xlu0 %751
        %753 = vrot.lane.b32.xlu0 %v728, 8
        %v754 = vpop.permute.xlu0 %753
        %755 = vrot.lane.b32.xlu0 %v729, 8
        %v756 = vpop.permute.xlu0 %755
        %757 = vrot.lane.b32.xlu0 %v730, 8
        %v758 = vpop.permute.xlu0 %757
        %759 = vrot.lane.b32.xlu0 %v731, 8
        %v760 = vpop.permute.xlu0 %759
        %761 = vrot.lane.b32.xlu0 %v732, 8
        %v762 = vpop.permute.xlu0 %761
        %763 = vrot.lane.b32.xlu0 %v733, 8
        %v764 = vpop.permute.xlu0 %763
        %765 = vrot.lane.b32.xlu0 %v734, 8
        %v766 = vpop.permute.xlu0 %765
        %v767 = vadd.f32 %v622, %v736
        %v768 = vadd.f32 %v623, %v738
        %v769 = vadd.f32 %v624, %v740
        %v770 = vadd.f32 %v625, %v742
        %v771 = vadd.f32 %v626, %v744
        %v772 = vadd.f32 %v627, %v746
        %v773 = vadd.f32 %v628, %v748
        %v774 = vadd.f32 %v629, %v750
        %v775 = vadd.f32 %v630, %v752
        %v776 = vadd.f32 %v631, %v754
        %v777 = vadd.f32 %v632, %v756
        %v778 = vadd.f32 %v633, %v758
        %v779 = vadd.f32 %v634, %v760
        %v780 = vadd.f32 %v635, %v762
        %v781 = vadd.f32 %v636, %v764
        %v782 = vadd.f32 %v637, %v766
        %v783 = vld [vmem:[#allocation6] sm:$0xff]
        %v784 = vld [vmem:[#allocation6 + $0x8] sm:$0xff]
        %v785 = vld [vmem:[#allocation6 + $0x10] sm:$0xff]
        %v786 = vld [vmem:[#allocation6 + $0x18] sm:$0xff]
        %v787 = vld [vmem:[#allocation6 + $0x20] sm:$0xff]
        %v788 = vld [vmem:[#allocation6 + $0x28] sm:$0xff]
        %v789 = vld [vmem:[#allocation6 + $0x30] sm:$0xff]
        %v790 = vld [vmem:[#allocation6 + $0x38] sm:$0xff]
        %v791 = vld [vmem:[#allocation6 + $0x40] sm:$0xff]
        %v792 = vld [vmem:[#allocation6 + $0x48] sm:$0xff]
        %v793 = vld [vmem:[#allocation6 + $0x50] sm:$0xff]
        %v794 = vld [vmem:[#allocation6 + $0x58] sm:$0xff]
        %v795 = vld [vmem:[#allocation6 + $0x60] sm:$0xff]
        %v796 = vld [vmem:[#allocation6 + $0x68] sm:$0xff]
        %v797 = vld [vmem:[#allocation6 + $0x70] sm:$0xff]
        %v798 = vld [vmem:[#allocation6 + $0x78] sm:$0xff]
        %v799 = vld [vmem:[#allocation6 + $0x80] sm:$0xff]
        %v800 = vld [vmem:[#allocation6 + $0x88] sm:$0xff]
        %v801 = vld [vmem:[#allocation6 + $0x90] sm:$0xff]
        %v802 = vld [vmem:[#allocation6 + $0x98] sm:$0xff]
        %v803 = vld [vmem:[#allocation6 + $0xa0] sm:$0xff]
        %v804 = vld [vmem:[#allocation6 + $0xa8] sm:$0xff]
        %v805 = vld [vmem:[#allocation6 + $0xb0] sm:$0xff]
        %v806 = vld [vmem:[#allocation6 + $0xb8] sm:$0xff]
        %v807 = vld [vmem:[#allocation6 + $0xc0] sm:$0xff]
        %v808 = vld [vmem:[#allocation6 + $0xc8] sm:$0xff]
        %v809 = vld [vmem:[#allocation6 + $0xd0] sm:$0xff]
        %v810 = vld [vmem:[#allocation6 + $0xd8] sm:$0xff]
        %v811 = vld [vmem:[#allocation6 + $0xe0] sm:$0xff]
        %v812 = vld [vmem:[#allocation6 + $0xe8] sm:$0xff]
        %v813 = vld [vmem:[#allocation6 + $0xf0] sm:$0xff]
        %v814 = vld [vmem:[#allocation6 + $0xf8] sm:$0xff]
        %815 = vmatpush.msra.mxu0 %v813
        %816 = vmatpush.msra.mxu0 %v811
        %817 = vmatpush.msra.mxu0 %v809
        %818 = vmatpush.msra.mxu0 %v807
        %819 = vmatpush.msra.mxu0 %v805
        %820 = vmatpush.msra.mxu0 %v803
        %821 = vmatpush.msra.mxu0 %v801
        %822 = vmatpush.msra.mxu0 %v799
        %823 = vmatpush.msra.mxu0 %v797
        %824 = vmatpush.msra.mxu0 %v795
        %825 = vmatpush.msra.mxu0 %v793
        %826 = vmatpush.msra.mxu0 %v791
        %827 = vmatpush.msra.mxu0 %v789
        %828 = vmatpush.msra.mxu0 %v787
        %829 = vmatpush.msra.mxu0 %v785
        %830 = vmatpush.msra.mxu0 %v783
        %831 = vmatmul.f32.gmra.mxu0 %v767
        %v832 = vpop.f32.mrf.mxu0
        %v833 = vadd.f32 0.0, %v832
        %834 = vmatmul.f32.gmra.mxu0 %v768
        %v835 = vpop.f32.mrf.mxu0
        %v836 = vadd.f32 0.0, %v835
        %837 = vmatmul.f32.gmra.mxu0 %v769
        %v838 = vpop.f32.mrf.mxu0
        %v839 = vadd.f32 0.0, %v838
        %840 = vmatmul.f32.gmra.mxu0 %v770
        %v841 = vpop.f32.mrf.mxu0
        %v842 = vadd.f32 0.0, %v841
        %843 = vmatmul.f32.gmra.mxu0 %v771
        %v844 = vpop.f32.mrf.mxu0
        %v845 = vadd.f32 0.0, %v844
        %846 = vmatmul.f32.gmra.mxu0 %v772
        %v847 = vpop.f32.mrf.mxu0
        %v848 = vadd.f32 0.0, %v847
        %849 = vmatmul.f32.gmra.mxu0 %v773
        %v850 = vpop.f32.mrf.mxu0
        %v851 = vadd.f32 0.0, %v850
        %852 = vmatmul.f32.gmra.mxu0 %v774
        %v853 = vpop.f32.mrf.mxu0
        %v854 = vadd.f32 0.0, %v853
        %855 = vmatmul.f32.gmra.mxu0 %v775
        %v856 = vpop.f32.mrf.mxu0
        %v857 = vadd.f32 0.0, %v856
        %858 = vmatmul.f32.gmra.mxu0 %v776
        %v859 = vpop.f32.mrf.mxu0
        %v860 = vadd.f32 0.0, %v859
        %861 = vmatmul.f32.gmra.mxu0 %v777
        %v862 = vpop.f32.mrf.mxu0
        %v863 = vadd.f32 0.0, %v862
        %864 = vmatmul.f32.gmra.mxu0 %v778
        %v865 = vpop.f32.mrf.mxu0
        %v866 = vadd.f32 0.0, %v865
        %867 = vmatmul.f32.gmra.mxu0 %v779
        %v868 = vpop.f32.mrf.mxu0
        %v869 = vadd.f32 0.0, %v868
        %870 = vmatmul.f32.gmra.mxu0 %v780
        %v871 = vpop.f32.mrf.mxu0
        %v872 = vadd.f32 0.0, %v871
        %873 = vmatmul.f32.gmra.mxu0 %v781
        %v874 = vpop.f32.mrf.mxu0
        %v875 = vadd.f32 0.0, %v874
        %876 = vmatmul.f32.gmra.mxu0 %v782
        %v877 = vpop.f32.mrf.mxu0
        %v878 = vadd.f32 0.0, %v877
        %879 = vdwg.mxu0
        %880 = vmatpush.msra.mxu0 %v814
        %881 = vmatpush.msra.mxu0 %v812
        %882 = vmatpush.msra.mxu0 %v810
        %883 = vmatpush.msra.mxu0 %v808
        %884 = vmatpush.msra.mxu0 %v806
        %885 = vmatpush.msra.mxu0 %v804
        %886 = vmatpush.msra.mxu0 %v802
        %887 = vmatpush.msra.mxu0 %v800
        %888 = vmatpush.msra.mxu0 %v798
        %889 = vmatpush.msra.mxu0 %v796
        %890 = vmatpush.msra.mxu0 %v794
        %891 = vmatpush.msra.mxu0 %v792
        %892 = vmatpush.msra.mxu0 %v790
        %893 = vmatpush.msra.mxu0 %v788
        %894 = vmatpush.msra.mxu0 %v786
        %895 = vmatpush.msra.mxu0 %v784
        %896 = vmatmul.f32.gmra.mxu0 %v767
        %v897 = vpop.f32.mrf.mxu0
        %v898 = vadd.f32 0.0, %v897
        %899 = vmatmul.f32.gmra.mxu0 %v768
        %v900 = vpop.f32.mrf.mxu0
        %v901 = vadd.f32 0.0, %v900
        %902 = vmatmul.f32.gmra.mxu0 %v769
        %v903 = vpop.f32.mrf.mxu0
        %v904 = vadd.f32 0.0, %v903
        %905 = vmatmul.f32.gmra.mxu0 %v770
        %v906 = vpop.f32.mrf.mxu0
        %v907 = vadd.f32 0.0, %v906
        %908 = vmatmul.f32.gmra.mxu0 %v771
        %v909 = vpop.f32.mrf.mxu0
        %v910 = vadd.f32 0.0, %v909
        %911 = vmatmul.f32.gmra.mxu0 %v772
        %v912 = vpop.f32.mrf.mxu0
        %v913 = vadd.f32 0.0, %v912
        %914 = vmatmul.f32.gmra.mxu0 %v773
        %v915 = vpop.f32.mrf.mxu0
        %v916 = vadd.f32 0.0, %v915
        %917 = vmatmul.f32.gmra.mxu0 %v774
        %v918 = vpop.f32.mrf.mxu0
        %v919 = vadd.f32 0.0, %v918
        %920 = vmatmul.f32.gmra.mxu0 %v775
        %v921 = vpop.f32.mrf.mxu0
        %v922 = vadd.f32 0.0, %v921
        %923 = vmatmul.f32.gmra.mxu0 %v776
        %v924 = vpop.f32.mrf.mxu0
        %v925 = vadd.f32 0.0, %v924
        %926 = vmatmul.f32.gmra.mxu0 %v777
        %v927 = vpop.f32.mrf.mxu0
        %v928 = vadd.f32 0.0, %v927
        %929 = vmatmul.f32.gmra.mxu0 %v778
        %v930 = vpop.f32.mrf.mxu0
        %v931 = vadd.f32 0.0, %v930
        %932 = vmatmul.f32.gmra.mxu0 %v779
        %v933 = vpop.f32.mrf.mxu0
        %v934 = vadd.f32 0.0, %v933
        %935 = vmatmul.f32.gmra.mxu0 %v780
        %v936 = vpop.f32.mrf.mxu0
        %v937 = vadd.f32 0.0, %v936
        %938 = vmatmul.f32.gmra.mxu0 %v781
        %v939 = vpop.f32.mrf.mxu0
        %v940 = vadd.f32 0.0, %v939
        %941 = vmatmul.f32.gmra.mxu0 %v782
        %v942 = vpop.f32.mrf.mxu0
        %v943 = vadd.f32 0.0, %v942
        %944 = vdwg.mxu0
        %v945 = vld [vmem:[#allocation8 + $0x18a] sm:$0x1]
        %v946 = vperm.slane %v945, 0
        %v947 = vadd.f32 %v898, %v946
        %v948 = vadd.f32 %v901, %v946
        %v949 = vadd.f32 %v904, %v946
        %v950 = vadd.f32 %v907, %v946
        %v951 = vadd.f32 %v910, %v946
        %v952 = vadd.f32 %v913, %v946
        %v953 = vadd.f32 %v916, %v946
        %v954 = vadd.f32 %v919, %v946
        %v955 = vadd.f32 %v922, %v946
        %v956 = vadd.f32 %v925, %v946
        %v957 = vadd.f32 %v928, %v946
        %v958 = vadd.f32 %v931, %v946
        %v959 = vadd.f32 %v934, %v946
        %v960 = vadd.f32 %v937, %v946
        %v961 = vadd.f32 %v940, %v946
        %v962 = vadd.f32 %v943, %v946
        %v963 = vld [vmem:[#allocation8 + $0x188] sm:$0x1]
        %v964 = vperm.slane %v963, 0
        %v965 = vadd.f32 %v833, %v964
        %v966 = vadd.f32 %v836, %v964
        %v967 = vadd.f32 %v839, %v964
        %v968 = vadd.f32 %v842, %v964
        %v969 = vadd.f32 %v845, %v964
        %v970 = vadd.f32 %v848, %v964
        %v971 = vadd.f32 %v851, %v964
        %v972 = vadd.f32 %v854, %v964
        %v973 = vadd.f32 %v857, %v964
        %v974 = vadd.f32 %v860, %v964
        %v975 = vadd.f32 %v863, %v964
        %v976 = vadd.f32 %v866, %v964
        %v977 = vadd.f32 %v869, %v964
        %v978 = vadd.f32 %v872, %v964
        %v979 = vadd.f32 %v875, %v964
        %v980 = vadd.f32 %v878, %v964
        %v981 = vadd.f32 %v965, 0.44932896
        %v982 = vadd.f32 %v966, 0.44932896
        %v983 = vadd.f32 %v967, 0.44932896
        %v984 = vadd.f32 %v968, 0.44932896
        %v985 = vadd.f32 %v969, 0.44932896
        %v986 = vadd.f32 %v970, 0.44932896
        %v987 = vadd.f32 %v971, 0.44932896
        %v988 = vadd.f32 %v972, 0.44932896
        %v989 = vadd.f32 %v973, 0.44932896
        %v990 = vadd.f32 %v974, 0.44932896
        %v991 = vadd.f32 %v975, 0.44932896
        %v992 = vadd.f32 %v976, 0.44932896
        %v993 = vadd.f32 %v977, 0.44932896
        %v994 = vadd.f32 %v978, 0.44932896
        %v995 = vadd.f32 %v979, 0.44932896
        %v996 = vadd.f32 %v980, 0.44932896
        %vm997 = vcmp.ge.f32.partialorder %v981, 1.0
        %vm998 = vcmp.ge.f32.partialorder %v982, 1.0
        %vm999 = vcmp.ge.f32.partialorder %v983, 1.0
        %vm1000 = vcmp.ge.f32.partialorder %v984, 1.0
        %vm1001 = vcmp.ge.f32.partialorder %v985, 1.0
        %vm1002 = vcmp.ge.f32.partialorder %v986, 1.0
        %vm1003 = vcmp.ge.f32.partialorder %v987, 1.0
        %vm1004 = vcmp.ge.f32.partialorder %v988, 1.0
        %vm1005 = vcmp.ge.f32.partialorder %v989, 1.0
        %vm1006 = vcmp.ge.f32.partialorder %v990, 1.0
        %vm1007 = vcmp.ge.f32.partialorder %v991, 1.0
        %vm1008 = vcmp.ge.f32.partialorder %v992, 1.0
        %vm1009 = vcmp.ge.f32.partialorder %v993, 1.0
        %vm1010 = vcmp.ge.f32.partialorder %v994, 1.0
        %vm1011 = vcmp.ge.f32.partialorder %v995, 1.0
        %vm1012 = vcmp.ge.f32.partialorder %v996, 1.0
        %v1013 = vsel %vm997, 1, 0
        %v1014 = vsel %vm998, 1, 0
        %v1015 = vsel %vm999, 1, 0
        %v1016 = vsel %vm1000, 1, 0
        %v1017 = vsel %vm1001, 1, 0
        %v1018 = vsel %vm1002, 1, 0
        %v1019 = vsel %vm1003, 1, 0
        %v1020 = vsel %vm1004, 1, 0
        %v1021 = vsel %vm1005, 1, 0
        %v1022 = vsel %vm1006, 1, 0
        %v1023 = vsel %vm1007, 1, 0
        %v1024 = vsel %vm1008, 1, 0
        %v1025 = vsel %vm1009, 1, 0
        %v1026 = vsel %vm1010, 1, 0
        %v1027 = vsel %vm1011, 1, 0
        %v1028 = vsel %vm1012, 1, 0
        %v1029 = vcvt.s32.f32 %v1013
        %v1030 = vcvt.s32.f32 %v1014
        %v1031 = vcvt.s32.f32 %v1015
        %v1032 = vcvt.s32.f32 %v1016
        %v1033 = vcvt.s32.f32 %v1017
        %v1034 = vcvt.s32.f32 %v1018
        %v1035 = vcvt.s32.f32 %v1019
        %v1036 = vcvt.s32.f32 %v1020
        %v1037 = vcvt.s32.f32 %v1021
        %v1038 = vcvt.s32.f32 %v1022
        %v1039 = vcvt.s32.f32 %v1023
        %v1040 = vcvt.s32.f32 %v1024
        %v1041 = vcvt.s32.f32 %v1025
        %v1042 = vcvt.s32.f32 %v1026
        %v1043 = vcvt.s32.f32 %v1027
        %v1044 = vcvt.s32.f32 %v1028
        %v1045 = vrot.slane %v1029, 7
        %v1046 = vrot.slane %v1030, 7
        %v1047 = vrot.slane %v1031, 7
        %v1048 = vrot.slane %v1032, 7
        %v1049 = vrot.slane %v1033, 7
        %v1050 = vrot.slane %v1034, 7
        %v1051 = vrot.slane %v1035, 7
        %v1052 = vrot.slane %v1036, 7
        %v1053 = vrot.slane %v1037, 7
        %v1054 = vrot.slane %v1038, 7
        %v1055 = vrot.slane %v1039, 7
        %v1056 = vrot.slane %v1040, 7
        %v1057 = vrot.slane %v1041, 7
        %v1058 = vrot.slane %v1042, 7
        %v1059 = vrot.slane %v1043, 7
        %v1060 = vrot.slane %v1044, 7
        %v1061 = vsel %vm509, %v1059, %v1060
        %v1062 = vsel %vm509, %v1058, %v1059
        %v1063 = vsel %vm509, %v1057, %v1058
        %v1064 = vsel %vm509, %v1056, %v1057
        %v1065 = vsel %vm509, %v1055, %v1056
        %v1066 = vsel %vm509, %v1054, %v1055
        %v1067 = vsel %vm509, %v1053, %v1054
        %v1068 = vsel %vm509, %v1052, %v1053
        %v1069 = vsel %vm509, %v1051, %v1052
        %v1070 = vsel %vm509, %v1050, %v1051
        %v1071 = vsel %vm509, %v1049, %v1050
        %v1072 = vsel %vm509, %v1048, %v1049
        %v1073 = vsel %vm509, %v1047, %v1048
        %v1074 = vsel %vm509, %v1046, %v1047
        %v1075 = vsel %vm509, %v1045, %v1046
        %v1076 = vsel %vm509, %v1060, %v1045
        %v1077 = vsel %vm558, %v1076, 0.0
        %v1078 = vsel %vm559, %v1075, 0.0
        %v1079 = vsel %vm560, %v1074, 0.0
        %v1080 = vsel %vm561, %v1073, 0.0
        %v1081 = vsel %vm562, %v1072, 0.0
        %v1082 = vsel %vm563, %v1071, 0.0
        %v1083 = vsel %vm564, %v1070, 0.0
        %v1084 = vsel %vm565, %v1069, 0.0
        %v1085 = vsel %vm566, %v1068, 0.0
        %v1086 = vsel %vm567, %v1067, 0.0
        %v1087 = vsel %vm568, %v1066, 0.0
        %v1088 = vsel %vm569, %v1065, 0.0
        %v1089 = vsel %vm570, %v1064, 0.0
        %v1090 = vsel %vm571, %v1063, 0.0
        %v1091 = vsel %vm572, %v1062, 0.0
        %v1092 = vsel %vm573, %v1061, 0.0
        %1093 = vrot.lane.b32.xlu0 %v1029, 32
        %v1094 = vpop.permute.xlu0 %1093
        %1095 = vrot.lane.b32.xlu0 %v1030, 32
        %v1096 = vpop.permute.xlu0 %1095
        %1097 = vrot.lane.b32.xlu0 %v1031, 32
        %v1098 = vpop.permute.xlu0 %1097
        %1099 = vrot.lane.b32.xlu0 %v1032, 32
        %v1100 = vpop.permute.xlu0 %1099
        %1101 = vrot.lane.b32.xlu0 %v1033, 32
        %v1102 = vpop.permute.xlu0 %1101
        %1103 = vrot.lane.b32.xlu0 %v1034, 32
        %v1104 = vpop.permute.xlu0 %1103
        %1105 = vrot.lane.b32.xlu0 %v1035, 32
        %v1106 = vpop.permute.xlu0 %1105
        %1107 = vrot.lane.b32.xlu0 %v1036, 32
        %v1108 = vpop.permute.xlu0 %1107
        %1109 = vrot.lane.b32.xlu0 %v1037, 32
        %v1110 = vpop.permute.xlu0 %1109
        %1111 = vrot.lane.b32.xlu0 %v1038, 32
        %v1112 = vpop.permute.xlu0 %1111
        %1113 = vrot.lane.b32.xlu0 %v1039, 32
        %v1114 = vpop.permute.xlu0 %1113
        %1115 = vrot.lane.b32.xlu0 %v1040, 32
        %v1116 = vpop.permute.xlu0 %1115
        %1117 = vrot.lane.b32.xlu0 %v1041, 32
        %v1118 = vpop.permute.xlu0 %1117
        %1119 = vrot.lane.b32.xlu0 %v1042, 32
        %v1120 = vpop.permute.xlu0 %1119
        %1121 = vrot.lane.b32.xlu0 %v1043, 32
        %v1122 = vpop.permute.xlu0 %1121
        %1123 = vrot.lane.b32.xlu0 %v1044, 32
        %v1124 = vpop.permute.xlu0 %1123
        %v1125 = vadd.f32 %v1077, %v1094
        %v1126 = vadd.f32 %v1078, %v1096
        %v1127 = vadd.f32 %v1079, %v1098
        %v1128 = vadd.f32 %v1080, %v1100
        %v1129 = vadd.f32 %v1081, %v1102
        %v1130 = vadd.f32 %v1082, %v1104
        %v1131 = vadd.f32 %v1083, %v1106
        %v1132 = vadd.f32 %v1084, %v1108
        %v1133 = vadd.f32 %v1085, %v1110
        %v1134 = vadd.f32 %v1086, %v1112
        %v1135 = vadd.f32 %v1087, %v1114
        %v1136 = vadd.f32 %v1088, %v1116
        %v1137 = vadd.f32 %v1089, %v1118
        %v1138 = vadd.f32 %v1090, %v1120
        %v1139 = vadd.f32 %v1091, %v1122
        %v1140 = vadd.f32 %v1092, %v1124
        %v1141 = vrot.slane %v1029, 1
        %v1142 = vrot.slane %v1030, 1
        %v1143 = vrot.slane %v1031, 1
        %v1144 = vrot.slane %v1032, 1
        %v1145 = vrot.slane %v1033, 1
        %v1146 = vrot.slane %v1034, 1
        %v1147 = vrot.slane %v1035, 1
        %v1148 = vrot.slane %v1036, 1
        %v1149 = vrot.slane %v1037, 1
        %v1150 = vrot.slane %v1038, 1
        %v1151 = vrot.slane %v1039, 1
        %v1152 = vrot.slane %v1040, 1
        %v1153 = vrot.slane %v1041, 1
        %v1154 = vrot.slane %v1042, 1
        %v1155 = vrot.slane %v1043, 1
        %v1156 = vrot.slane %v1044, 1
        %v1157 = vsel %vm654, %v1155, %v1156
        %v1158 = vsel %vm654, %v1154, %v1155
        %v1159 = vsel %vm654, %v1153, %v1154
        %v1160 = vsel %vm654, %v1152, %v1153
        %v1161 = vsel %vm654, %v1151, %v1152
        %v1162 = vsel %vm654, %v1150, %v1151
        %v1163 = vsel %vm654, %v1149, %v1150
        %v1164 = vsel %vm654, %v1148, %v1149
        %v1165 = vsel %vm654, %v1147, %v1148
        %v1166 = vsel %vm654, %v1146, %v1147
        %v1167 = vsel %vm654, %v1145, %v1146
        %v1168 = vsel %vm654, %v1144, %v1145
        %v1169 = vsel %vm654, %v1143, %v1144
        %v1170 = vsel %vm654, %v1142, %v1143
        %v1171 = vsel %vm654, %v1141, %v1142
        %v1172 = vsel %vm654, %v1156, %v1141
        %v1173 = vsel %vm703, %v1171, 0.0
        %v1174 = vsel %vm704, %v1170, 0.0
        %v1175 = vsel %vm705, %v1169, 0.0
        %v1176 = vsel %vm706, %v1168, 0.0
        %v1177 = vsel %vm707, %v1167, 0.0
        %v1178 = vsel %vm708, %v1166, 0.0
        %v1179 = vsel %vm709, %v1165, 0.0
        %v1180 = vsel %vm710, %v1164, 0.0
        %v1181 = vsel %vm711, %v1163, 0.0
        %v1182 = vsel %vm712, %v1162, 0.0
        %v1183 = vsel %vm713, %v1161, 0.0
        %v1184 = vsel %vm714, %v1160, 0.0
        %v1185 = vsel %vm715, %v1159, 0.0
        %v1186 = vsel %vm716, %v1158, 0.0
        %v1187 = vsel %vm717, %v1157, 0.0
        %v1188 = vsel %vm718, %v1172, 0.0
        %1189 = vrot.lane.b32.xlu0 %v1173, 64
        %v1190 = vpop.permute.xlu0 %1189
        %1191 = vrot.lane.b32.xlu0 %v1174, 64
        %v1192 = vpop.permute.xlu0 %1191
        %1193 = vrot.lane.b32.xlu0 %v1175, 64
        %v1194 = vpop.permute.xlu0 %1193
        %1195 = vrot.lane.b32.xlu0 %v1176, 64
        %v1196 = vpop.permute.xlu0 %1195
        %1197 = vrot.lane.b32.xlu0 %v1177, 64
        %v1198 = vpop.permute.xlu0 %1197
        %1199 = vrot.lane.b32.xlu0 %v1178, 64
        %v1200 = vpop.permute.xlu0 %1199
        %1201 = vrot.lane.b32.xlu0 %v1179, 64
        %v1202 = vpop.permute.xlu0 %1201
        %1203 = vrot.lane.b32.xlu0 %v1180, 64
        %v1204 = vpop.permute.xlu0 %1203
        %1205 = vrot.lane.b32.xlu0 %v1181, 64
        %v1206 = vpop.permute.xlu0 %1205
        %1207 = vrot.lane.b32.xlu0 %v1182, 64
        %v1208 = vpop.permute.xlu0 %1207
        %1209 = vrot.lane.b32.xlu0 %v1183, 64
        %v1210 = vpop.permute.xlu0 %1209
        %1211 = vrot.lane.b32.xlu0 %v1184, 64
        %v1212 = vpop.permute.xlu0 %1211
        %1213 = vrot.lane.b32.xlu0 %v1185, 64
        %v1214 = vpop.permute.xlu0 %1213
        %1215 = vrot.lane.b32.xlu0 %v1186, 64
        %v1216 = vpop.permute.xlu0 %1215
        %1217 = vrot.lane.b32.xlu0 %v1187, 64
        %v1218 = vpop.permute.xlu0 %1217
        %1219 = vrot.lane.b32.xlu0 %v1188, 64
        %v1220 = vpop.permute.xlu0 %1219
        %v1221 = vadd.f32 %v1125, %v1190
        %v1222 = vadd.f32 %v1126, %v1192
        %v1223 = vadd.f32 %v1127, %v1194
        %v1224 = vadd.f32 %v1128, %v1196
        %v1225 = vadd.f32 %v1129, %v1198
        %v1226 = vadd.f32 %v1130, %v1200
        %v1227 = vadd.f32 %v1131, %v1202
        %v1228 = vadd.f32 %v1132, %v1204
        %v1229 = vadd.f32 %v1133, %v1206
        %v1230 = vadd.f32 %v1134, %v1208
        %v1231 = vadd.f32 %v1135, %v1210
        %v1232 = vadd.f32 %v1136, %v1212
        %v1233 = vadd.f32 %v1137, %v1214
        %v1234 = vadd.f32 %v1138, %v1216
        %v1235 = vadd.f32 %v1139, %v1218
        %v1236 = vadd.f32 %v1140, %v1220
        %v1237 = vld [vmem:[#allocation8] sm:$0xff]
        %v1238 = vld [vmem:[#allocation8 + $0x8] sm:$0xff]
        %v1239 = vld [vmem:[#allocation8 + $0x10] sm:$0xff]
        %v1240 = vld [vmem:[#allocation8 + $0x18] sm:$0xff]
        %v1241 = vld [vmem:[#allocation8 + $0x20] sm:$0xff]
        %v1242 = vld [vmem:[#allocation8 + $0x28] sm:$0xff]
        %v1243 = vld [vmem:[#allocation8 + $0x30] sm:$0xff]
        %v1244 = vld [vmem:[#allocation8 + $0x38] sm:$0xff]
        %v1245 = vld [vmem:[#allocation8 + $0x40] sm:$0xff]
        %v1246 = vld [vmem:[#allocation8 + $0x48] sm:$0xff]
        %v1247 = vld [vmem:[#allocation8 + $0x50] sm:$0xff]
        %v1248 = vld [vmem:[#allocation8 + $0x58] sm:$0xff]
        %v1249 = vld [vmem:[#allocation8 + $0x60] sm:$0xff]
        %v1250 = vld [vmem:[#allocation8 + $0x68] sm:$0xff]
        %v1251 = vld [vmem:[#allocation8 + $0x70] sm:$0xff]
        %v1252 = vld [vmem:[#allocation8 + $0x78] sm:$0xff]
        %v1253 = vld [vmem:[#allocation8 + $0x189] sm:$0x1]
        %v1254 = vperm.slane %v1253, 0
        %1255 = vmatpush.msra.mxu0 %v1252
        %1256 = vmatpush.msra.mxu0 %v1251
        %1257 = vmatpush.msra.mxu0 %v1250
        %1258 = vmatpush.msra.mxu0 %v1249
        %1259 = vmatpush.msra.mxu0 %v1248
        %1260 = vmatpush.msra.mxu0 %v1247
        %1261 = vmatpush.msra.mxu0 %v1246
        %1262 = vmatpush.msra.mxu0 %v1245
        %1263 = vmatpush.msra.mxu0 %v1244
        %1264 = vmatpush.msra.mxu0 %v1243
        %1265 = vmatpush.msra.mxu0 %v1242
        %1266 = vmatpush.msra.mxu0 %v1241
        %1267 = vmatpush.msra.mxu0 %v1240
        %1268 = vmatpush.msra.mxu0 %v1239
        %1269 = vmatpush.msra.mxu0 %v1238
        %1270 = vmatpush.msra.mxu0 %v1237
        %1271 = vmatmul.f32.gmra.mxu0 %v1221
        %v1272 = vpop.f32.mrf.mxu0
        %v1273 = vadd.f32 %v1254, %v1272
        %1274 = vmatmul.f32.gmra.mxu0 %v1222
        %v1275 = vpop.f32.mrf.mxu0
        %v1276 = vadd.f32 %v1254, %v1275
        %1277 = vmatmul.f32.gmra.mxu0 %v1223
        %v1278 = vpop.f32.mrf.mxu0
        %v1279 = vadd.f32 %v1254, %v1278
        %1280 = vmatmul.f32.gmra.mxu0 %v1224
        %v1281 = vpop.f32.mrf.mxu0
        %v1282 = vadd.f32 %v1254, %v1281
        %1283 = vmatmul.f32.gmra.mxu0 %v1225
        %v1284 = vpop.f32.mrf.mxu0
        %v1285 = vadd.f32 %v1254, %v1284
        %1286 = vmatmul.f32.gmra.mxu0 %v1226
        %v1287 = vpop.f32.mrf.mxu0
        %v1288 = vadd.f32 %v1254, %v1287
        %1289 = vmatmul.f32.gmra.mxu0 %v1227
        %v1290 = vpop.f32.mrf.mxu0
        %v1291 = vadd.f32 %v1254, %v1290
        %1292 = vmatmul.f32.gmra.mxu0 %v1228
        %v1293 = vpop.f32.mrf.mxu0
        %v1294 = vadd.f32 %v1254, %v1293
        %1295 = vmatmul.f32.gmra.mxu0 %v1229
        %v1296 = vpop.f32.mrf.mxu0
        %v1297 = vadd.f32 %v1254, %v1296
        %1298 = vmatmul.f32.gmra.mxu0 %v1230
        %v1299 = vpop.f32.mrf.mxu0
        %v1300 = vadd.f32 %v1254, %v1299
        %1301 = vmatmul.f32.gmra.mxu0 %v1231
        %v1302 = vpop.f32.mrf.mxu0
        %v1303 = vadd.f32 %v1254, %v1302
        %1304 = vmatmul.f32.gmra.mxu0 %v1232
        %v1305 = vpop.f32.mrf.mxu0
        %v1306 = vadd.f32 %v1254, %v1305
        %1307 = vmatmul.f32.gmra.mxu0 %v1233
        %v1308 = vpop.f32.mrf.mxu0
        %v1309 = vadd.f32 %v1254, %v1308
        %1310 = vmatmul.f32.gmra.mxu0 %v1234
        %v1311 = vpop.f32.mrf.mxu0
        %v1312 = vadd.f32 %v1254, %v1311
        %1313 = vmatmul.f32.gmra.mxu0 %v1235
        %v1314 = vpop.f32.mrf.mxu0
        %v1315 = vadd.f32 %v1254, %v1314
        %1316 = vmatmul.f32.gmra.mxu0 %v1236
        %v1317 = vpop.f32.mrf.mxu0
        %v1318 = vadd.f32 %v1254, %v1317
        %1319 = vdwg.mxu0
        %v1320 = vadd.f32 %v1273, 0.44932896
        %v1321 = vadd.f32 %v1276, 0.44932896
        %v1322 = vadd.f32 %v1279, 0.44932896
        %v1323 = vadd.f32 %v1282, 0.44932896
        %v1324 = vadd.f32 %v1285, 0.44932896
        %v1325 = vadd.f32 %v1288, 0.44932896
        %v1326 = vadd.f32 %v1291, 0.44932896
        %v1327 = vadd.f32 %v1294, 0.44932896
        %v1328 = vadd.f32 %v1297, 0.44932896
        %v1329 = vadd.f32 %v1300, 0.44932896
        %v1330 = vadd.f32 %v1303, 0.44932896
        %v1331 = vadd.f32 %v1306, 0.44932896
        %v1332 = vadd.f32 %v1309, 0.44932896
        %v1333 = vadd.f32 %v1312, 0.44932896
        %v1334 = vadd.f32 %v1315, 0.44932896
        %v1335 = vadd.f32 %v1318, 0.44932896
        %vm1336 = vcmp.ge.f32.partialorder %v1320, 1.0
        %vm1337 = vcmp.ge.f32.partialorder %v1321, 1.0
        %vm1338 = vcmp.ge.f32.partialorder %v1322, 1.0
        %vm1339 = vcmp.ge.f32.partialorder %v1323, 1.0
        %vm1340 = vcmp.ge.f32.partialorder %v1324, 1.0
        %vm1341 = vcmp.ge.f32.partialorder %v1325, 1.0
        %vm1342 = vcmp.ge.f32.partialorder %v1326, 1.0
        %vm1343 = vcmp.ge.f32.partialorder %v1327, 1.0
        %vm1344 = vcmp.ge.f32.partialorder %v1328, 1.0
        %vm1345 = vcmp.ge.f32.partialorder %v1329, 1.0
        %vm1346 = vcmp.ge.f32.partialorder %v1330, 1.0
        %vm1347 = vcmp.ge.f32.partialorder %v1331, 1.0
        %vm1348 = vcmp.ge.f32.partialorder %v1332, 1.0
        %vm1349 = vcmp.ge.f32.partialorder %v1333, 1.0
        %vm1350 = vcmp.ge.f32.partialorder %v1334, 1.0
        %vm1351 = vcmp.ge.f32.partialorder %v1335, 1.0
        %v1352 = vsel %vm1336, 1, 0
        %v1353 = vsel %vm1337, 1, 0
        %v1354 = vsel %vm1338, 1, 0
        %v1355 = vsel %vm1339, 1, 0
        %v1356 = vsel %vm1340, 1, 0
        %v1357 = vsel %vm1341, 1, 0
        %v1358 = vsel %vm1342, 1, 0
        %v1359 = vsel %vm1343, 1, 0
        %v1360 = vsel %vm1344, 1, 0
        %v1361 = vsel %vm1345, 1, 0
        %v1362 = vsel %vm1346, 1, 0
        %v1363 = vsel %vm1347, 1, 0
        %v1364 = vsel %vm1348, 1, 0
        %v1365 = vsel %vm1349, 1, 0
        %v1366 = vsel %vm1350, 1, 0
        %v1367 = vsel %vm1351, 1, 0
        %v1368 = vcvt.s32.f32 %v1352
        %v1369 = vcvt.s32.f32 %v1353
        %v1370 = vcvt.s32.f32 %v1354
        %v1371 = vcvt.s32.f32 %v1355
        %v1372 = vcvt.s32.f32 %v1356
        %v1373 = vcvt.s32.f32 %v1357
        %v1374 = vcvt.s32.f32 %v1358
        %v1375 = vcvt.s32.f32 %v1359
        %v1376 = vcvt.s32.f32 %v1360
        %v1377 = vcvt.s32.f32 %v1361
        %v1378 = vcvt.s32.f32 %v1362
        %v1379 = vcvt.s32.f32 %v1363
        %v1380 = vcvt.s32.f32 %v1364
        %v1381 = vcvt.s32.f32 %v1365
        %v1382 = vcvt.s32.f32 %v1366
        %v1383 = vcvt.s32.f32 %v1367
        %v1384 = vadd.f32 %v1368, %v1369
        %v1385 = vrot.slane %v1384, 4
        %v1386 = vadd.f32 %v1384, %v1385
        %v1387 = vrot.slane %v1386, 2
        %v1388 = vadd.f32 %v1386, %v1387
        %v1389 = vrot.slane %v1388, 1
        %v1390 = vadd.f32 %v1388, %v1389
        %v1391 = vadd.f32 %v1370, %v1371
        %v1392 = vrot.slane %v1391, 4
        %v1393 = vadd.f32 %v1391, %v1392
        %v1394 = vrot.slane %v1393, 2
        %v1395 = vadd.f32 %v1393, %v1394
        %v1396 = vrot.slane %v1395, 1
        %v1397 = vadd.f32 %v1395, %v1396
        %v1398 = vadd.f32 %v1372, %v1373
        %v1399 = vrot.slane %v1398, 4
        %v1400 = vadd.f32 %v1398, %v1399
        %v1401 = vrot.slane %v1400, 2
        %v1402 = vadd.f32 %v1400, %v1401
        %v1403 = vrot.slane %v1402, 1
        %v1404 = vadd.f32 %v1402, %v1403
        %v1405 = vadd.f32 %v1374, %v1375
        %v1406 = vrot.slane %v1405, 4
        %v1407 = vadd.f32 %v1405, %v1406
        %v1408 = vrot.slane %v1407, 2
        %v1409 = vadd.f32 %v1407, %v1408
        %v1410 = vrot.slane %v1409, 1
        %v1411 = vadd.f32 %v1409, %v1410
        %v1412 = vadd.f32 %v1376, %v1377
        %v1413 = vrot.slane %v1412, 4
        %v1414 = vadd.f32 %v1412, %v1413
        %v1415 = vrot.slane %v1414, 2
        %v1416 = vadd.f32 %v1414, %v1415
        %v1417 = vrot.slane %v1416, 1
        %v1418 = vadd.f32 %v1416, %v1417
        %v1419 = vadd.f32 %v1378, %v1379
        %v1420 = vrot.slane %v1419, 4
        %v1421 = vadd.f32 %v1419, %v1420
        %v1422 = vrot.slane %v1421, 2
        %v1423 = vadd.f32 %v1421, %v1422
        %v1424 = vrot.slane %v1423, 1
        %v1425 = vadd.f32 %v1423, %v1424
        %v1426 = vadd.f32 %v1380, %v1381
        %v1427 = vrot.slane %v1426, 4
        %v1428 = vadd.f32 %v1426, %v1427
        %v1429 = vrot.slane %v1428, 2
        %v1430 = vadd.f32 %v1428, %v1429
        %v1431 = vrot.slane %v1430, 1
        %v1432 = vadd.f32 %v1430, %v1431
        %v1433 = vadd.f32 %v1382, %v1383
        %v1434 = vrot.slane %v1433, 4
        %v1435 = vadd.f32 %v1433, %v1434
        %v1436 = vrot.slane %v1435, 2
        %v1437 = vadd.f32 %v1435, %v1436
        %v1438 = vrot.slane %v1437, 1
        %v1439 = vadd.f32 %v1437, %v1438
        %v1440 = vrcp.pop 16.0
        %v1441 = vmul.f32 16.0, %v1440
        %v1442 = vsub.f32 1.0, %v1441
        %v1443 = vmul.f32 %v1440, %v1442
        %v1444 = vadd.f32 %v1440, %v1443
        %vm1445 = vweird.f32 %v1440
        %v1446 = vsel %vm1445, %v1440, %v1444
        %v1447 = vmul.f32 %v1390, %v1446
        %v1448 = vmul.f32 %v1397, %v1446
        %v1449 = vmul.f32 %v1404, %v1446
        %v1450 = vmul.f32 %v1411, %v1446
        %v1451 = vmul.f32 %v1418, %v1446
        %v1452 = vmul.f32 %v1425, %v1446
        %v1453 = vmul.f32 %v1432, %v1446
        %v1454 = vmul.f32 %v1439, %v1446
        %v1455 = vld [vmem:[#allocation8 + $0x80] sm:$0xff]
        %v1456 = vld [vmem:[#allocation8 + $0x88] sm:$0xff]
        %v1457 = vld [vmem:[#allocation8 + $0x90] sm:$0xff]
        %v1458 = vld [vmem:[#allocation8 + $0x98] sm:$0xff]
        %v1459 = vld [vmem:[#allocation8 + $0xa0] sm:$0xff]
        %v1460 = vld [vmem:[#allocation8 + $0xa8] sm:$0xff]
        %v1461 = vld [vmem:[#allocation8 + $0xb0] sm:$0xff]
        %v1462 = vld [vmem:[#allocation8 + $0xb8] sm:$0xff]
        %v1463 = vld [vmem:[#allocation8 + $0xc0] sm:$0xff]
        %v1464 = vld [vmem:[#allocation8 + $0xc8] sm:$0xff]
        %v1465 = vld [vmem:[#allocation8 + $0xd0] sm:$0xff]
        %v1466 = vld [vmem:[#allocation8 + $0xd8] sm:$0xff]
        %v1467 = vld [vmem:[#allocation8 + $0xe0] sm:$0xff]
        %v1468 = vld [vmem:[#allocation8 + $0xe8] sm:$0xff]
        %v1469 = vld [vmem:[#allocation8 + $0xf0] sm:$0xff]
        %v1470 = vld [vmem:[#allocation8 + $0xf8] sm:$0xff]
        %v1471 = vld [vmem:[#allocation8 + $0x18b] sm:$0x1]
        %v1472 = vperm.slane %v1471, 0
        %vm1481 = vcmask 1041409
        %v1482 = vsel %vm1481, %v1448, %v1447
        %vm1483 = vcmask 1042434
        %v1484 = vsel %vm1483, %v1449, %v1482
        %vm1485 = vcmask 1043459
        %v1486 = vsel %vm1485, %v1450, %v1484
        %vm1487 = vcmask 1044484
        %v1488 = vsel %vm1487, %v1451, %v1486
        %vm1489 = vcmask 1045509
        %v1490 = vsel %vm1489, %v1452, %v1488
        %vm1491 = vcmask 1046534
        %v1492 = vsel %vm1491, %v1453, %v1490
        %vm1493 = vcmask 1047559
        %v1494 = vsel %vm1493, %v1454, %v1492
        %1496 = vmatpush.msra.mxu0 %v1470
        %1497 = vmatpush.msra.mxu0 %v1469
        %1498 = vmatpush.msra.mxu0 %v1468
        %1499 = vmatpush.msra.mxu0 %v1467
        %1500 = vmatpush.msra.mxu0 %v1466
        %1501 = vmatpush.msra.mxu0 %v1465
        %1502 = vmatpush.msra.mxu0 %v1464
        %1503 = vmatpush.msra.mxu0 %v1463
        %1504 = vmatpush.msra.mxu0 %v1462
        %1505 = vmatpush.msra.mxu0 %v1461
        %1506 = vmatpush.msra.mxu0 %v1460
        %1507 = vmatpush.msra.mxu0 %v1459
        %1508 = vmatpush.msra.mxu0 %v1458
        %1509 = vmatpush.msra.mxu0 %v1457
        %1510 = vmatpush.msra.mxu0 %v1456
        %1511 = vmatpush.msra.mxu0 %v1455
        %1512 = vmatmul.f32.gmra.mxu0 %v1494
        %v1513 = vpop.f32.mrf.mxu0
        %v1514 = vadd.f32 %v1472, %v1513
        %1515 = vdwg.mxu0
        %v1516 = vmax.f32 %v1514, 0.0
        %v1517 = vld [vmem:[#allocation8 + $0x100] sm:$0xff]
        %v1518 = vld [vmem:[#allocation8 + $0x108] sm:$0xff]
        %v1519 = vld [vmem:[#allocation8 + $0x110] sm:$0xff]
        %v1520 = vld [vmem:[#allocation8 + $0x118] sm:$0xff]
        %v1521 = vld [vmem:[#allocation8 + $0x120] sm:$0xff]
        %v1522 = vld [vmem:[#allocation8 + $0x128] sm:$0xff]
        %v1523 = vld [vmem:[#allocation8 + $0x130] sm:$0xff]
        %v1524 = vld [vmem:[#allocation8 + $0x138] sm:$0xff]
        %v1525 = vld [vmem:[#allocation8 + $0x140] sm:$0xff]
        %v1526 = vld [vmem:[#allocation8 + $0x148] sm:$0xff]
        %v1527 = vld [vmem:[#allocation8 + $0x150] sm:$0xff]
        %v1528 = vld [vmem:[#allocation8 + $0x158] sm:$0xff]
        %v1529 = vld [vmem:[#allocation8 + $0x160] sm:$0xff]
        %v1530 = vld [vmem:[#allocation8 + $0x168] sm:$0xff]
        %v1531 = vld [vmem:[#allocation8 + $0x170] sm:$0xff]
        %v1532 = vld [vmem:[#allocation8 + $0x178] sm:$0xff]
        %v1533 = vld [vmem:[#allocation8 + $0x18c] sm:$0x1]
        %v1534 = vperm.slane %v1533, 0
        %1535 = vmatpush.msra.mxu0 %v1532
        %1536 = vmatpush.msra.mxu0 %v1531
        %1537 = vmatpush.msra.mxu0 %v1530
        %1538 = vmatpush.msra.mxu0 %v1529
        %1539 = vmatpush.msra.mxu0 %v1528
        %1540 = vmatpush.msra.mxu0 %v1527
        %1541 = vmatpush.msra.mxu0 %v1526
        %1542 = vmatpush.msra.mxu0 %v1525
        %1543 = vmatpush.msra.mxu0 %v1524
        %1544 = vmatpush.msra.mxu0 %v1523
        %1545 = vmatpush.msra.mxu0 %v1522
        %1546 = vmatpush.msra.mxu0 %v1521
        %1547 = vmatpush.msra.mxu0 %v1520
        %1548 = vmatpush.msra.mxu0 %v1519
        %1549 = vmatpush.msra.mxu0 %v1518
        %1550 = vmatpush.msra.mxu0 %v1517
        %1551 = vmatmul.f32.gmra.mxu0 %v1516
        %v1552 = vpop.f32.mrf.mxu0
        %v1553 = vadd.f32 %v1534, %v1552
        %1554 = vdwg.mxu0
        %v1555 = vxor.u32 %v1553, 2147483648
        %v1556 = vmul.f32 %v1555, 1.442695
        %v1557 = vpow.pop %v1556
        %v1558 = vadd.f32 %v1557, 1.0
        %v1559 = vrcp.pop %v1558
        %v1560 = vmul.f32 %v1558, %v1559
        %v1561 = vsub.f32 1.0, %v1560
        %v1562 = vmul.f32 %v1559, %v1561
        %v1563 = vadd.f32 %v1559, %v1562
        %vm1564 = vweird.f32 %v1558
        %vm1565 = vweird.f32 %v1559
        %vm1566 = vmor %vm1564, %vm1565
        %v1567 = vsel %vm1566, %v1559, %v1563
        %v1568 = vand.u32 2147483647, %v1558
        %vm1569 = vcmp.eq.f32.partialorder %v1568, 8.507059e+37
        %v1570 = vand.u32 %v1558, 2147483648
        %v1571 = vor.u32 1.1754944e-38, %v1570
        %v1572 = vsel %vm1569, %v1571, %v1567
        %v1573 = vmul.f32 1.0, %v1572
        %v1575 = vrot.slane %v1573, 1
        %v1576 = vrot.slane %v1573, 2
        %v1577 = vrot.slane %v1573, 3
        %v1578 = vrot.slane %v1573, 4
        %v1579 = vrot.slane %v1573, 5
        %v1580 = vrot.slane %v1573, 6
        %v1581 = vrot.slane %v1573, 7
        %v1582 = vperm.slane %v1573, 0
        %v1583 = vperm.slane %v1575, 0
        %v1584 = vperm.slane %v1576, 0
        %v1585 = vperm.slane %v1577, 0
        %v1586 = vperm.slane %v1578, 0
        %v1587 = vperm.slane %v1579, 0
        %v1588 = vperm.slane %v1580, 0
        %v1589 = vperm.slane %v1581, 0
        %v1598 = vmul.f32 %v1368, %v1582
        %v1599 = vmul.f32 %v1369, %v1582
        %v1600 = vmul.f32 %v1370, %v1583
        %v1601 = vmul.f32 %v1371, %v1583
        %v1602 = vmul.f32 %v1372, %v1584
        %v1603 = vmul.f32 %v1373, %v1584
        %v1604 = vmul.f32 %v1374, %v1585
        %v1605 = vmul.f32 %v1375, %v1585
        %v1606 = vmul.f32 %v1376, %v1586
        %v1607 = vmul.f32 %v1377, %v1586
        %v1608 = vmul.f32 %v1378, %v1587
        %v1609 = vmul.f32 %v1379, %v1587
        %v1610 = vmul.f32 %v1380, %v1588
        %v1611 = vmul.f32 %v1381, %v1588
        %v1612 = vmul.f32 %v1382, %v1589
        %v1613 = vmul.f32 %v1383, %v1589
        %v1614 = vld [vmem:[#allocation8 + $0x180] sm:$0x7f]
        %v1615 = vperm.slane %v1614, 3
        %v1616 = vmul.f32 %v1368, %v1615
        %v1617 = vmul.f32 %v1369, %v1615
        %v1618 = vmul.f32 %v1370, %v1615
        %v1619 = vmul.f32 %v1371, %v1615
        %v1620 = vmul.f32 %v1372, %v1615
        %v1621 = vmul.f32 %v1373, %v1615
        %v1622 = vmul.f32 %v1374, %v1615
        %v1623 = vmul.f32 %v1375, %v1615
        %v1624 = vmul.f32 %v1376, %v1615
        %v1625 = vmul.f32 %v1377, %v1615
        %v1626 = vmul.f32 %v1378, %v1615
        %v1627 = vmul.f32 %v1379, %v1615
        %v1628 = vmul.f32 %v1380, %v1615
        %v1629 = vmul.f32 %v1381, %v1615
        %v1630 = vmul.f32 %v1382, %v1615
        %v1631 = vmul.f32 %v1383, %v1615
        %v1632 = vrot.slane %v1368, 5
        %v1633 = vrot.slane %v1369, 5
        %v1634 = vrot.slane %v1370, 5
        %v1635 = vrot.slane %v1371, 5
        %v1636 = vrot.slane %v1372, 5
        %v1637 = vrot.slane %v1373, 5
        %v1638 = vrot.slane %v1374, 5
        %v1639 = vrot.slane %v1375, 5
        %v1640 = vrot.slane %v1376, 5
        %v1641 = vrot.slane %v1377, 5
        %v1642 = vrot.slane %v1378, 5
        %v1643 = vrot.slane %v1379, 5
        %v1644 = vrot.slane %v1380, 5
        %v1645 = vrot.slane %v1381, 5
        %v1646 = vrot.slane %v1382, 5
        %v1647 = vrot.slane %v1383, 5
        %vm1648 = vcmp.lt.s32.totalorder %v285, 3
        %v1649 = vsel %vm1648, %v1646, %v1647
        %v1650 = vsel %vm1648, %v1645, %v1646
        %v1651 = vsel %vm1648, %v1644, %v1645
        %v1652 = vsel %vm1648, %v1643, %v1644
        %v1653 = vsel %vm1648, %v1642, %v1643
        %v1654 = vsel %vm1648, %v1641, %v1642
        %v1655 = vsel %vm1648, %v1640, %v1641
        %v1656 = vsel %vm1648, %v1639, %v1640
        %v1657 = vsel %vm1648, %v1638, %v1639
        %v1658 = vsel %vm1648, %v1637, %v1638
        %v1659 = vsel %vm1648, %v1636, %v1637
        %v1660 = vsel %vm1648, %v1635, %v1636
        %v1661 = vsel %vm1648, %v1634, %v1635
        %v1662 = vsel %vm1648, %v1633, %v1634
        %v1663 = vsel %vm1648, %v1632, %v1633
        %v1664 = vsel %vm1648, %v1647, %v1632
        %vm1665 = vcmp.ge.s32.totalorder %v477, 3
        %vm1666 = vcmp.ge.s32.totalorder %v478, 3
        %vm1667 = vcmp.ge.s32.totalorder %v479, 3
        %vm1668 = vcmp.ge.s32.totalorder %v480, 3
        %vm1669 = vcmp.ge.s32.totalorder %v481, 3
        %vm1670 = vcmp.ge.s32.totalorder %v482, 3
        %vm1671 = vcmp.ge.s32.totalorder %v483, 3
        %vm1672 = vcmp.ge.s32.totalorder %v484, 3
        %vm1673 = vcmp.ge.s32.totalorder %v485, 3
        %vm1674 = vcmp.ge.s32.totalorder %v486, 3
        %vm1675 = vcmp.ge.s32.totalorder %v487, 3
        %vm1676 = vcmp.ge.s32.totalorder %v488, 3
        %vm1677 = vcmp.ge.s32.totalorder %v489, 3
        %vm1678 = vcmp.ge.s32.totalorder %v490, 3
        %vm1679 = vcmp.ge.s32.totalorder %v491, 3
        %vm1680 = vcmp.ge.s32.totalorder %v492, 3
        %v1681 = vsel %vm1665, 1, 0
        %v1682 = vsel %vm1666, 1, 0
        %v1683 = vsel %vm1667, 1, 0
        %v1684 = vsel %vm1668, 1, 0
        %v1685 = vsel %vm1669, 1, 0
        %v1686 = vsel %vm1670, 1, 0
        %v1687 = vsel %vm1671, 1, 0
        %v1688 = vsel %vm1672, 1, 0
        %v1689 = vsel %vm1673, 1, 0
        %v1690 = vsel %vm1674, 1, 0
        %v1691 = vsel %vm1675, 1, 0
        %v1692 = vsel %vm1676, 1, 0
        %v1693 = vsel %vm1677, 1, 0
        %v1694 = vsel %vm1678, 1, 0
        %v1695 = vsel %vm1679, 1, 0
        %v1696 = vsel %vm1680, 1, 0
        %vm1697 = vcmp.eq.s32.totalorder %v1681, 1
        %vm1698 = vcmp.eq.s32.totalorder %v1682, 1
        %vm1699 = vcmp.eq.s32.totalorder %v1683, 1
        %vm1700 = vcmp.eq.s32.totalorder %v1684, 1
        %vm1701 = vcmp.eq.s32.totalorder %v1685, 1
        %vm1702 = vcmp.eq.s32.totalorder %v1686, 1
        %vm1703 = vcmp.eq.s32.totalorder %v1687, 1
        %vm1704 = vcmp.eq.s32.totalorder %v1688, 1
        %vm1705 = vcmp.eq.s32.totalorder %v1689, 1
        %vm1706 = vcmp.eq.s32.totalorder %v1690, 1
        %vm1707 = vcmp.eq.s32.totalorder %v1691, 1
        %vm1708 = vcmp.eq.s32.totalorder %v1692, 1
        %vm1709 = vcmp.eq.s32.totalorder %v1693, 1
        %vm1710 = vcmp.eq.s32.totalorder %v1694, 1
        %vm1711 = vcmp.eq.s32.totalorder %v1695, 1
        %vm1712 = vcmp.eq.s32.totalorder %v1696, 1
        %v1713 = vsel %vm1697, %v1664, 0.0
        %v1714 = vsel %vm1698, %v1663, 0.0
        %v1715 = vsel %vm1699, %v1662, 0.0
        %v1716 = vsel %vm1700, %v1661, 0.0
        %v1717 = vsel %vm1701, %v1660, 0.0
        %v1718 = vsel %vm1702, %v1659, 0.0
        %v1719 = vsel %vm1703, %v1658, 0.0
        %v1720 = vsel %vm1704, %v1657, 0.0
        %v1721 = vsel %vm1705, %v1656, 0.0
        %v1722 = vsel %vm1706, %v1655, 0.0
        %v1723 = vsel %vm1707, %v1654, 0.0
        %v1724 = vsel %vm1708, %v1653, 0.0
        %v1725 = vsel %vm1709, %v1652, 0.0
        %v1726 = vsel %vm1710, %v1651, 0.0
        %v1727 = vsel %vm1711, %v1650, 0.0
        %v1728 = vsel %vm1712, %v1649, 0.0
        %v1729 = vperm.slane %v1614, 0
        %v1730 = vmul.f32 %v1713, %v1729
        %v1731 = vmul.f32 %v1714, %v1729
        %v1732 = vmul.f32 %v1715, %v1729
        %v1733 = vmul.f32 %v1716, %v1729
        %v1734 = vmul.f32 %v1717, %v1729
        %v1735 = vmul.f32 %v1718, %v1729
        %v1736 = vmul.f32 %v1719, %v1729
        %v1737 = vmul.f32 %v1720, %v1729
        %v1738 = vmul.f32 %v1721, %v1729
        %v1739 = vmul.f32 %v1722, %v1729
        %v1740 = vmul.f32 %v1723, %v1729
        %v1741 = vmul.f32 %v1724, %v1729
        %v1742 = vmul.f32 %v1725, %v1729
        %v1743 = vmul.f32 %v1726, %v1729
        %v1744 = vmul.f32 %v1727, %v1729
        %v1745 = vmul.f32 %v1728, %v1729
        %v1746 = vadd.f32 %v1616, %v1730
        %v1747 = vadd.f32 %v1617, %v1731
        %v1748 = vadd.f32 %v1618, %v1732
        %v1749 = vadd.f32 %v1619, %v1733
        %v1750 = vadd.f32 %v1620, %v1734
        %v1751 = vadd.f32 %v1621, %v1735
        %v1752 = vadd.f32 %v1622, %v1736
        %v1753 = vadd.f32 %v1623, %v1737
        %v1754 = vadd.f32 %v1624, %v1738
        %v1755 = vadd.f32 %v1625, %v1739
        %v1756 = vadd.f32 %v1626, %v1740
        %v1757 = vadd.f32 %v1627, %v1741
        %v1758 = vadd.f32 %v1628, %v1742
        %v1759 = vadd.f32 %v1629, %v1743
        %v1760 = vadd.f32 %v1630, %v1744
        %v1761 = vadd.f32 %v1631, %v1745
        %v1762 = vrot.slane %v1368, 6
        %v1763 = vrot.slane %v1369, 6
        %v1764 = vrot.slane %v1370, 6
        %v1765 = vrot.slane %v1371, 6
        %v1766 = vrot.slane %v1372, 6
        %v1767 = vrot.slane %v1373, 6
        %v1768 = vrot.slane %v1374, 6
        %v1769 = vrot.slane %v1375, 6
        %v1770 = vrot.slane %v1376, 6
        %v1771 = vrot.slane %v1377, 6
        %v1772 = vrot.slane %v1378, 6
        %v1773 = vrot.slane %v1379, 6
        %v1774 = vrot.slane %v1380, 6
        %v1775 = vrot.slane %v1381, 6
        %v1776 = vrot.slane %v1382, 6
        %v1777 = vrot.slane %v1383, 6
        %vm1778 = vcmp.lt.s32.totalorder %v285, 2
        %v1779 = vsel %vm1778, %v1776, %v1777
        %v1780 = vsel %vm1778, %v1775, %v1776
        %v1781 = vsel %vm1778, %v1774, %v1775
        %v1782 = vsel %vm1778, %v1773, %v1774
        %v1783 = vsel %vm1778, %v1772, %v1773
        %v1784 = vsel %vm1778, %v1771, %v1772
        %v1785 = vsel %vm1778, %v1770, %v1771
        %v1786 = vsel %vm1778, %v1769, %v1770
        %v1787 = vsel %vm1778, %v1768, %v1769
        %v1788 = vsel %vm1778, %v1767, %v1768
        %v1789 = vsel %vm1778, %v1766, %v1767
        %v1790 = vsel %vm1778, %v1765, %v1766
        %v1791 = vsel %vm1778, %v1764, %v1765
        %v1792 = vsel %vm1778, %v1763, %v1764
        %v1793 = vsel %vm1778, %v1762, %v1763
        %v1794 = vsel %vm1778, %v1777, %v1762
        %vm1795 = vcmp.ge.s32.totalorder %v477, 2
        %vm1796 = vcmp.ge.s32.totalorder %v478, 2
        %vm1797 = vcmp.ge.s32.totalorder %v479, 2
        %vm1798 = vcmp.ge.s32.totalorder %v480, 2
        %vm1799 = vcmp.ge.s32.totalorder %v481, 2
        %vm1800 = vcmp.ge.s32.totalorder %v482, 2
        %vm1801 = vcmp.ge.s32.totalorder %v483, 2
        %vm1802 = vcmp.ge.s32.totalorder %v484, 2
        %vm1803 = vcmp.ge.s32.totalorder %v485, 2
        %vm1804 = vcmp.ge.s32.totalorder %v486, 2
        %vm1805 = vcmp.ge.s32.totalorder %v487, 2
        %vm1806 = vcmp.ge.s32.totalorder %v488, 2
        %vm1807 = vcmp.ge.s32.totalorder %v489, 2
        %vm1808 = vcmp.ge.s32.totalorder %v490, 2
        %vm1809 = vcmp.ge.s32.totalorder %v491, 2
        %vm1810 = vcmp.ge.s32.totalorder %v492, 2
        %v1811 = vsel %vm1795, 1, 0
        %v1812 = vsel %vm1796, 1, 0
        %v1813 = vsel %vm1797, 1, 0
        %v1814 = vsel %vm1798, 1, 0
        %v1815 = vsel %vm1799, 1, 0
        %v1816 = vsel %vm1800, 1, 0
        %v1817 = vsel %vm1801, 1, 0
        %v1818 = vsel %vm1802, 1, 0
        %v1819 = vsel %vm1803, 1, 0
        %v1820 = vsel %vm1804, 1, 0
        %v1821 = vsel %vm1805, 1, 0
        %v1822 = vsel %vm1806, 1, 0
        %v1823 = vsel %vm1807, 1, 0
        %v1824 = vsel %vm1808, 1, 0
        %v1825 = vsel %vm1809, 1, 0
        %v1826 = vsel %vm1810, 1, 0
        %vm1827 = vcmp.eq.s32.totalorder %v1811, 1
        %vm1828 = vcmp.eq.s32.totalorder %v1812, 1
        %vm1829 = vcmp.eq.s32.totalorder %v1813, 1
        %vm1830 = vcmp.eq.s32.totalorder %v1814, 1
        %vm1831 = vcmp.eq.s32.totalorder %v1815, 1
        %vm1832 = vcmp.eq.s32.totalorder %v1816, 1
        %vm1833 = vcmp.eq.s32.totalorder %v1817, 1
        %vm1834 = vcmp.eq.s32.totalorder %v1818, 1
        %vm1835 = vcmp.eq.s32.totalorder %v1819, 1
        %vm1836 = vcmp.eq.s32.totalorder %v1820, 1
        %vm1837 = vcmp.eq.s32.totalorder %v1821, 1
        %vm1838 = vcmp.eq.s32.totalorder %v1822, 1
        %vm1839 = vcmp.eq.s32.totalorder %v1823, 1
        %vm1840 = vcmp.eq.s32.totalorder %v1824, 1
        %vm1841 = vcmp.eq.s32.totalorder %v1825, 1
        %vm1842 = vcmp.eq.s32.totalorder %v1826, 1
        %v1843 = vsel %vm1827, %v1794, 0.0
        %v1844 = vsel %vm1828, %v1793, 0.0
        %v1845 = vsel %vm1829, %v1792, 0.0
        %v1846 = vsel %vm1830, %v1791, 0.0
        %v1847 = vsel %vm1831, %v1790, 0.0
        %v1848 = vsel %vm1832, %v1789, 0.0
        %v1849 = vsel %vm1833, %v1788, 0.0
        %v1850 = vsel %vm1834, %v1787, 0.0
        %v1851 = vsel %vm1835, %v1786, 0.0
        %v1852 = vsel %vm1836, %v1785, 0.0
        %v1853 = vsel %vm1837, %v1784, 0.0
        %v1854 = vsel %vm1838, %v1783, 0.0
        %v1855 = vsel %vm1839, %v1782, 0.0
        %v1856 = vsel %vm1840, %v1781, 0.0
        %v1857 = vsel %vm1841, %v1780, 0.0
        %v1858 = vsel %vm1842, %v1779, 0.0
        %v1859 = vperm.slane %v1614, 1
        %v1860 = vmul.f32 %v1843, %v1859
        %v1861 = vmul.f32 %v1844, %v1859
        %v1862 = vmul.f32 %v1845, %v1859
        %v1863 = vmul.f32 %v1846, %v1859
        %v1864 = vmul.f32 %v1847, %v1859
        %v1865 = vmul.f32 %v1848, %v1859
        %v1866 = vmul.f32 %v1849, %v1859
        %v1867 = vmul.f32 %v1850, %v1859
        %v1868 = vmul.f32 %v1851, %v1859
        %v1869 = vmul.f32 %v1852, %v1859
        %v1870 = vmul.f32 %v1853, %v1859
        %v1871 = vmul.f32 %v1854, %v1859
        %v1872 = vmul.f32 %v1855, %v1859
        %v1873 = vmul.f32 %v1856, %v1859
        %v1874 = vmul.f32 %v1857, %v1859
        %v1875 = vmul.f32 %v1858, %v1859
        %v1876 = vadd.f32 %v1746, %v1860
        %v1877 = vadd.f32 %v1747, %v1861
        %v1878 = vadd.f32 %v1748, %v1862
        %v1879 = vadd.f32 %v1749, %v1863
        %v1880 = vadd.f32 %v1750, %v1864
        %v1881 = vadd.f32 %v1751, %v1865
        %v1882 = vadd.f32 %v1752, %v1866
        %v1883 = vadd.f32 %v1753, %v1867
        %v1884 = vadd.f32 %v1754, %v1868
        %v1885 = vadd.f32 %v1755, %v1869
        %v1886 = vadd.f32 %v1756, %v1870
        %v1887 = vadd.f32 %v1757, %v1871
        %v1888 = vadd.f32 %v1758, %v1872
        %v1889 = vadd.f32 %v1759, %v1873
        %v1890 = vadd.f32 %v1760, %v1874
        %v1891 = vadd.f32 %v1761, %v1875
        %v1892 = vrot.slane %v1368, 7
        %v1893 = vrot.slane %v1369, 7
        %v1894 = vrot.slane %v1370, 7
        %v1895 = vrot.slane %v1371, 7
        %v1896 = vrot.slane %v1372, 7
        %v1897 = vrot.slane %v1373, 7
        %v1898 = vrot.slane %v1374, 7
        %v1899 = vrot.slane %v1375, 7
        %v1900 = vrot.slane %v1376, 7
        %v1901 = vrot.slane %v1377, 7
        %v1902 = vrot.slane %v1378, 7
        %v1903 = vrot.slane %v1379, 7
        %v1904 = vrot.slane %v1380, 7
        %v1905 = vrot.slane %v1381, 7
        %v1906 = vrot.slane %v1382, 7
        %v1907 = vrot.slane %v1383, 7
        %v1908 = vsel %vm509, %v1906, %v1907
        %v1909 = vsel %vm509, %v1905, %v1906
        %v1910 = vsel %vm509, %v1904, %v1905
        %v1911 = vsel %vm509, %v1903, %v1904
        %v1912 = vsel %vm509, %v1902, %v1903
        %v1913 = vsel %vm509, %v1901, %v1902
        %v1914 = vsel %vm509, %v1900, %v1901
        %v1915 = vsel %vm509, %v1899, %v1900
        %v1916 = vsel %vm509, %v1898, %v1899
        %v1917 = vsel %vm509, %v1897, %v1898
        %v1918 = vsel %vm509, %v1896, %v1897
        %v1919 = vsel %vm509, %v1895, %v1896
        %v1920 = vsel %vm509, %v1894, %v1895
        %v1921 = vsel %vm509, %v1893, %v1894
        %v1922 = vsel %vm509, %v1892, %v1893
        %v1923 = vsel %vm509, %v1907, %v1892
        %v1924 = vsel %vm558, %v1923, 0.0
        %v1925 = vsel %vm559, %v1922, 0.0
        %v1926 = vsel %vm560, %v1921, 0.0
        %v1927 = vsel %vm561, %v1920, 0.0
        %v1928 = vsel %vm562, %v1919, 0.0
        %v1929 = vsel %vm563, %v1918, 0.0
        %v1930 = vsel %vm564, %v1917, 0.0
        %v1931 = vsel %vm565, %v1916, 0.0
        %v1932 = vsel %vm566, %v1915, 0.0
        %v1933 = vsel %vm567, %v1914, 0.0
        %v1934 = vsel %vm568, %v1913, 0.0
        %v1935 = vsel %vm569, %v1912, 0.0
        %v1936 = vsel %vm570, %v1911, 0.0
        %v1937 = vsel %vm571, %v1910, 0.0
        %v1938 = vsel %vm572, %v1909, 0.0
        %v1939 = vsel %vm573, %v1908, 0.0
        %v1940 = vperm.slane %v1614, 2
        %v1941 = vmul.f32 %v1924, %v1940
        %v1942 = vmul.f32 %v1925, %v1940
        %v1943 = vmul.f32 %v1926, %v1940
        %v1944 = vmul.f32 %v1927, %v1940
        %v1945 = vmul.f32 %v1928, %v1940
        %v1946 = vmul.f32 %v1929, %v1940
        %v1947 = vmul.f32 %v1930, %v1940
        %v1948 = vmul.f32 %v1931, %v1940
        %v1949 = vmul.f32 %v1932, %v1940
        %v1950 = vmul.f32 %v1933, %v1940
        %v1951 = vmul.f32 %v1934, %v1940
        %v1952 = vmul.f32 %v1935, %v1940
        %v1953 = vmul.f32 %v1936, %v1940
        %v1954 = vmul.f32 %v1937, %v1940
        %v1955 = vmul.f32 %v1938, %v1940
        %v1956 = vmul.f32 %v1939, %v1940
        %v1957 = vadd.f32 %v1876, %v1941
        %v1958 = vadd.f32 %v1877, %v1942
        %v1959 = vadd.f32 %v1878, %v1943
        %v1960 = vadd.f32 %v1879, %v1944
        %v1961 = vadd.f32 %v1880, %v1945
        %v1962 = vadd.f32 %v1881, %v1946
        %v1963 = vadd.f32 %v1882, %v1947
        %v1964 = vadd.f32 %v1883, %v1948
        %v1965 = vadd.f32 %v1884, %v1949
        %v1966 = vadd.f32 %v1885, %v1950
        %v1967 = vadd.f32 %v1886, %v1951
        %v1968 = vadd.f32 %v1887, %v1952
        %v1969 = vadd.f32 %v1888, %v1953
        %v1970 = vadd.f32 %v1889, %v1954
        %v1971 = vadd.f32 %v1890, %v1955
        %v1972 = vadd.f32 %v1891, %v1956
        %v1973 = vrot.slane %v1368, 1
        %v1974 = vrot.slane %v1369, 1
        %v1975 = vrot.slane %v1370, 1
        %v1976 = vrot.slane %v1371, 1
        %v1977 = vrot.slane %v1372, 1
        %v1978 = vrot.slane %v1373, 1
        %v1979 = vrot.slane %v1374, 1
        %v1980 = vrot.slane %v1375, 1
        %v1981 = vrot.slane %v1376, 1
        %v1982 = vrot.slane %v1377, 1
        %v1983 = vrot.slane %v1378, 1
        %v1984 = vrot.slane %v1379, 1
        %v1985 = vrot.slane %v1380, 1
        %v1986 = vrot.slane %v1381, 1
        %v1987 = vrot.slane %v1382, 1
        %v1988 = vrot.slane %v1383, 1
        %v1989 = vsel %vm654, %v1987, %v1988
        %v1990 = vsel %vm654, %v1986, %v1987
        %v1991 = vsel %vm654, %v1985, %v1986
        %v1992 = vsel %vm654, %v1984, %v1985
        %v1993 = vsel %vm654, %v1983, %v1984
        %v1994 = vsel %vm654, %v1982, %v1983
        %v1995 = vsel %vm654, %v1981, %v1982
        %v1996 = vsel %vm654, %v1980, %v1981
        %v1997 = vsel %vm654, %v1979, %v1980
        %v1998 = vsel %vm654, %v1978, %v1979
        %v1999 = vsel %vm654, %v1977, %v1978
        %v2000 = vsel %vm654, %v1976, %v1977
        %v2001 = vsel %vm654, %v1975, %v1976
        %v2002 = vsel %vm654, %v1974, %v1975
        %v2003 = vsel %vm654, %v1973, %v1974
        %v2004 = vsel %vm654, %v1988, %v1973
        %v2005 = vsel %vm703, %v2003, 0.0
        %v2006 = vsel %vm704, %v2002, 0.0
        %v2007 = vsel %vm705, %v2001, 0.0
        %v2008 = vsel %vm706, %v2000, 0.0
        %v2009 = vsel %vm707, %v1999, 0.0
        %v2010 = vsel %vm708, %v1998, 0.0
        %v2011 = vsel %vm709, %v1997, 0.0
        %v2012 = vsel %vm710, %v1996, 0.0
        %v2013 = vsel %vm711, %v1995, 0.0
        %v2014 = vsel %vm712, %v1994, 0.0
        %v2015 = vsel %vm713, %v1993, 0.0
        %v2016 = vsel %vm714, %v1992, 0.0
        %v2017 = vsel %vm715, %v1991, 0.0
        %v2018 = vsel %vm716, %v1990, 0.0
        %v2019 = vsel %vm717, %v1989, 0.0
        %v2020 = vsel %vm718, %v2004, 0.0
        %v2021 = vperm.slane %v1614, 4
        %v2022 = vmul.f32 %v2005, %v2021
        %v2023 = vmul.f32 %v2006, %v2021
        %v2024 = vmul.f32 %v2007, %v2021
        %v2025 = vmul.f32 %v2008, %v2021
        %v2026 = vmul.f32 %v2009, %v2021
        %v2027 = vmul.f32 %v2010, %v2021
        %v2028 = vmul.f32 %v2011, %v2021
        %v2029 = vmul.f32 %v2012, %v2021
        %v2030 = vmul.f32 %v2013, %v2021
        %v2031 = vmul.f32 %v2014, %v2021
        %v2032 = vmul.f32 %v2015, %v2021
        %v2033 = vmul.f32 %v2016, %v2021
        %v2034 = vmul.f32 %v2017, %v2021
        %v2035 = vmul.f32 %v2018, %v2021
        %v2036 = vmul.f32 %v2019, %v2021
        %v2037 = vmul.f32 %v2020, %v2021
        %v2038 = vadd.f32 %v1957, %v2022
        %v2039 = vadd.f32 %v1958, %v2023
        %v2040 = vadd.f32 %v1959, %v2024
        %v2041 = vadd.f32 %v1960, %v2025
        %v2042 = vadd.f32 %v1961, %v2026
        %v2043 = vadd.f32 %v1962, %v2027
        %v2044 = vadd.f32 %v1963, %v2028
        %v2045 = vadd.f32 %v1964, %v2029
        %v2046 = vadd.f32 %v1965, %v2030
        %v2047 = vadd.f32 %v1966, %v2031
        %v2048 = vadd.f32 %v1967, %v2032
        %v2049 = vadd.f32 %v1968, %v2033
        %v2050 = vadd.f32 %v1969, %v2034
        %v2051 = vadd.f32 %v1970, %v2035
        %v2052 = vadd.f32 %v1971, %v2036
        %v2053 = vadd.f32 %v1972, %v2037
        %v2054 = vrot.slane %v1368, 2
        %v2055 = vrot.slane %v1369, 2
        %v2056 = vrot.slane %v1370, 2
        %v2057 = vrot.slane %v1371, 2
        %v2058 = vrot.slane %v1372, 2
        %v2059 = vrot.slane %v1373, 2
        %v2060 = vrot.slane %v1374, 2
        %v2061 = vrot.slane %v1375, 2
        %v2062 = vrot.slane %v1376, 2
        %v2063 = vrot.slane %v1377, 2
        %v2064 = vrot.slane %v1378, 2
        %v2065 = vrot.slane %v1379, 2
        %v2066 = vrot.slane %v1380, 2
        %v2067 = vrot.slane %v1381, 2
        %v2068 = vrot.slane %v1382, 2
        %v2069 = vrot.slane %v1383, 2
        %vm2070 = vcmp.lt.s32.totalorder %v285, 6
        %v2071 = vsel %vm2070, %v2068, %v2069
        %v2072 = vsel %vm2070, %v2067, %v2068
        %v2073 = vsel %vm2070, %v2066, %v2067
        %v2074 = vsel %vm2070, %v2065, %v2066
        %v2075 = vsel %vm2070, %v2064, %v2065
        %v2076 = vsel %vm2070, %v2063, %v2064
        %v2077 = vsel %vm2070, %v2062, %v2063
        %v2078 = vsel %vm2070, %v2061, %v2062
        %v2079 = vsel %vm2070, %v2060, %v2061
        %v2080 = vsel %vm2070, %v2059, %v2060
        %v2081 = vsel %vm2070, %v2058, %v2059
        %v2082 = vsel %vm2070, %v2057, %v2058
        %v2083 = vsel %vm2070, %v2056, %v2057
        %v2084 = vsel %vm2070, %v2055, %v2056
        %v2085 = vsel %vm2070, %v2054, %v2055
        %v2086 = vsel %vm2070, %v2069, %v2054
        %vm2087 = vcmp.lt.s32.totalorder %v477, 14
        %vm2088 = vcmp.lt.s32.totalorder %v478, 14
        %vm2089 = vcmp.lt.s32.totalorder %v479, 14
        %vm2090 = vcmp.lt.s32.totalorder %v480, 14
        %vm2091 = vcmp.lt.s32.totalorder %v481, 14
        %vm2092 = vcmp.lt.s32.totalorder %v482, 14
        %vm2093 = vcmp.lt.s32.totalorder %v483, 14
        %vm2094 = vcmp.lt.s32.totalorder %v484, 14
        %vm2095 = vcmp.lt.s32.totalorder %v485, 14
        %vm2096 = vcmp.lt.s32.totalorder %v486, 14
        %vm2097 = vcmp.lt.s32.totalorder %v487, 14
        %vm2098 = vcmp.lt.s32.totalorder %v488, 14
        %vm2099 = vcmp.lt.s32.totalorder %v489, 14
        %vm2100 = vcmp.lt.s32.totalorder %v490, 14
        %vm2101 = vcmp.lt.s32.totalorder %v491, 14
        %vm2102 = vcmp.lt.s32.totalorder %v492, 14
        %v2103 = vsel %vm2087, 1, 0
        %v2104 = vsel %vm2088, 1, 0
        %v2105 = vsel %vm2089, 1, 0
        %v2106 = vsel %vm2090, 1, 0
        %v2107 = vsel %vm2091, 1, 0
        %v2108 = vsel %vm2092, 1, 0
        %v2109 = vsel %vm2093, 1, 0
        %v2110 = vsel %vm2094, 1, 0
        %v2111 = vsel %vm2095, 1, 0
        %v2112 = vsel %vm2096, 1, 0
        %v2113 = vsel %vm2097, 1, 0
        %v2114 = vsel %vm2098, 1, 0
        %v2115 = vsel %vm2099, 1, 0
        %v2116 = vsel %vm2100, 1, 0
        %v2117 = vsel %vm2101, 1, 0
        %v2118 = vsel %vm2102, 1, 0
        %vm2119 = vcmp.eq.s32.totalorder %v2103, 1
        %vm2120 = vcmp.eq.s32.totalorder %v2104, 1
        %vm2121 = vcmp.eq.s32.totalorder %v2105, 1
        %vm2122 = vcmp.eq.s32.totalorder %v2106, 1
        %vm2123 = vcmp.eq.s32.totalorder %v2107, 1
        %vm2124 = vcmp.eq.s32.totalorder %v2108, 1
        %vm2125 = vcmp.eq.s32.totalorder %v2109, 1
        %vm2126 = vcmp.eq.s32.totalorder %v2110, 1
        %vm2127 = vcmp.eq.s32.totalorder %v2111, 1
        %vm2128 = vcmp.eq.s32.totalorder %v2112, 1
        %vm2129 = vcmp.eq.s32.totalorder %v2113, 1
        %vm2130 = vcmp.eq.s32.totalorder %v2114, 1
        %vm2131 = vcmp.eq.s32.totalorder %v2115, 1
        %vm2132 = vcmp.eq.s32.totalorder %v2116, 1
        %vm2133 = vcmp.eq.s32.totalorder %v2117, 1
        %vm2134 = vcmp.eq.s32.totalorder %v2118, 1
        %v2135 = vsel %vm2119, %v2085, 0.0
        %v2136 = vsel %vm2120, %v2084, 0.0
        %v2137 = vsel %vm2121, %v2083, 0.0
        %v2138 = vsel %vm2122, %v2082, 0.0
        %v2139 = vsel %vm2123, %v2081, 0.0
        %v2140 = vsel %vm2124, %v2080, 0.0
        %v2141 = vsel %vm2125, %v2079, 0.0
        %v2142 = vsel %vm2126, %v2078, 0.0
        %v2143 = vsel %vm2127, %v2077, 0.0
        %v2144 = vsel %vm2128, %v2076, 0.0
        %v2145 = vsel %vm2129, %v2075, 0.0
        %v2146 = vsel %vm2130, %v2074, 0.0
        %v2147 = vsel %vm2131, %v2073, 0.0
        %v2148 = vsel %vm2132, %v2072, 0.0
        %v2149 = vsel %vm2133, %v2071, 0.0
        %v2150 = vsel %vm2134, %v2086, 0.0
        %v2151 = vperm.slane %v1614, 5
        %v2152 = vmul.f32 %v2135, %v2151
        %v2153 = vmul.f32 %v2136, %v2151
        %v2154 = vmul.f32 %v2137, %v2151
        %v2155 = vmul.f32 %v2138, %v2151
        %v2156 = vmul.f32 %v2139, %v2151
        %v2157 = vmul.f32 %v2140, %v2151
        %v2158 = vmul.f32 %v2141, %v2151
        %v2159 = vmul.f32 %v2142, %v2151
        %v2160 = vmul.f32 %v2143, %v2151
        %v2161 = vmul.f32 %v2144, %v2151
        %v2162 = vmul.f32 %v2145, %v2151
        %v2163 = vmul.f32 %v2146, %v2151
        %v2164 = vmul.f32 %v2147, %v2151
        %v2165 = vmul.f32 %v2148, %v2151
        %v2166 = vmul.f32 %v2149, %v2151
        %v2167 = vmul.f32 %v2150, %v2151
        %v2168 = vadd.f32 %v2038, %v2152
        %v2169 = vadd.f32 %v2039, %v2153
        %v2170 = vadd.f32 %v2040, %v2154
        %v2171 = vadd.f32 %v2041, %v2155
        %v2172 = vadd.f32 %v2042, %v2156
        %v2173 = vadd.f32 %v2043, %v2157
        %v2174 = vadd.f32 %v2044, %v2158
        %v2175 = vadd.f32 %v2045, %v2159
        %v2176 = vadd.f32 %v2046, %v2160
        %v2177 = vadd.f32 %v2047, %v2161
        %v2178 = vadd.f32 %v2048, %v2162
        %v2179 = vadd.f32 %v2049, %v2163
        %v2180 = vadd.f32 %v2050, %v2164
        %v2181 = vadd.f32 %v2051, %v2165
        %v2182 = vadd.f32 %v2052, %v2166
        %v2183 = vadd.f32 %v2053, %v2167
        %v2184 = vrot.slane %v1368, 3
        %v2185 = vrot.slane %v1369, 3
        %v2186 = vrot.slane %v1370, 3
        %v2187 = vrot.slane %v1371, 3
        %v2188 = vrot.slane %v1372, 3
        %v2189 = vrot.slane %v1373, 3
        %v2190 = vrot.slane %v1374, 3
        %v2191 = vrot.slane %v1375, 3
        %v2192 = vrot.slane %v1376, 3
        %v2193 = vrot.slane %v1377, 3
        %v2194 = vrot.slane %v1378, 3
        %v2195 = vrot.slane %v1379, 3
        %v2196 = vrot.slane %v1380, 3
        %v2197 = vrot.slane %v1381, 3
        %v2198 = vrot.slane %v1382, 3
        %v2199 = vrot.slane %v1383, 3
        %vm2200 = vcmp.lt.s32.totalorder %v285, 5
        %v2201 = vsel %vm2200, %v2198, %v2199
        %v2202 = vsel %vm2200, %v2197, %v2198
        %v2203 = vsel %vm2200, %v2196, %v2197
        %v2204 = vsel %vm2200, %v2195, %v2196
        %v2205 = vsel %vm2200, %v2194, %v2195
        %v2206 = vsel %vm2200, %v2193, %v2194
        %v2207 = vsel %vm2200, %v2192, %v2193
        %v2208 = vsel %vm2200, %v2191, %v2192
        %v2209 = vsel %vm2200, %v2190, %v2191
        %v2210 = vsel %vm2200, %v2189, %v2190
        %v2211 = vsel %vm2200, %v2188, %v2189
        %v2212 = vsel %vm2200, %v2187, %v2188
        %v2213 = vsel %vm2200, %v2186, %v2187
        %v2214 = vsel %vm2200, %v2185, %v2186
        %v2215 = vsel %vm2200, %v2184, %v2185
        %v2216 = vsel %vm2200, %v2199, %v2184
        %vm2217 = vcmp.lt.s32.totalorder %v477, 13
        %vm2218 = vcmp.lt.s32.totalorder %v478, 13
        %vm2219 = vcmp.lt.s32.totalorder %v479, 13
        %vm2220 = vcmp.lt.s32.totalorder %v480, 13
        %vm2221 = vcmp.lt.s32.totalorder %v481, 13
        %vm2222 = vcmp.lt.s32.totalorder %v482, 13
        %vm2223 = vcmp.lt.s32.totalorder %v483, 13
        %vm2224 = vcmp.lt.s32.totalorder %v484, 13
        %vm2225 = vcmp.lt.s32.totalorder %v485, 13
        %vm2226 = vcmp.lt.s32.totalorder %v486, 13
        %vm2227 = vcmp.lt.s32.totalorder %v487, 13
        %vm2228 = vcmp.lt.s32.totalorder %v488, 13
        %vm2229 = vcmp.lt.s32.totalorder %v489, 13
        %vm2230 = vcmp.lt.s32.totalorder %v490, 13
        %vm2231 = vcmp.lt.s32.totalorder %v491, 13
        %vm2232 = vcmp.lt.s32.totalorder %v492, 13
        %v2233 = vsel %vm2217, 1, 0
        %v2234 = vsel %vm2218, 1, 0
        %v2235 = vsel %vm2219, 1, 0
        %v2236 = vsel %vm2220, 1, 0
        %v2237 = vsel %vm2221, 1, 0
        %v2238 = vsel %vm2222, 1, 0
        %v2239 = vsel %vm2223, 1, 0
        %v2240 = vsel %vm2224, 1, 0
        %v2241 = vsel %vm2225, 1, 0
        %v2242 = vsel %vm2226, 1, 0
        %v2243 = vsel %vm2227, 1, 0
        %v2244 = vsel %vm2228, 1, 0
        %v2245 = vsel %vm2229, 1, 0
        %v2246 = vsel %vm2230, 1, 0
        %v2247 = vsel %vm2231, 1, 0
        %v2248 = vsel %vm2232, 1, 0
        %vm2249 = vcmp.eq.s32.totalorder %v2233, 1
        %vm2250 = vcmp.eq.s32.totalorder %v2234, 1
        %vm2251 = vcmp.eq.s32.totalorder %v2235, 1
        %vm2252 = vcmp.eq.s32.totalorder %v2236, 1
        %vm2253 = vcmp.eq.s32.totalorder %v2237, 1
        %vm2254 = vcmp.eq.s32.totalorder %v2238, 1
        %vm2255 = vcmp.eq.s32.totalorder %v2239, 1
        %vm2256 = vcmp.eq.s32.totalorder %v2240, 1
        %vm2257 = vcmp.eq.s32.totalorder %v2241, 1
        %vm2258 = vcmp.eq.s32.totalorder %v2242, 1
        %vm2259 = vcmp.eq.s32.totalorder %v2243, 1
        %vm2260 = vcmp.eq.s32.totalorder %v2244, 1
        %vm2261 = vcmp.eq.s32.totalorder %v2245, 1
        %vm2262 = vcmp.eq.s32.totalorder %v2246, 1
        %vm2263 = vcmp.eq.s32.totalorder %v2247, 1
        %vm2264 = vcmp.eq.s32.totalorder %v2248, 1
        %v2265 = vsel %vm2249, %v2215, 0.0
        %v2266 = vsel %vm2250, %v2214, 0.0
        %v2267 = vsel %vm2251, %v2213, 0.0
        %v2268 = vsel %vm2252, %v2212, 0.0
        %v2269 = vsel %vm2253, %v2211, 0.0
        %v2270 = vsel %vm2254, %v2210, 0.0
        %v2271 = vsel %vm2255, %v2209, 0.0
        %v2272 = vsel %vm2256, %v2208, 0.0
        %v2273 = vsel %vm2257, %v2207, 0.0
        %v2274 = vsel %vm2258, %v2206, 0.0
        %v2275 = vsel %vm2259, %v2205, 0.0
        %v2276 = vsel %vm2260, %v2204, 0.0
        %v2277 = vsel %vm2261, %v2203, 0.0
        %v2278 = vsel %vm2262, %v2202, 0.0
        %v2279 = vsel %vm2263, %v2201, 0.0
        %v2280 = vsel %vm2264, %v2216, 0.0
        %v2281 = vperm.slane %v1614, 6
        %v2282 = vmul.f32 %v2265, %v2281
        %v2283 = vmul.f32 %v2266, %v2281
        %v2284 = vmul.f32 %v2267, %v2281
        %v2285 = vmul.f32 %v2268, %v2281
        %v2286 = vmul.f32 %v2269, %v2281
        %v2287 = vmul.f32 %v2270, %v2281
        %v2288 = vmul.f32 %v2271, %v2281
        %v2289 = vmul.f32 %v2272, %v2281
        %v2290 = vmul.f32 %v2273, %v2281
        %v2291 = vmul.f32 %v2274, %v2281
        %v2292 = vmul.f32 %v2275, %v2281
        %v2293 = vmul.f32 %v2276, %v2281
        %v2294 = vmul.f32 %v2277, %v2281
        %v2295 = vmul.f32 %v2278, %v2281
        %v2296 = vmul.f32 %v2279, %v2281
        %v2297 = vmul.f32 %v2280, %v2281
        %v2298 = vadd.f32 %v2168, %v2282
        %v2299 = vadd.f32 %v2169, %v2283
        %v2300 = vadd.f32 %v2170, %v2284
        %v2301 = vadd.f32 %v2171, %v2285
        %v2302 = vadd.f32 %v2172, %v2286
        %v2303 = vadd.f32 %v2173, %v2287
        %v2304 = vadd.f32 %v2174, %v2288
        %v2305 = vadd.f32 %v2175, %v2289
        %v2306 = vadd.f32 %v2176, %v2290
        %v2307 = vadd.f32 %v2177, %v2291
        %v2308 = vadd.f32 %v2178, %v2292
        %v2309 = vadd.f32 %v2179, %v2293
        %v2310 = vadd.f32 %v2180, %v2294
        %v2311 = vadd.f32 %v2181, %v2295
        %v2312 = vadd.f32 %v2182, %v2296
        %v2313 = vadd.f32 %v2183, %v2297
        %2314 = vadd.xlane.f32.xlu0 %v2298
        %v2315 = vpop.xlane.xlu0 %2314
        %2316 = vadd.xlane.f32.xlu0 %v2299
        %v2317 = vpop.xlane.xlu0 %2316
        %2318 = vadd.xlane.f32.xlu0 %v2300
        %v2319 = vpop.xlane.xlu0 %2318
        %2320 = vadd.xlane.f32.xlu0 %v2301
        %v2321 = vpop.xlane.xlu0 %2320
        %2322 = vadd.xlane.f32.xlu0 %v2302
        %v2323 = vpop.xlane.xlu0 %2322
        %2324 = vadd.xlane.f32.xlu0 %v2303
        %v2325 = vpop.xlane.xlu0 %2324
        %2326 = vadd.xlane.f32.xlu0 %v2304
        %v2327 = vpop.xlane.xlu0 %2326
        %2328 = vadd.xlane.f32.xlu0 %v2305
        %v2329 = vpop.xlane.xlu0 %2328
        %2330 = vadd.xlane.f32.xlu0 %v2306
        %v2331 = vpop.xlane.xlu0 %2330
        %2332 = vadd.xlane.f32.xlu0 %v2307
        %v2333 = vpop.xlane.xlu0 %2332
        %2334 = vadd.xlane.f32.xlu0 %v2308
        %v2335 = vpop.xlane.xlu0 %2334
        %2336 = vadd.xlane.f32.xlu0 %v2309
        %v2337 = vpop.xlane.xlu0 %2336
        %2338 = vadd.xlane.f32.xlu0 %v2310
        %v2339 = vpop.xlane.xlu0 %2338
        %2340 = vadd.xlane.f32.xlu0 %v2311
        %v2341 = vpop.xlane.xlu0 %2340
        %2342 = vadd.xlane.f32.xlu0 %v2312
        %v2343 = vpop.xlane.xlu0 %2342
        %2344 = vadd.xlane.f32.xlu0 %v2313
        %v2345 = vpop.xlane.xlu0 %2344
        %s2346 = sld [smem:[#allocation9]]
        %v2347 = vstv %s2346
        %v2348 = vadd.f32 %v2315, %v2347
        %v2349 = vadd.f32 %v2317, %v2347
        %v2350 = vadd.f32 %v2319, %v2347
        %v2351 = vadd.f32 %v2321, %v2347
        %v2352 = vadd.f32 %v2323, %v2347
        %v2353 = vadd.f32 %v2325, %v2347
        %v2354 = vadd.f32 %v2327, %v2347
        %v2355 = vadd.f32 %v2329, %v2347
        %v2356 = vadd.f32 %v2331, %v2347
        %v2357 = vadd.f32 %v2333, %v2347
        %v2358 = vadd.f32 %v2335, %v2347
        %v2359 = vadd.f32 %v2337, %v2347
        %v2360 = vadd.f32 %v2339, %v2347
        %v2361 = vadd.f32 %v2341, %v2347
        %v2362 = vadd.f32 %v2343, %v2347
        %v2363 = vadd.f32 %v2345, %v2347
        %v2364 = vxor.u32 %v2348, 2147483648
        %v2365 = vxor.u32 %v2349, 2147483648
        %v2366 = vxor.u32 %v2350, 2147483648
        %v2367 = vxor.u32 %v2351, 2147483648
        %v2368 = vxor.u32 %v2352, 2147483648
        %v2369 = vxor.u32 %v2353, 2147483648
        %v2370 = vxor.u32 %v2354, 2147483648
        %v2371 = vxor.u32 %v2355, 2147483648
        %v2372 = vxor.u32 %v2356, 2147483648
        %v2373 = vxor.u32 %v2357, 2147483648
        %v2374 = vxor.u32 %v2358, 2147483648
        %v2375 = vxor.u32 %v2359, 2147483648
        %v2376 = vxor.u32 %v2360, 2147483648
        %v2377 = vxor.u32 %v2361, 2147483648
        %v2378 = vxor.u32 %v2362, 2147483648
        %v2379 = vxor.u32 %v2363, 2147483648
        %v2380 = vmul.f32 %v2364, 1.442695
        %v2381 = vpow.pop %v2380
        %v2382 = vmul.f32 %v2365, 1.442695
        %v2383 = vpow.pop %v2382
        %v2384 = vmul.f32 %v2366, 1.442695
        %v2385 = vpow.pop %v2384
        %v2386 = vmul.f32 %v2367, 1.442695
        %v2387 = vpow.pop %v2386
        %v2388 = vmul.f32 %v2368, 1.442695
        %v2389 = vpow.pop %v2388
        %v2390 = vmul.f32 %v2369, 1.442695
        %v2391 = vpow.pop %v2390
        %v2392 = vmul.f32 %v2370, 1.442695
        %v2393 = vpow.pop %v2392
        %v2394 = vmul.f32 %v2371, 1.442695
        %v2395 = vpow.pop %v2394
        %v2396 = vmul.f32 %v2372, 1.442695
        %v2397 = vpow.pop %v2396
        %v2398 = vmul.f32 %v2373, 1.442695
        %v2399 = vpow.pop %v2398
        %v2400 = vmul.f32 %v2374, 1.442695
        %v2401 = vpow.pop %v2400
        %v2402 = vmul.f32 %v2375, 1.442695
        %v2403 = vpow.pop %v2402
        %v2404 = vmul.f32 %v2376, 1.442695
        %v2405 = vpow.pop %v2404
        %v2406 = vmul.f32 %v2377, 1.442695
        %v2407 = vpow.pop %v2406
        %v2408 = vmul.f32 %v2378, 1.442695
        %v2409 = vpow.pop %v2408
        %v2410 = vmul.f32 %v2379, 1.442695
        %v2411 = vpow.pop %v2410
        %v2412 = vadd.f32 %v2381, 1.0
        %v2413 = vadd.f32 %v2383, 1.0
        %v2414 = vadd.f32 %v2385, 1.0
        %v2415 = vadd.f32 %v2387, 1.0
        %v2416 = vadd.f32 %v2389, 1.0
        %v2417 = vadd.f32 %v2391, 1.0
        %v2418 = vadd.f32 %v2393, 1.0
        %v2419 = vadd.f32 %v2395, 1.0
        %v2420 = vadd.f32 %v2397, 1.0
        %v2421 = vadd.f32 %v2399, 1.0
        %v2422 = vadd.f32 %v2401, 1.0
        %v2423 = vadd.f32 %v2403, 1.0
        %v2424 = vadd.f32 %v2405, 1.0
        %v2425 = vadd.f32 %v2407, 1.0
        %v2426 = vadd.f32 %v2409, 1.0
        %v2427 = vadd.f32 %v2411, 1.0
        %v2428 = vrcp.pop %v2412
        %v2429 = vmul.f32 %v2412, %v2428
        %v2430 = vsub.f32 1.0, %v2429
        %v2431 = vmul.f32 %v2428, %v2430
        %v2432 = vadd.f32 %v2428, %v2431
        %vm2433 = vweird.f32 %v2412
        %vm2434 = vweird.f32 %v2428
        %vm2435 = vmor %vm2433, %vm2434
        %v2436 = vsel %vm2435, %v2428, %v2432
        %v2437 = vand.u32 2147483647, %v2412
        %vm2438 = vcmp.eq.f32.partialorder %v2437, 8.507059e+37
        %v2439 = vand.u32 %v2412, 2147483648
        %v2440 = vor.u32 1.1754944e-38, %v2439
        %v2441 = vsel %vm2438, %v2440, %v2436
        %v2442 = vmul.f32 1.0, %v2441
        %v2443 = vrcp.pop %v2413
        %v2444 = vmul.f32 %v2413, %v2443
        %v2445 = vsub.f32 1.0, %v2444
        %v2446 = vmul.f32 %v2443, %v2445
        %v2447 = vadd.f32 %v2443, %v2446
        %vm2448 = vweird.f32 %v2413
        %vm2449 = vweird.f32 %v2443
        %vm2450 = vmor %vm2448, %vm2449
        %v2451 = vsel %vm2450, %v2443, %v2447
        %v2452 = vand.u32 2147483647, %v2413
        %vm2453 = vcmp.eq.f32.partialorder %v2452, 8.507059e+37
        %v2454 = vand.u32 %v2413, 2147483648
        %v2455 = vor.u32 1.1754944e-38, %v2454
        %v2456 = vsel %vm2453, %v2455, %v2451
        %v2457 = vmul.f32 1.0, %v2456
        %v2458 = vrcp.pop %v2414
        %v2459 = vmul.f32 %v2414, %v2458
        %v2460 = vsub.f32 1.0, %v2459
        %v2461 = vmul.f32 %v2458, %v2460
        %v2462 = vadd.f32 %v2458, %v2461
        %vm2463 = vweird.f32 %v2414
        %vm2464 = vweird.f32 %v2458
        %vm2465 = vmor %vm2463, %vm2464
        %v2466 = vsel %vm2465, %v2458, %v2462
        %v2467 = vand.u32 2147483647, %v2414
        %vm2468 = vcmp.eq.f32.partialorder %v2467, 8.507059e+37
        %v2469 = vand.u32 %v2414, 2147483648
        %v2470 = vor.u32 1.1754944e-38, %v2469
        %v2471 = vsel %vm2468, %v2470, %v2466
        %v2472 = vmul.f32 1.0, %v2471
        %v2473 = vrcp.pop %v2415
        %v2474 = vmul.f32 %v2415, %v2473
        %v2475 = vsub.f32 1.0, %v2474
        %v2476 = vmul.f32 %v2473, %v2475
        %v2477 = vadd.f32 %v2473, %v2476
        %vm2478 = vweird.f32 %v2415
        %vm2479 = vweird.f32 %v2473
        %vm2480 = vmor %vm2478, %vm2479
        %v2481 = vsel %vm2480, %v2473, %v2477
        %v2482 = vand.u32 2147483647, %v2415
        %vm2483 = vcmp.eq.f32.partialorder %v2482, 8.507059e+37
        %v2484 = vand.u32 %v2415, 2147483648
        %v2485 = vor.u32 1.1754944e-38, %v2484
        %v2486 = vsel %vm2483, %v2485, %v2481
        %v2487 = vmul.f32 1.0, %v2486
        %v2488 = vrcp.pop %v2416
        %v2489 = vmul.f32 %v2416, %v2488
        %v2490 = vsub.f32 1.0, %v2489
        %v2491 = vmul.f32 %v2488, %v2490
        %v2492 = vadd.f32 %v2488, %v2491
        %vm2493 = vweird.f32 %v2416
        %vm2494 = vweird.f32 %v2488
        %vm2495 = vmor %vm2493, %vm2494
        %v2496 = vsel %vm2495, %v2488, %v2492
        %v2497 = vand.u32 2147483647, %v2416
        %vm2498 = vcmp.eq.f32.partialorder %v2497, 8.507059e+37
        %v2499 = vand.u32 %v2416, 2147483648
        %v2500 = vor.u32 1.1754944e-38, %v2499
        %v2501 = vsel %vm2498, %v2500, %v2496
        %v2502 = vmul.f32 1.0, %v2501
        %v2503 = vrcp.pop %v2417
        %v2504 = vmul.f32 %v2417, %v2503
        %v2505 = vsub.f32 1.0, %v2504
        %v2506 = vmul.f32 %v2503, %v2505
        %v2507 = vadd.f32 %v2503, %v2506
        %vm2508 = vweird.f32 %v2417
        %vm2509 = vweird.f32 %v2503
        %vm2510 = vmor %vm2508, %vm2509
        %v2511 = vsel %vm2510, %v2503, %v2507
        %v2512 = vand.u32 2147483647, %v2417
        %vm2513 = vcmp.eq.f32.partialorder %v2512, 8.507059e+37
        %v2514 = vand.u32 %v2417, 2147483648
        %v2515 = vor.u32 1.1754944e-38, %v2514
        %v2516 = vsel %vm2513, %v2515, %v2511
        %v2517 = vmul.f32 1.0, %v2516
        %v2518 = vrcp.pop %v2418
        %v2519 = vmul.f32 %v2418, %v2518
        %v2520 = vsub.f32 1.0, %v2519
        %v2521 = vmul.f32 %v2518, %v2520
        %v2522 = vadd.f32 %v2518, %v2521
        %vm2523 = vweird.f32 %v2418
        %vm2524 = vweird.f32 %v2518
        %vm2525 = vmor %vm2523, %vm2524
        %v2526 = vsel %vm2525, %v2518, %v2522
        %v2527 = vand.u32 2147483647, %v2418
        %vm2528 = vcmp.eq.f32.partialorder %v2527, 8.507059e+37
        %v2529 = vand.u32 %v2418, 2147483648
        %v2530 = vor.u32 1.1754944e-38, %v2529
        %v2531 = vsel %vm2528, %v2530, %v2526
        %v2532 = vmul.f32 1.0, %v2531
        %v2533 = vrcp.pop %v2419
        %v2534 = vmul.f32 %v2419, %v2533
        %v2535 = vsub.f32 1.0, %v2534
        %v2536 = vmul.f32 %v2533, %v2535
        %v2537 = vadd.f32 %v2533, %v2536
        %vm2538 = vweird.f32 %v2419
        %vm2539 = vweird.f32 %v2533
        %vm2540 = vmor %vm2538, %vm2539
        %v2541 = vsel %vm2540, %v2533, %v2537
        %v2542 = vand.u32 2147483647, %v2419
        %vm2543 = vcmp.eq.f32.partialorder %v2542, 8.507059e+37
        %v2544 = vand.u32 %v2419, 2147483648
        %v2545 = vor.u32 1.1754944e-38, %v2544
        %v2546 = vsel %vm2543, %v2545, %v2541
        %v2547 = vmul.f32 1.0, %v2546
        %v2548 = vrcp.pop %v2420
        %v2549 = vmul.f32 %v2420, %v2548
        %v2550 = vsub.f32 1.0, %v2549
        %v2551 = vmul.f32 %v2548, %v2550
        %v2552 = vadd.f32 %v2548, %v2551
        %vm2553 = vweird.f32 %v2420
        %vm2554 = vweird.f32 %v2548
        %vm2555 = vmor %vm2553, %vm2554
        %v2556 = vsel %vm2555, %v2548, %v2552
        %v2557 = vand.u32 2147483647, %v2420
        %vm2558 = vcmp.eq.f32.partialorder %v2557, 8.507059e+37
        %v2559 = vand.u32 %v2420, 2147483648
        %v2560 = vor.u32 1.1754944e-38, %v2559
        %v2561 = vsel %vm2558, %v2560, %v2556
        %v2562 = vmul.f32 1.0, %v2561
        %v2563 = vrcp.pop %v2421
        %v2564 = vmul.f32 %v2421, %v2563
        %v2565 = vsub.f32 1.0, %v2564
        %v2566 = vmul.f32 %v2563, %v2565
        %v2567 = vadd.f32 %v2563, %v2566
        %vm2568 = vweird.f32 %v2421
        %vm2569 = vweird.f32 %v2563
        %vm2570 = vmor %vm2568, %vm2569
        %v2571 = vsel %vm2570, %v2563, %v2567
        %v2572 = vand.u32 2147483647, %v2421
        %vm2573 = vcmp.eq.f32.partialorder %v2572, 8.507059e+37
        %v2574 = vand.u32 %v2421, 2147483648
        %v2575 = vor.u32 1.1754944e-38, %v2574
        %v2576 = vsel %vm2573, %v2575, %v2571
        %v2577 = vmul.f32 1.0, %v2576
        %v2578 = vrcp.pop %v2422
        %v2579 = vmul.f32 %v2422, %v2578
        %v2580 = vsub.f32 1.0, %v2579
        %v2581 = vmul.f32 %v2578, %v2580
        %v2582 = vadd.f32 %v2578, %v2581
        %vm2583 = vweird.f32 %v2422
        %vm2584 = vweird.f32 %v2578
        %vm2585 = vmor %vm2583, %vm2584
        %v2586 = vsel %vm2585, %v2578, %v2582
        %v2587 = vand.u32 2147483647, %v2422
        %vm2588 = vcmp.eq.f32.partialorder %v2587, 8.507059e+37
        %v2589 = vand.u32 %v2422, 2147483648
        %v2590 = vor.u32 1.1754944e-38, %v2589
        %v2591 = vsel %vm2588, %v2590, %v2586
        %v2592 = vmul.f32 1.0, %v2591
        %v2593 = vrcp.pop %v2423
        %v2594 = vmul.f32 %v2423, %v2593
        %v2595 = vsub.f32 1.0, %v2594
        %v2596 = vmul.f32 %v2593, %v2595
        %v2597 = vadd.f32 %v2593, %v2596
        %vm2598 = vweird.f32 %v2423
        %vm2599 = vweird.f32 %v2593
        %vm2600 = vmor %vm2598, %vm2599
        %v2601 = vsel %vm2600, %v2593, %v2597
        %v2602 = vand.u32 2147483647, %v2423
        %vm2603 = vcmp.eq.f32.partialorder %v2602, 8.507059e+37
        %v2604 = vand.u32 %v2423, 2147483648
        %v2605 = vor.u32 1.1754944e-38, %v2604
        %v2606 = vsel %vm2603, %v2605, %v2601
        %v2607 = vmul.f32 1.0, %v2606
        %v2608 = vrcp.pop %v2424
        %v2609 = vmul.f32 %v2424, %v2608
        %v2610 = vsub.f32 1.0, %v2609
        %v2611 = vmul.f32 %v2608, %v2610
        %v2612 = vadd.f32 %v2608, %v2611
        %vm2613 = vweird.f32 %v2424
        %vm2614 = vweird.f32 %v2608
        %vm2615 = vmor %vm2613, %vm2614
        %v2616 = vsel %vm2615, %v2608, %v2612
        %v2617 = vand.u32 2147483647, %v2424
        %vm2618 = vcmp.eq.f32.partialorder %v2617, 8.507059e+37
        %v2619 = vand.u32 %v2424, 2147483648
        %v2620 = vor.u32 1.1754944e-38, %v2619
        %v2621 = vsel %vm2618, %v2620, %v2616
        %v2622 = vmul.f32 1.0, %v2621
        %v2623 = vrcp.pop %v2425
        %v2624 = vmul.f32 %v2425, %v2623
        %v2625 = vsub.f32 1.0, %v2624
        %v2626 = vmul.f32 %v2623, %v2625
        %v2627 = vadd.f32 %v2623, %v2626
        %vm2628 = vweird.f32 %v2425
        %vm2629 = vweird.f32 %v2623
        %vm2630 = vmor %vm2628, %vm2629
        %v2631 = vsel %vm2630, %v2623, %v2627
        %v2632 = vand.u32 2147483647, %v2425
        %vm2633 = vcmp.eq.f32.partialorder %v2632, 8.507059e+37
        %v2634 = vand.u32 %v2425, 2147483648
        %v2635 = vor.u32 1.1754944e-38, %v2634
        %v2636 = vsel %vm2633, %v2635, %v2631
        %v2637 = vmul.f32 1.0, %v2636
        %v2638 = vrcp.pop %v2426
        %v2639 = vmul.f32 %v2426, %v2638
        %v2640 = vsub.f32 1.0, %v2639
        %v2641 = vmul.f32 %v2638, %v2640
        %v2642 = vadd.f32 %v2638, %v2641
        %vm2643 = vweird.f32 %v2426
        %vm2644 = vweird.f32 %v2638
        %vm2645 = vmor %vm2643, %vm2644
        %v2646 = vsel %vm2645, %v2638, %v2642
        %v2647 = vand.u32 2147483647, %v2426
        %vm2648 = vcmp.eq.f32.partialorder %v2647, 8.507059e+37
        %v2649 = vand.u32 %v2426, 2147483648
        %v2650 = vor.u32 1.1754944e-38, %v2649
        %v2651 = vsel %vm2648, %v2650, %v2646
        %v2652 = vmul.f32 1.0, %v2651
        %v2653 = vrcp.pop %v2427
        %v2654 = vmul.f32 %v2427, %v2653
        %v2655 = vsub.f32 1.0, %v2654
        %v2656 = vmul.f32 %v2653, %v2655
        %v2657 = vadd.f32 %v2653, %v2656
        %vm2658 = vweird.f32 %v2427
        %vm2659 = vweird.f32 %v2653
        %vm2660 = vmor %vm2658, %vm2659
        %v2661 = vsel %vm2660, %v2653, %v2657
        %v2662 = vand.u32 2147483647, %v2427
        %vm2663 = vcmp.eq.f32.partialorder %v2662, 8.507059e+37
        %v2664 = vand.u32 %v2427, 2147483648
        %v2665 = vor.u32 1.1754944e-38, %v2664
        %v2666 = vsel %vm2663, %v2665, %v2661
        %v2667 = vmul.f32 1.0, %v2666
        %s2668 = sld [smem:[#allocation9 + $0x1]]
        %v2669 = vstv %s2668
        %v2670 = vmul.f32 %v2669, %v1598
        %v2671 = vmul.f32 %v2669, %v1599
        %v2672 = vmul.f32 %v2669, %v1600
        %v2673 = vmul.f32 %v2669, %v1601
        %v2674 = vmul.f32 %v2669, %v1602
        %v2675 = vmul.f32 %v2669, %v1603
        %v2676 = vmul.f32 %v2669, %v1604
        %v2677 = vmul.f32 %v2669, %v1605
        %v2678 = vmul.f32 %v2669, %v1606
        %v2679 = vmul.f32 %v2669, %v1607
        %v2680 = vmul.f32 %v2669, %v1608
        %v2681 = vmul.f32 %v2669, %v1609
        %v2682 = vmul.f32 %v2669, %v1610
        %v2683 = vmul.f32 %v2669, %v1611
        %v2684 = vmul.f32 %v2669, %v1612
        %v2685 = vmul.f32 %v2669, %v1613
        %s2686 = sld [smem:[#allocation9 + $0x2]]
        %v2687 = vmul.f32 %v1368, %v2442
        %v2688 = vmul.f32 %v1369, %v2457
        %v2689 = vmul.f32 %v1370, %v2472
        %v2690 = vmul.f32 %v1371, %v2487
        %v2691 = vmul.f32 %v1372, %v2502
        %v2692 = vmul.f32 %v1373, %v2517
        %v2693 = vmul.f32 %v1374, %v2532
        %v2694 = vmul.f32 %v1375, %v2547
        %v2695 = vmul.f32 %v1376, %v2562
        %v2696 = vmul.f32 %v1377, %v2577
        %v2697 = vmul.f32 %v1378, %v2592
        %v2698 = vmul.f32 %v1379, %v2607
        %v2699 = vmul.f32 %v1380, %v2622
        %v2700 = vmul.f32 %v1381, %v2637
        %v2701 = vmul.f32 %v1382, %v2652
        %v2702 = vmul.f32 %v1383, %v2667
        %v2703 = vstv %s2686
        %v2704 = vmul.f32 %v2703, %v2687
        %v2705 = vmul.f32 %v2703, %v2688
        %v2706 = vmul.f32 %v2703, %v2689
        %v2707 = vmul.f32 %v2703, %v2690
        %v2708 = vmul.f32 %v2703, %v2691
        %v2709 = vmul.f32 %v2703, %v2692
        %v2710 = vmul.f32 %v2703, %v2693
        %v2711 = vmul.f32 %v2703, %v2694
        %v2712 = vmul.f32 %v2703, %v2695
        %v2713 = vmul.f32 %v2703, %v2696
        %v2714 = vmul.f32 %v2703, %v2697
        %v2715 = vmul.f32 %v2703, %v2698
        %v2716 = vmul.f32 %v2703, %v2699
        %v2717 = vmul.f32 %v2703, %v2700
        %v2718 = vmul.f32 %v2703, %v2701
        %v2719 = vmul.f32 %v2703, %v2702
        %v2720 = vadd.f32 %v2670, %v2704
        %v2721 = vadd.f32 %v2671, %v2705
        %v2722 = vadd.f32 %v2672, %v2706
        %v2723 = vadd.f32 %v2673, %v2707
        %v2724 = vadd.f32 %v2674, %v2708
        %v2725 = vadd.f32 %v2675, %v2709
        %v2726 = vadd.f32 %v2676, %v2710
        %v2727 = vadd.f32 %v2677, %v2711
        %v2728 = vadd.f32 %v2678, %v2712
        %v2729 = vadd.f32 %v2679, %v2713
        %v2730 = vadd.f32 %v2680, %v2714
        %v2731 = vadd.f32 %v2681, %v2715
        %v2732 = vadd.f32 %v2682, %v2716
        %v2733 = vadd.f32 %v2683, %v2717
        %v2734 = vadd.f32 %v2684, %v2718
        %v2735 = vadd.f32 %v2685, %v2719
        %v2736 = vadd.f32 %v2720, %v947
        %v2737 = vadd.f32 %v2721, %v948
        %v2738 = vadd.f32 %v2722, %v949
        %v2739 = vadd.f32 %v2723, %v950
        %v2740 = vadd.f32 %v2724, %v951
        %v2741 = vadd.f32 %v2725, %v952
        %v2742 = vadd.f32 %v2726, %v953
        %v2743 = vadd.f32 %v2727, %v954
        %v2744 = vadd.f32 %v2728, %v955
        %v2745 = vadd.f32 %v2729, %v956
        %v2746 = vadd.f32 %v2730, %v957
        %v2747 = vadd.f32 %v2731, %v958
        %v2748 = vadd.f32 %v2732, %v959
        %v2749 = vadd.f32 %v2733, %v960
        %v2750 = vadd.f32 %v2734, %v961
        %v2751 = vadd.f32 %v2735, %v962
        %2752 = vst [vmem:[%s265] sm:$0xff] %v2736
        %2753 = vst [vmem:[%s265 + $0x8] sm:$0xff] %v2737
        %2754 = vst [vmem:[%s265 + $0x10] sm:$0xff] %v2738
        %2755 = vst [vmem:[%s265 + $0x18] sm:$0xff] %v2739
        %2756 = vst [vmem:[%s265 + $0x20] sm:$0xff] %v2740
        %2757 = vst [vmem:[%s265 + $0x28] sm:$0xff] %v2741
        %2758 = vst [vmem:[%s265 + $0x30] sm:$0xff] %v2742
        %2759 = vst [vmem:[%s265 + $0x38] sm:$0xff] %v2743
        %2760 = vst [vmem:[%s265 + $0x40] sm:$0xff] %v2744
        %2761 = vst [vmem:[%s265 + $0x48] sm:$0xff] %v2745
        %2762 = vst [vmem:[%s265 + $0x50] sm:$0xff] %v2746
        %2763 = vst [vmem:[%s265 + $0x58] sm:$0xff] %v2747
        %2764 = vst [vmem:[%s265 + $0x60] sm:$0xff] %v2748
        %2765 = vst [vmem:[%s265 + $0x68] sm:$0xff] %v2749
        %2766 = vst [vmem:[%s265 + $0x70] sm:$0xff] %v2750
        %2767 = vst [vmem:[%s265 + $0x78] sm:$0xff] %v2751
        %s2768 = sand.u32 %s120, 1
        %s2769 = scalar_lea.sflag [#allocation4], %s2768
        %s2770 = sand.u32 %s120, 1
        %s2771 = smul.addr %s2770, 128
        %s2772 = scalar_lea.vmem [#allocation10], %s2771
        // Predicated region
        $region53: #{tpu_custom_call.1} parent=35 // pred_check
          %p2773 = pneg %p130
        $region54: #{tpu_custom_call.1} parent=35 // pred_check_branch
          %2775 = sbr.rel (%p2773) target = $region56
        $region55: #{tpu_custom_call.1} parent=35 // pred_region
          %s2776 = smul.u32 8, %s23
          %2778 = vsyncadd %s2769, 0
          %s2779 = smul.addr %s2776, 2
          %s2780 = smul.addr %s2779, 8
          %s2781 = scalar_lea.hbm %s4, %s2780
          %s2782 = sshll.u32 %s2772, 4
          %s2783 = int_to_ptr.vmem [resolvable:$true] %s2782
          %s2784 = sshll.u32 %s2781, 4
          %s2785 = int_to_ptr.hbm [resolvable:$true] %s2784
          %2790 = dma.vmem_to_hbm [thread:$0]  %s2783, 2048, %s2785, %s2769, 128, 128, 8
        $region56: #{tpu_custom_call.1} parent=35 // pred_fallthru
          _
      $region36: #{tpu_custom_call.1} parent=5 // pred_fallthru
        _
      %p2791 = scmp.le.s32.totalorder 2, %s18
      // Predicated region
      $region57: #{tpu_custom_call.1} parent=5 // pred_check
        %p2792 = pneg %p2791
      $region58: #{tpu_custom_call.1} parent=5 // pred_check_branch
        %2794 = sbr.rel (%p2792) target = $region60
      $region59: #{tpu_custom_call.1} parent=5 // pred_region
        %s2795 = ssub.s32 %s18, 2
        // Predicated region
        $region61: #{tpu_custom_call.1} parent=59 // pred_check
          %p2796 = pneg %p136
        $region62: #{tpu_custom_call.1} parent=59 // pred_check_branch
          %2798 = sbr.rel (%p2796) target = $region64
        $region63: #{tpu_custom_call.1} parent=59 // pred_region
          %s2799 = sand.u32 %s121, 1
          %s2800 = scalar_lea.sflag [#allocation4], %s2799
          %s2801 = sand.u32 %s121, 1
          %s2802 = smul.addr %s2801, 128
          %s2803 = scalar_lea.vmem [#allocation10], %s2802
          %2805 = dma.done %s2800, 2048
        $region64: #{tpu_custom_call.1} parent=59 // pred_fallthru
          _
      $region60: #{tpu_custom_call.1} parent=5 // pred_fallthru
        _
    $region6: #{tpu_custom_call.1} parent=1 // loop_footer
      %s22 = sadd.s32 1, %s18
    $region7: #{tpu_custom_call.1} parent=1 // loop_footer_branch
      %17 = sbr.rel target = $region3
    $region8: #{tpu_custom_call.1} parent=1 // loop_exit
      _
    %2806 = vsyncpa [#allocation3], 1
    %s2807 = scalar_lea.sflag [#allocation3], 1
    %2808 = vsyncpa %s2807, 1
    %2809 = vsyncpa [#allocation7], 1
    %2810 = vsyncpa [#allocation4], 1
    %s2811 = scalar_lea.sflag [#allocation4], 1
    %2812 = vsyncpa %s2811, 1
    %2813 = vsyncpa [#allocation5], 1
    %s2814 = scalar_lea.sflag [#allocation5], 1
    %2815 = vsyncpa %s2814, 1

</llo_original>
